<compile_context>
chip_gen: v7x
topology: tpu7x:2x2x1
jax: 0.10.0
libtpu: 0.0.40
codegen_flags: <defaults>
</compile_context>

<pallas_src>
import jax
import jax.numpy as jnp
import numpy as np
from jax.experimental import pallas as pl
from jax.experimental.pallas import tpu as pltpu


# ----------------------------- Pallas kernel ------------------------------- #

def _make_resblock_kernel(s, Ho, Wo, Cin, Cout, has_proj):
    """Fused resblock kernel for one batch element per grid step."""
    taps = [(dh, dw) for dh in range(3) for dw in range(3)]
    M = Ho * Wo

    def kernel(*refs):
        if has_proj:
            (xq_ref, w1_ref, b1_ref, w2_ref, b2_ref, wsc_ref,
             out_ref, y1p_ref) = refs
        else:
            (xq_ref, w1_ref, b1_ref, w2_ref, b2_ref,
             out_ref, y1p_ref) = refs

        # ---- conv1: implicit GEMM — 9 shifted slices x bf16 dots, f32 acc ----
        acc1 = jnp.zeros((M, Cout), jnp.float32)
        for t, (dh, dw) in enumerate(taps):
            ph = (dh % s) * s + (dw % s)              # polyphase plane
            oh, ow = dh // s, dw // s                 # offset inside the plane
            patch = xq_ref[0, ph, oh:oh + Ho, ow:ow + Wo, :]
            acc1 = acc1 + jnp.dot(patch.reshape(M, Cin), w1_ref[t],
                                  preferred_element_type=jnp.float32)

        # ---- BN1 shift (scale folded into w1) + ReLU; keep y1 in VMEM with a
        #      1-px zero halo so conv2 (pad=1) is again 9 plain slices ----
        y1 = jnp.maximum(acc1 + b1_ref[...], 0.0)
        y1p_ref[...] = jnp.zeros_like(y1p_ref)
        y1p_ref[1:Ho + 1, 1:Wo + 1, :] = (
            y1.reshape(Ho, Wo, Cout).astype(y1p_ref.dtype))

        # ---- conv2: implicit GEMM on the resident haloed y1 ----
        acc2 = jnp.zeros((M, Cout), jnp.float32)
        for t, (dh, dw) in enumerate(taps):
            patch = y1p_ref[dh:dh + Ho, dw:dw + Wo, :]
            acc2 = acc2 + jnp.dot(patch.reshape(M, Cout), w2_ref[t],
                                  preferred_element_type=jnp.float32)
        acc2 = acc2 + b2_ref[...]                     # BN2 shift (+ BNsc shift)

        # ---- shortcut: x at the strided output positions is exactly the
        #      center-tap (dh=dw=1) slice of conv1's input — already in VMEM ----
        ph = (1 % s) * s + (1 % s)
        oc = 1 // s
        xs = xq_ref[0, ph, oc:oc + Ho, oc:oc + Wo, :].reshape(M, Cin)
        if has_proj:
            # 1x1 conv + BN projection fused as a third dot (no concat).
            acc2 = acc2 + jnp.dot(xs, wsc_ref[...],
                                  preferred_element_type=jnp.float32)
        else:
            acc2 = acc2 + xs.astype(jnp.float32)      # identity: Cin == Cout

        out_ref[...] = jnp.maximum(acc2, 0.0).reshape(
            1, Ho, Wo, Cout).astype(out_ref.dtype)

    return kernel


def _resblock_pallas(xq, w1, b1, w2, b2, wsc, s, Ho, Wo):
    N, P, Hq, Wq, Cin = xq.shape
    Cout = w1.shape[-1]
    has_proj = wsc is not None
    kernel = _make_resblock_kernel(s, Ho, Wo, Cin, Cout, has_proj)

    in_specs = [
        # Input (polyphase, 1-px padded, bf16): one image per grid step.
        pl.BlockSpec((1, P, Hq, Wq, Cin), lambda n: (n, 0, 0, 0, 0)),
        # Weights / BN shifts: constant index maps -> fetched once, resident.
        # (On v7x these could additionally use pipeline_mode=pl.Buffered(1) to
        #  skip the double buffer; VMEM use is tiny here so default is kept.)
        pl.BlockSpec((9, Cin, Cout), lambda n: (0, 0, 0)),
        pl.BlockSpec((1, Cout), lambda n: (0, 0)),
        pl.BlockSpec((9, Cout, Cout), lambda n: (0, 0, 0)),
        pl.BlockSpec((1, Cout), lambda n: (0, 0)),
    ]
    args = [xq, w1, b1, w2, b2]
    if has_proj:
        in_specs.append(pl.BlockSpec((Cin, Cout), lambda n: (0, 0)))
        args.append(wsc)

    return pl.pallas_call(
        kernel,
        out_shape=jax.ShapeDtypeStruct((N, Ho, Wo, Cout), jnp.float32),
        grid_spec=pltpu.PrefetchScalarGridSpec(
            num_scalar_prefetch=0,
            grid=(N,),
            in_specs=in_specs,
            out_specs=pl.BlockSpec((1, Ho, Wo, Cout), lambda n: (n, 0, 0, 0)),
            scratch_shapes=[pltpu.VMEM((Ho + 2, Wo + 2, Cout), jnp.bfloat16)],
        ),
        compiler_params=pltpu.CompilerParams(
            dimension_semantics=("parallel",),        # 2-TC sharding on v7x
        ),
    )(*args)


# ------------------------------- JAX glue ---------------------------------- #

def _fold_bn(bn, eps=1e-5):
    scale = bn["gamma"] * jax.lax.rsqrt(bn["var"] + eps)
    shift = bn["beta"] - bn["mean"] * scale
    return scale, shift


def _prep_w3x3(w_oihw, scale):
    """(Cout, Cin, 3, 3) -> (9, Cin, Cout) bf16 with BN scale folded in."""
    co, ci, kh, kw = w_oihw.shape
    w = jnp.transpose(w_oihw, (2, 3, 1, 0)).reshape(kh * kw, ci, co)
    return (w * scale[None, None, :]).astype(jnp.bfloat16)


def _polyphase(xp_nhwc, s):
    """xq[n, a*s+b, i, j, c] = xp[n, s*i+a, s*j+b, c] (zero padded to mult of s)."""
    N, Hp, Wp, C = xp_nhwc.shape
    Hq = -(-Hp // s)
    Wq = -(-Wp // s)
    xp_nhwc = jnp.pad(xp_nhwc, ((0, 0), (0, Hq * s - Hp), (0, Wq * s - Wp), (0, 0)))
    xq = xp_nhwc.reshape(N, Hq, s, Wq, s, C)
    xq = jnp.transpose(xq, (0, 2, 4, 1, 3, 5)).reshape(N, s * s, Hq, Wq, C)
    return xq


def init_resblock_params(key, channel_in, channel_out, stride):
    ks = jax.random.split(key, 8)

    def bn_params(k, c):
        k1, k2, k3, k4 = jax.random.split(k, 4)
        return {
            "gamma": 1.0 + 0.1 * jax.random.normal(k1, (c,), jnp.float32),
            "beta":  0.1 * jax.random.normal(k2, (c,), jnp.float32),
            "mean":  0.1 * jax.random.normal(k3, (c,), jnp.float32),
            "var":   0.5 + jax.random.uniform(k4, (c,), jnp.float32),
        }

    params = {
        "w1": 0.1 * jax.random.normal(ks[0], (channel_out, channel_in, 3, 3), jnp.float32),
        "bn1": bn_params(ks[1], channel_out),
        "w2": 0.1 * jax.random.normal(ks[2], (channel_out, channel_out, 3, 3), jnp.float32),
        "bn2": bn_params(ks[3], channel_out),
    }
    if stride != 1 or channel_in != channel_out:
        params["wsc"] = 0.1 * jax.random.normal(
            ks[4], (channel_out, channel_in, 1, 1), jnp.float32)
        params["bnsc"] = bn_params(ks[5], channel_out)
    return params


def resblock_forward(params, x_nchw, stride):
    s = int(stride)
    x = jnp.transpose(x_nchw, (0, 2, 3, 1)).astype(jnp.float32)   # NHWC
    N, H, W, Cin = x.shape
    Cout = params["w1"].shape[0]
    Ho = (H + 2 - 3) // s + 1
    Wo = (W + 2 - 3) // s + 1
    has_proj = "wsc" in params

    # 1-px zero pad (conv pad=1) + polyphase split for the stride, in bf16.
    # This is the only XLA-side data movement (one cheap pass over x).
    xp = jnp.pad(x, ((0, 0), (1, 1), (1, 1), (0, 0))).astype(jnp.bfloat16)
    xq = _polyphase(xp, s)                              # (N, s*s, Hq, Wq, Cin)

    s1, sh1 = _fold_bn(params["bn1"])
    s2, sh2 = _fold_bn(params["bn2"])
    w1 = _prep_w3x3(params["w1"], s1)                   # (9, Cin, Cout)  bf16
    w2 = _prep_w3x3(params["w2"], s2)                   # (9, Cout, Cout) bf16
    b1 = sh1.reshape(1, Cout).astype(jnp.float32)

    if has_proj:
        ssc, shsc = _fold_bn(params["bnsc"])
        wsc = (jnp.transpose(params["wsc"][:, :, 0, 0], (1, 0))
               * ssc[None, :]).astype(jnp.bfloat16)     # (Cin, Cout)
        b2 = (sh2 + shsc).reshape(1, Cout).astype(jnp.float32)
    else:
        wsc = None
        b2 = sh2.reshape(1, Cout).astype(jnp.float32)

    out = _resblock_pallas(xq, w1, b1, w2, b2, wsc, s, Ho, Wo)   # (N,Ho,Wo,Cout)
    return jnp.transpose(out, (0, 3, 1, 2))                      # back to NCHW


resblock_forward_jit = jax.jit(resblock_forward, static_argnames="stride")


# --------------------------- pure-JAX reference ----------------------------- #

def _ref_forward(params, x_nchw, stride):
    dn = ("NCHW", "OIHW", "NCHW")

    def conv(x, w, s, pad):
        return jax.lax.conv_general_dilated(x, w, (s, s), pad, dimension_numbers=dn)

    def bn(x, p, eps=1e-5):
        sc = (p["gamma"] * jax.lax.rsqrt(p["var"] + eps)).reshape(1, -1, 1, 1)
        sh = (p["beta"] - p["mean"] * p["gamma"] * jax.lax.rsqrt(p["var"] + eps)).reshape(1, -1, 1, 1)
        return x * sc + sh

    x1 = conv(x_nchw, params["w1"], stride, ((1, 1), (1, 1)))
    x3 = jnp.maximum(bn(x1, params["bn1"]), 0.0)
    x5 = bn(conv(x3, params["w2"], 1, ((1, 1), (1, 1))), params["bn2"])
    if "wsc" in params:
        x6 = bn(conv(x_nchw, params["wsc"], stride, ((0, 0), (0, 0))), params["bnsc"])
    else:
        x6 = x_nchw
    return jnp.maximum(x5 + x6, 0.0)


# ----------------------------------- main ----------------------------------- #

if __name__ == "__main__":
    root = jax.random.PRNGKey(0)
    kx, kp1, kp2 = jax.random.split(root, 3)

    x = jax.random.normal(kx, (2, 4, 16, 16), jnp.float32)   # NCHW, like PyTorch

    # Tolerance is loose because MXU operands are bf16 (f32 accumulation).
    RTOL = ATOL = 5e-2

    # Case 1: projection shortcut (channel change + stride 2)
    params_proj = init_resblock_params(kp1, 4, 8, stride=2)
    out_proj = jax.block_until_ready(resblock_forward_jit(params_proj, x, stride=2))
    ref_proj = _ref_forward(params_proj, x, stride=2)
    assert out_proj.shape == (2, 8, 8, 8)
    np.testing.assert_allclose(np.asarray(out_proj), np.asarray(ref_proj),
                               rtol=RTOL, atol=ATOL)

    # Case 2: identity shortcut (same channels, stride 1)
    params_id = init_resblock_params(kp2, 4, 4, stride=1)
    out_id = jax.block_until_ready(resblock_forward_jit(params_id, x, stride=1))
    ref_id = _ref_forward(params_id, x, stride=1)
    assert out_id.shape == (2, 4, 16, 16)
    np.testing.assert_allclose(np.asarray(out_id), np.asarray(ref_id),
                               rtol=RTOL, atol=ATOL)

    print("KERNEL_OK")
</pallas_src>

<mosaic_0001>
module attributes {stable_mosaic.version = 11 : i64} {
  func.func @kernel(%arg0: i32, %arg1: memref<1x4x9x9x4xbf16, #tpu.memory_space<vmem>>, %arg2: memref<9x4x8xbf16, #tpu.memory_space<vmem>>, %arg3: memref<1x8xf32, #tpu.memory_space<vmem>>, %arg4: memref<9x8x8xbf16, #tpu.memory_space<vmem>>, %arg5: memref<1x8xf32, #tpu.memory_space<vmem>>, %arg6: memref<4x8xbf16, #tpu.memory_space<vmem>>, %arg7: memref<1x8x8x8xf32, #tpu.memory_space<vmem>>, %arg8: memref<10x10x8xbf16, #tpu.memory_space<vmem>>) attributes {dimension_semantics = [#tpu.dimension_semantics<parallel>], iteration_bounds = array<i64: 2>, scalar_prefetch = 0 : i64, scratch_operands = 1 : i64, tpu.core_type = #tpu.core_type<tc>, window_params = [{transform_indices = @transform_0, window_bounds = array<i64: 1, 4, 9, 9, 4>}, {pipeline_mode = #tpu.pipeline_mode<synchronous>, transform_indices = @transform_1, window_bounds = array<i64: 9, 4, 8>}, {pipeline_mode = #tpu.pipeline_mode<synchronous>, transform_indices = @transform_2, window_bounds = array<i64: 1, 8>}, {pipeline_mode = #tpu.pipeline_mode<synchronous>, transform_indices = @transform_3, window_bounds = array<i64: 9, 8, 8>}, {pipeline_mode = #tpu.pipeline_mode<synchronous>, transform_indices = @transform_4, window_bounds = array<i64: 1, 8>}, {pipeline_mode = #tpu.pipeline_mode<synchronous>, transform_indices = @transform_5, window_bounds = array<i64: 4, 8>}, {transform_indices = @transform_6, window_bounds = array<i64: 1, 8, 8, 8>}]} {
    %cst = arith.constant 0.000000e+00 : f32
    %0 = vector.broadcast %cst : f32 to vector<64x8xf32>
    %c0 = arith.constant 0 : index
    %c0_0 = arith.constant 0 : index
    %c0_1 = arith.constant 0 : index
    %c0_2 = arith.constant 0 : index
    %c0_3 = arith.constant 0 : index
    %1 = vector.load %arg1[%c0, %c0_0, %c0_1, %c0_2, %c0_3] : memref<1x4x9x9x4xbf16, #tpu.memory_space<vmem>>, vector<1x1x8x8x4xbf16>
    %2 = vector.shape_cast %1 : vector<1x1x8x8x4xbf16> to vector<8x8x4xbf16>
    %3 = vector.shape_cast %2 : vector<8x8x4xbf16> to vector<64x4xbf16>
    %c0_4 = arith.constant 0 : index
    %c0_5 = arith.constant 0 : index
    %c0_6 = arith.constant 0 : index
    %4 = vector.load %arg2[%c0_4, %c0_5, %c0_6] : memref<9x4x8xbf16, #tpu.memory_space<vmem>>, vector<1x4x8xbf16>
    %5 = vector.shape_cast %4 : vector<1x4x8xbf16> to vector<4x8xbf16>
    %cst_7 = arith.constant dense<0.000000e+00> : vector<64x8xf32>
    %6 = tpu.matmul %3, %5, %cst_7 {dimension_numbers = #tpu.dot_dimension_numbers<[1], [0], [0], [1], [0, 0, 1, 1], [], []>} : vector<64x4xbf16>, vector<4x8xbf16>, vector<64x8xf32> -> vector<64x8xf32>
    %7 = arith.addf %0, %6 : vector<64x8xf32>
    %c0_8 = arith.constant 0 : index
    %c1 = arith.constant 1 : index
    %c0_9 = arith.constant 0 : index
    %c0_10 = arith.constant 0 : index
    %c0_11 = arith.constant 0 : index
    %8 = vector.load %arg1[%c0_8, %c1, %c0_9, %c0_10, %c0_11] : memref<1x4x9x9x4xbf16, #tpu.memory_space<vmem>>, vector<1x1x8x8x4xbf16>
    %9 = vector.shape_cast %8 : vector<1x1x8x8x4xbf16> to vector<8x8x4xbf16>
    %10 = vector.shape_cast %9 : vector<8x8x4xbf16> to vector<64x4xbf16>
    %c1_12 = arith.constant 1 : index
    %c0_13 = arith.constant 0 : index
    %c0_14 = arith.constant 0 : index
    %11 = vector.load %arg2[%c1_12, %c0_13, %c0_14] : memref<9x4x8xbf16, #tpu.memory_space<vmem>>, vector<1x4x8xbf16>
    %12 = vector.shape_cast %11 : vector<1x4x8xbf16> to vector<4x8xbf16>
    %cst_15 = arith.constant dense<0.000000e+00> : vector<64x8xf32>
    %13 = tpu.matmul %10, %12, %cst_15 {dimension_numbers = #tpu.dot_dimension_numbers<[1], [0], [0], [1], [0, 0, 1, 1], [], []>} : vector<64x4xbf16>, vector<4x8xbf16>, vector<64x8xf32> -> vector<64x8xf32>
    %14 = arith.addf %7, %13 : vector<64x8xf32>
    %c0_16 = arith.constant 0 : index
    %c0_17 = arith.constant 0 : index
    %c0_18 = arith.constant 0 : index
    %c1_19 = arith.constant 1 : index
    %c0_20 = arith.constant 0 : index
    %15 = vector.load %arg1[%c0_16, %c0_17, %c0_18, %c1_19, %c0_20] : memref<1x4x9x9x4xbf16, #tpu.memory_space<vmem>>, vector<1x1x8x8x4xbf16>
    %16 = vector.shape_cast %15 : vector<1x1x8x8x4xbf16> to vector<8x8x4xbf16>
    %17 = vector.shape_cast %16 : vector<8x8x4xbf16> to vector<64x4xbf16>
    %c2 = arith.constant 2 : index
    %c0_21 = arith.constant 0 : index
    %c0_22 = arith.constant 0 : index
    %18 = vector.load %arg2[%c2, %c0_21, %c0_22] : memref<9x4x8xbf16, #tpu.memory_space<vmem>>, vector<1x4x8xbf16>
    %19 = vector.shape_cast %18 : vector<1x4x8xbf16> to vector<4x8xbf16>
    %cst_23 = arith.constant dense<0.000000e+00> : vector<64x8xf32>
    %20 = tpu.matmul %17, %19, %cst_23 {dimension_numbers = #tpu.dot_dimension_numbers<[1], [0], [0], [1], [0, 0, 1, 1], [], []>} : vector<64x4xbf16>, vector<4x8xbf16>, vector<64x8xf32> -> vector<64x8xf32>
    %21 = arith.addf %14, %20 : vector<64x8xf32>
    %c0_24 = arith.constant 0 : index
    %c2_25 = arith.constant 2 : index
    %c0_26 = arith.constant 0 : index
    %c0_27 = arith.constant 0 : index
    %c0_28 = arith.constant 0 : index
    %22 = vector.load %arg1[%c0_24, %c2_25, %c0_26, %c0_27, %c0_28] : memref<1x4x9x9x4xbf16, #tpu.memory_space<vmem>>, vector<1x1x8x8x4xbf16>
    %23 = vector.shape_cast %22 : vector<1x1x8x8x4xbf16> to vector<8x8x4xbf16>
    %24 = vector.shape_cast %23 : vector<8x8x4xbf16> to vector<64x4xbf16>
    %c3 = arith.constant 3 : index
    %c0_29 = arith.constant 0 : index
    %c0_30 = arith.constant 0 : index
    %25 = vector.load %arg2[%c3, %c0_29, %c0_30] : memref<9x4x8xbf16, #tpu.memory_space<vmem>>, vector<1x4x8xbf16>
    %26 = vector.shape_cast %25 : vector<1x4x8xbf16> to vector<4x8xbf16>
    %cst_31 = arith.constant dense<0.000000e+00> : vector<64x8xf32>
    %27 = tpu.matmul %24, %26, %cst_31 {dimension_numbers = #tpu.dot_dimension_numbers<[1], [0], [0], [1], [0, 0, 1, 1], [], []>} : vector<64x4xbf16>, vector<4x8xbf16>, vector<64x8xf32> -> vector<64x8xf32>
    %28 = arith.addf %21, %27 : vector<64x8xf32>
    %c0_32 = arith.constant 0 : index
    %c3_33 = arith.constant 3 : index
    %c0_34 = arith.constant 0 : index
    %c0_35 = arith.constant 0 : index
    %c0_36 = arith.constant 0 : index
    %29 = vector.load %arg1[%c0_32, %c3_33, %c0_34, %c0_35, %c0_36] : memref<1x4x9x9x4xbf16, #tpu.memory_space<vmem>>, vector<1x1x8x8x4xbf16>
    %30 = vector.shape_cast %29 : vector<1x1x8x8x4xbf16> to vector<8x8x4xbf16>
    %31 = vector.shape_cast %30 : vector<8x8x4xbf16> to vector<64x4xbf16>
    %c4 = arith.constant 4 : index
    %c0_37 = arith.constant 0 : index
    %c0_38 = arith.constant 0 : index
    %32 = vector.load %arg2[%c4, %c0_37, %c0_38] : memref<9x4x8xbf16, #tpu.memory_space<vmem>>, vector<1x4x8xbf16>
    %33 = vector.shape_cast %32 : vector<1x4x8xbf16> to vector<4x8xbf16>
    %cst_39 = arith.constant dense<0.000000e+00> : vector<64x8xf32>
    %34 = tpu.matmul %31, %33, %cst_39 {dimension_numbers = #tpu.dot_dimension_numbers<[1], [0], [0], [1], [0, 0, 1, 1], [], []>} : vector<64x4xbf16>, vector<4x8xbf16>, vector<64x8xf32> -> vector<64x8xf32>
    %35 = arith.addf %28, %34 : vector<64x8xf32>
    %c0_40 = arith.constant 0 : index
    %c2_41 = arith.constant 2 : index
    %c0_42 = arith.constant 0 : index
    %c1_43 = arith.constant 1 : index
    %c0_44 = arith.constant 0 : index
    %36 = vector.load %arg1[%c0_40, %c2_41, %c0_42, %c1_43, %c0_44] : memref<1x4x9x9x4xbf16, #tpu.memory_space<vmem>>, vector<1x1x8x8x4xbf16>
    %37 = vector.shape_cast %36 : vector<1x1x8x8x4xbf16> to vector<8x8x4xbf16>
    %38 = vector.shape_cast %37 : vector<8x8x4xbf16> to vector<64x4xbf16>
    %c5 = arith.constant 5 : index
    %c0_45 = arith.constant 0 : index
    %c0_46 = arith.constant 0 : index
    %39 = vector.load %arg2[%c5, %c0_45, %c0_46] : memref<9x4x8xbf16, #tpu.memory_space<vmem>>, vector<1x4x8xbf16>
    %40 = vector.shape_cast %39 : vector<1x4x8xbf16> to vector<4x8xbf16>
    %cst_47 = arith.constant dense<0.000000e+00> : vector<64x8xf32>
    %41 = tpu.matmul %38, %40, %cst_47 {dimension_numbers = #tpu.dot_dimension_numbers<[1], [0], [0], [1], [0, 0, 1, 1], [], []>} : vector<64x4xbf16>, vector<4x8xbf16>, vector<64x8xf32> -> vector<64x8xf32>
    %42 = arith.addf %35, %41 : vector<64x8xf32>
    %c0_48 = arith.constant 0 : index
    %c0_49 = arith.constant 0 : index
    %c1_50 = arith.constant 1 : index
    %c0_51 = arith.constant 0 : index
    %c0_52 = arith.constant 0 : index
    %43 = vector.load %arg1[%c0_48, %c0_49, %c1_50, %c0_51, %c0_52] : memref<1x4x9x9x4xbf16, #tpu.memory_space<vmem>>, vector<1x1x8x8x4xbf16>
    %44 = vector.shape_cast %43 : vector<1x1x8x8x4xbf16> to vector<8x8x4xbf16>
    %45 = vector.shape_cast %44 : vector<8x8x4xbf16> to vector<64x4xbf16>
    %c6 = arith.constant 6 : index
    %c0_53 = arith.constant 0 : index
    %c0_54 = arith.constant 0 : index
    %46 = vector.load %arg2[%c6, %c0_53, %c0_54] : memref<9x4x8xbf16, #tpu.memory_space<vmem>>, vector<1x4x8xbf16>
    %47 = vector.shape_cast %46 : vector<1x4x8xbf16> to vector<4x8xbf16>
    %cst_55 = arith.constant dense<0.000000e+00> : vector<64x8xf32>
    %48 = tpu.matmul %45, %47, %cst_55 {dimension_numbers = #tpu.dot_dimension_numbers<[1], [0], [0], [1], [0, 0, 1, 1], [], []>} : vector<64x4xbf16>, vector<4x8xbf16>, vector<64x8xf32> -> vector<64x8xf32>
    %49 = arith.addf %42, %48 : vector<64x8xf32>
    %c0_56 = arith.constant 0 : index
    %c1_57 = arith.constant 1 : index
    %c1_58 = arith.constant 1 : index
    %c0_59 = arith.constant 0 : index
    %c0_60 = arith.constant 0 : index
    %50 = vector.load %arg1[%c0_56, %c1_57, %c1_58, %c0_59, %c0_60] : memref<1x4x9x9x4xbf16, #tpu.memory_space<vmem>>, vector<1x1x8x8x4xbf16>
    %51 = vector.shape_cast %50 : vector<1x1x8x8x4xbf16> to vector<8x8x4xbf16>
    %52 = vector.shape_cast %51 : vector<8x8x4xbf16> to vector<64x4xbf16>
    %c7 = arith.constant 7 : index
    %c0_61 = arith.constant 0 : index
    %c0_62 = arith.constant 0 : index
    %53 = vector.load %arg2[%c7, %c0_61, %c0_62] : memref<9x4x8xbf16, #tpu.memory_space<vmem>>, vector<1x4x8xbf16>
    %54 = vector.shape_cast %53 : vector<1x4x8xbf16> to vector<4x8xbf16>
    %cst_63 = arith.constant dense<0.000000e+00> : vector<64x8xf32>
    %55 = tpu.matmul %52, %54, %cst_63 {dimension_numbers = #tpu.dot_dimension_numbers<[1], [0], [0], [1], [0, 0, 1, 1], [], []>} : vector<64x4xbf16>, vector<4x8xbf16>, vector<64x8xf32> -> vector<64x8xf32>
    %56 = arith.addf %49, %55 : vector<64x8xf32>
    %c0_64 = arith.constant 0 : index
    %c0_65 = arith.constant 0 : index
    %c1_66 = arith.constant 1 : index
    %c1_67 = arith.constant 1 : index
    %c0_68 = arith.constant 0 : index
    %57 = vector.load %arg1[%c0_64, %c0_65, %c1_66, %c1_67, %c0_68] : memref<1x4x9x9x4xbf16, #tpu.memory_space<vmem>>, vector<1x1x8x8x4xbf16>
    %58 = vector.shape_cast %57 : vector<1x1x8x8x4xbf16> to vector<8x8x4xbf16>
    %59 = vector.shape_cast %58 : vector<8x8x4xbf16> to vector<64x4xbf16>
    %c8 = arith.constant 8 : index
    %c0_69 = arith.constant 0 : index
    %c0_70 = arith.constant 0 : index
    %60 = vector.load %arg2[%c8, %c0_69, %c0_70] : memref<9x4x8xbf16, #tpu.memory_space<vmem>>, vector<1x4x8xbf16>
    %61 = vector.shape_cast %60 : vector<1x4x8xbf16> to vector<4x8xbf16>
    %cst_71 = arith.constant dense<0.000000e+00> : vector<64x8xf32>
    %62 = tpu.matmul %59, %61, %cst_71 {dimension_numbers = #tpu.dot_dimension_numbers<[1], [0], [0], [1], [0, 0, 1, 1], [], []>} : vector<64x4xbf16>, vector<4x8xbf16>, vector<64x8xf32> -> vector<64x8xf32>
    %63 = arith.addf %56, %62 : vector<64x8xf32>
    %c0_72 = arith.constant 0 : index
    %c0_73 = arith.constant 0 : index
    %64 = vector.load %arg3[%c0_72, %c0_73] : memref<1x8xf32, #tpu.memory_space<vmem>>, vector<1x8xf32>
    %65 = vector.broadcast %64 : vector<1x8xf32> to vector<64x8xf32>
    %66 = arith.addf %63, %65 : vector<64x8xf32>
    %cst_74 = arith.constant 0.000000e+00 : f32
    %67 = vector.broadcast %cst_74 : f32 to vector<64x8xf32>
    %68 = arith.maximumf %66, %67 : vector<64x8xf32>
    %cst_75 = arith.constant 0.000000e+00 : bf16
    %69 = vector.broadcast %cst_75 : bf16 to vector<10x10x8xbf16>
    %c0_76 = arith.constant 0 : index
    %c0_77 = arith.constant 0 : index
    %c0_78 = arith.constant 0 : index
    %70 = vector.load %arg8[%c0_76, %c0_77, %c0_78] : memref<10x10x8xbf16, #tpu.memory_space<vmem>>, vector<10x10x8xbf16>
    tpu.vector_store %arg8[%c0_76, %c0_77, %c0_78], %69 {strides = array<i32>} : memref<10x10x8xbf16, #tpu.memory_space<vmem>>, vector<10x10x8xbf16>,
    %71 = vector.shape_cast %68 : vector<64x8xf32> to vector<8x8x8xf32>
    %72 = arith.truncf %71 : vector<8x8x8xf32> to vector<8x8x8xbf16>
    %c1_79 = arith.constant 1 : index
    %c1_80 = arith.constant 1 : index
    %c0_81 = arith.constant 0 : index
    %73 = vector.load %arg8[%c1_79, %c1_80, %c0_81] : memref<10x10x8xbf16, #tpu.memory_space<vmem>>, vector<8x8x8xbf16>
    tpu.vector_store %arg8[%c1_79, %c1_80, %c0_81], %72 {strides = array<i32>} : memref<10x10x8xbf16, #tpu.memory_space<vmem>>, vector<8x8x8xbf16>,
    %cst_82 = arith.constant 0.000000e+00 : f32
    %74 = vector.broadcast %cst_82 : f32 to vector<64x8xf32>
    %c0_83 = arith.constant 0 : index
    %c0_84 = arith.constant 0 : index
    %c0_85 = arith.constant 0 : index
    %75 = vector.load %arg8[%c0_83, %c0_84, %c0_85] : memref<10x10x8xbf16, #tpu.memory_space<vmem>>, vector<8x8x8xbf16>
    %76 = vector.shape_cast %75 : vector<8x8x8xbf16> to vector<64x8xbf16>
    %c0_86 = arith.constant 0 : index
    %c0_87 = arith.constant 0 : index
    %c0_88 = arith.constant 0 : index
    %77 = vector.load %arg4[%c0_86, %c0_87, %c0_88] : memref<9x8x8xbf16, #tpu.memory_space<vmem>>, vector<1x8x8xbf16>
    %78 = vector.shape_cast %77 : vector<1x8x8xbf16> to vector<8x8xbf16>
    %cst_89 = arith.constant dense<0.000000e+00> : vector<64x8xf32>
    %79 = tpu.matmul %76, %78, %cst_89 {dimension_numbers = #tpu.dot_dimension_numbers<[1], [0], [0], [1], [0, 0, 1, 1], [], []>} : vector<64x8xbf16>, vector<8x8xbf16>, vector<64x8xf32> -> vector<64x8xf32>
    %80 = arith.addf %74, %79 : vector<64x8xf32>
    %c0_90 = arith.constant 0 : index
    %c1_91 = arith.constant 1 : index
    %c0_92 = arith.constant 0 : index
    %81 = vector.load %arg8[%c0_90, %c1_91, %c0_92] : memref<10x10x8xbf16, #tpu.memory_space<vmem>>, vector<8x8x8xbf16>
    %82 = vector.shape_cast %81 : vector<8x8x8xbf16> to vector<64x8xbf16>
    %c1_93 = arith.constant 1 : index
    %c0_94 = arith.constant 0 : index
    %c0_95 = arith.constant 0 : index
    %83 = vector.load %arg4[%c1_93, %c0_94, %c0_95] : memref<9x8x8xbf16, #tpu.memory_space<vmem>>, vector<1x8x8xbf16>
    %84 = vector.shape_cast %83 : vector<1x8x8xbf16> to vector<8x8xbf16>
    %cst_96 = arith.constant dense<0.000000e+00> : vector<64x8xf32>
    %85 = tpu.matmul %82, %84, %cst_96 {dimension_numbers = #tpu.dot_dimension_numbers<[1], [0], [0], [1], [0, 0, 1, 1], [], []>} : vector<64x8xbf16>, vector<8x8xbf16>, vector<64x8xf32> -> vector<64x8xf32>
    %86 = arith.addf %80, %85 : vector<64x8xf32>
    %c0_97 = arith.constant 0 : index
    %c2_98 = arith.constant 2 : index
    %c0_99 = arith.constant 0 : index
    %87 = vector.load %arg8[%c0_97, %c2_98, %c0_99] : memref<10x10x8xbf16, #tpu.memory_space<vmem>>, vector<8x8x8xbf16>
    %88 = vector.shape_cast %87 : vector<8x8x8xbf16> to vector<64x8xbf16>
    %c2_100 = arith.constant 2 : index
    %c0_101 = arith.constant 0 : index
    %c0_102 = arith.constant 0 : index
    %89 = vector.load %arg4[%c2_100, %c0_101, %c0_102] : memref<9x8x8xbf16, #tpu.memory_space<vmem>>, vector<1x8x8xbf16>
    %90 = vector.shape_cast %89 : vector<1x8x8xbf16> to vector<8x8xbf16>
    %cst_103 = arith.constant dense<0.000000e+00> : vector<64x8xf32>
    %91 = tpu.matmul %88, %90, %cst_103 {dimension_numbers = #tpu.dot_dimension_numbers<[1], [0], [0], [1], [0, 0, 1, 1], [], []>} : vector<64x8xbf16>, vector<8x8xbf16>, vector<64x8xf32> -> vector<64x8xf32>
    %92 = arith.addf %86, %91 : vector<64x8xf32>
    %c1_104 = arith.constant 1 : index
    %c0_105 = arith.constant 0 : index
    %c0_106 = arith.constant 0 : index
    %93 = vector.load %arg8[%c1_104, %c0_105, %c0_106] : memref<10x10x8xbf16, #tpu.memory_space<vmem>>, vector<8x8x8xbf16>
    %94 = vector.shape_cast %93 : vector<8x8x8xbf16> to vector<64x8xbf16>
    %c3_107 = arith.constant 3 : index
    %c0_108 = arith.constant 0 : index
    %c0_109 = arith.constant 0 : index
    %95 = vector.load %arg4[%c3_107, %c0_108, %c0_109] : memref<9x8x8xbf16, #tpu.memory_space<vmem>>, vector<1x8x8xbf16>
    %96 = vector.shape_cast %95 : vector<1x8x8xbf16> to vector<8x8xbf16>
    %cst_110 = arith.constant dense<0.000000e+00> : vector<64x8xf32>
    %97 = tpu.matmul %94, %96, %cst_110 {dimension_numbers = #tpu.dot_dimension_numbers<[1], [0], [0], [1], [0, 0, 1, 1], [], []>} : vector<64x8xbf16>, vector<8x8xbf16>, vector<64x8xf32> -> vector<64x8xf32>
    %98 = arith.addf %92, %97 : vector<64x8xf32>
    %c1_111 = arith.constant 1 : index
    %c1_112 = arith.constant 1 : index
    %c0_113 = arith.constant 0 : index
    %99 = vector.load %arg8[%c1_111, %c1_112, %c0_113] : memref<10x10x8xbf16, #tpu.memory_space<vmem>>, vector<8x8x8xbf16>
    %100 = vector.shape_cast %99 : vector<8x8x8xbf16> to vector<64x8xbf16>
    %c4_114 = arith.constant 4 : index
    %c0_115 = arith.constant 0 : index
    %c0_116 = arith.constant 0 : index
    %101 = vector.load %arg4[%c4_114, %c0_115, %c0_116] : memref<9x8x8xbf16, #tpu.memory_space<vmem>>, vector<1x8x8xbf16>
    %102 = vector.shape_cast %101 : vector<1x8x8xbf16> to vector<8x8xbf16>
    %cst_117 = arith.constant dense<0.000000e+00> : vector<64x8xf32>
    %103 = tpu.matmul %100, %102, %cst_117 {dimension_numbers = #tpu.dot_dimension_numbers<[1], [0], [0], [1], [0, 0, 1, 1], [], []>} : vector<64x8xbf16>, vector<8x8xbf16>, vector<64x8xf32> -> vector<64x8xf32>
    %104 = arith.addf %98, %103 : vector<64x8xf32>
    %c1_118 = arith.constant 1 : index
    %c2_119 = arith.constant 2 : index
    %c0_120 = arith.constant 0 : index
    %105 = vector.load %arg8[%c1_118, %c2_119, %c0_120] : memref<10x10x8xbf16, #tpu.memory_space<vmem>>, vector<8x8x8xbf16>
    %106 = vector.shape_cast %105 : vector<8x8x8xbf16> to vector<64x8xbf16>
    %c5_121 = arith.constant 5 : index
    %c0_122 = arith.constant 0 : index
    %c0_123 = arith.constant 0 : index
    %107 = vector.load %arg4[%c5_121, %c0_122, %c0_123] : memref<9x8x8xbf16, #tpu.memory_space<vmem>>, vector<1x8x8xbf16>
    %108 = vector.shape_cast %107 : vector<1x8x8xbf16> to vector<8x8xbf16>
    %cst_124 = arith.constant dense<0.000000e+00> : vector<64x8xf32>
    %109 = tpu.matmul %106, %108, %cst_124 {dimension_numbers = #tpu.dot_dimension_numbers<[1], [0], [0], [1], [0, 0, 1, 1], [], []>} : vector<64x8xbf16>, vector<8x8xbf16>, vector<64x8xf32> -> vector<64x8xf32>
    %110 = arith.addf %104, %109 : vector<64x8xf32>
    %c2_125 = arith.constant 2 : index
    %c0_126 = arith.constant 0 : index
    %c0_127 = arith.constant 0 : index
    %111 = vector.load %arg8[%c2_125, %c0_126, %c0_127] : memref<10x10x8xbf16, #tpu.memory_space<vmem>>, vector<8x8x8xbf16>
    %112 = vector.shape_cast %111 : vector<8x8x8xbf16> to vector<64x8xbf16>
    %c6_128 = arith.constant 6 : index
    %c0_129 = arith.constant 0 : index
    %c0_130 = arith.constant 0 : index
    %113 = vector.load %arg4[%c6_128, %c0_129, %c0_130] : memref<9x8x8xbf16, #tpu.memory_space<vmem>>, vector<1x8x8xbf16>
    %114 = vector.shape_cast %113 : vector<1x8x8xbf16> to vector<8x8xbf16>
    %cst_131 = arith.constant dense<0.000000e+00> : vector<64x8xf32>
    %115 = tpu.matmul %112, %114, %cst_131 {dimension_numbers = #tpu.dot_dimension_numbers<[1], [0], [0], [1], [0, 0, 1, 1], [], []>} : vector<64x8xbf16>, vector<8x8xbf16>, vector<64x8xf32> -> vector<64x8xf32>
    %116 = arith.addf %110, %115 : vector<64x8xf32>
    %c2_132 = arith.constant 2 : index
    %c1_133 = arith.constant 1 : index
    %c0_134 = arith.constant 0 : index
    %117 = vector.load %arg8[%c2_132, %c1_133, %c0_134] : memref<10x10x8xbf16, #tpu.memory_space<vmem>>, vector<8x8x8xbf16>
    %118 = vector.shape_cast %117 : vector<8x8x8xbf16> to vector<64x8xbf16>
    %c7_135 = arith.constant 7 : index
    %c0_136 = arith.constant 0 : index
    %c0_137 = arith.constant 0 : index
    %119 = vector.load %arg4[%c7_135, %c0_136, %c0_137] : memref<9x8x8xbf16, #tpu.memory_space<vmem>>, vector<1x8x8xbf16>
    %120 = vector.shape_cast %119 : vector<1x8x8xbf16> to vector<8x8xbf16>
    %cst_138 = arith.constant dense<0.000000e+00> : vector<64x8xf32>
    %121 = tpu.matmul %118, %120, %cst_138 {dimension_numbers = #tpu.dot_dimension_numbers<[1], [0], [0], [1], [0, 0, 1, 1], [], []>} : vector<64x8xbf16>, vector<8x8xbf16>, vector<64x8xf32> -> vector<64x8xf32>
    %122 = arith.addf %116, %121 : vector<64x8xf32>
    %c2_139 = arith.constant 2 : index
    %c2_140 = arith.constant 2 : index
    %c0_141 = arith.constant 0 : index
    %123 = vector.load %arg8[%c2_139, %c2_140, %c0_141] : memref<10x10x8xbf16, #tpu.memory_space<vmem>>, vector<8x8x8xbf16>
    %124 = vector.shape_cast %123 : vector<8x8x8xbf16> to vector<64x8xbf16>
    %c8_142 = arith.constant 8 : index
    %c0_143 = arith.constant 0 : index
    %c0_144 = arith.constant 0 : index
    %125 = vector.load %arg4[%c8_142, %c0_143, %c0_144] : memref<9x8x8xbf16, #tpu.memory_space<vmem>>, vector<1x8x8xbf16>
    %126 = vector.shape_cast %125 : vector<1x8x8xbf16> to vector<8x8xbf16>
    %cst_145 = arith.constant dense<0.000000e+00> : vector<64x8xf32>
    %127 = tpu.matmul %124, %126, %cst_145 {dimension_numbers = #tpu.dot_dimension_numbers<[1], [0], [0], [1], [0, 0, 1, 1], [], []>} : vector<64x8xbf16>, vector<8x8xbf16>, vector<64x8xf32> -> vector<64x8xf32>
    %128 = arith.addf %122, %127 : vector<64x8xf32>
    %c0_146 = arith.constant 0 : index
    %c0_147 = arith.constant 0 : index
    %129 = vector.load %arg5[%c0_146, %c0_147] : memref<1x8xf32, #tpu.memory_space<vmem>>, vector<1x8xf32>
    %130 = vector.broadcast %129 : vector<1x8xf32> to vector<64x8xf32>
    %131 = arith.addf %128, %130 : vector<64x8xf32>
    %c0_148 = arith.constant 0 : index
    %c3_149 = arith.constant 3 : index
    %c0_150 = arith.constant 0 : index
    %c0_151 = arith.constant 0 : index
    %c0_152 = arith.constant 0 : index
    %132 = vector.load %arg1[%c0_148, %c3_149, %c0_150, %c0_151, %c0_152] : memref<1x4x9x9x4xbf16, #tpu.memory_space<vmem>>, vector<1x1x8x8x4xbf16>
    %133 = vector.shape_cast %132 : vector<1x1x8x8x4xbf16> to vector<8x8x4xbf16>
    %134 = vector.shape_cast %133 : vector<8x8x4xbf16> to vector<64x4xbf16>
    %c0_153 = arith.constant 0 : index
    %c0_154 = arith.constant 0 : index
    %135 = vector.load %arg6[%c0_153, %c0_154] : memref<4x8xbf16, #tpu.memory_space<vmem>>, vector<4x8xbf16>
    %cst_155 = arith.constant dense<0.000000e+00> : vector<64x8xf32>
    %136 = tpu.matmul %134, %135, %cst_155 {dimension_numbers = #tpu.dot_dimension_numbers<[1], [0], [0], [1], [0, 0, 1, 1], [], []>} : vector<64x4xbf16>, vector<4x8xbf16>, vector<64x8xf32> -> vector<64x8xf32>
    %137 = arith.addf %131, %136 : vector<64x8xf32>
    %cst_156 = arith.constant 0.000000e+00 : f32
    %138 = vector.broadcast %cst_156 : f32 to vector<64x8xf32>
    %139 = arith.maximumf %137, %138 : vector<64x8xf32>
    %140 = vector.shape_cast %139 : vector<64x8xf32> to vector<1x8x8x8xf32>
    %c0_157 = arith.constant 0 : index
    %c0_158 = arith.constant 0 : index
    %c0_159 = arith.constant 0 : index
    %c0_160 = arith.constant 0 : index
    %141 = vector.load %arg7[%c0_157, %c0_158, %c0_159, %c0_160] : memref<1x8x8x8xf32, #tpu.memory_space<vmem>>, vector<1x8x8x8xf32>
    tpu.vector_store %arg7[%c0_157, %c0_158, %c0_159, %c0_160], %140 {strides = array<i32>} : memref<1x8x8x8xf32, #tpu.memory_space<vmem>>, vector<1x8x8x8xf32>,
    return
  }
  func.func @transform_0(%arg0: i32) -> (i32, i32, i32, i32, i32) {
    %c0_i32 = arith.constant 0 : i32
    %c0_i32_0 = arith.constant 0 : i32
    %c0_i32_1 = arith.constant 0 : i32
    %c0_i32_2 = arith.constant 0 : i32
    %c0_i32_3 = arith.constant 0 : i32
    return %arg0, %c0_i32, %c0_i32_0, %c0_i32_1, %c0_i32_2 : i32, i32, i32, i32, i32
  }
  func.func @transform_1(%arg0: i32) -> (i32, i32, i32) {
    %c0_i32 = arith.constant 0 : i32
    %c0_i32_0 = arith.constant 0 : i32
    %c0_i32_1 = arith.constant 0 : i32
    %c0_i32_2 = arith.constant 0 : i32
    return %c0_i32, %c0_i32_0, %c0_i32_1 : i32, i32, i32
  }
  func.func @transform_2(%arg0: i32) -> (i32, i32) {
    %c0_i32 = arith.constant 0 : i32
    %c0_i32_0 = arith.constant 0 : i32
    %c0_i32_1 = arith.constant 0 : i32
    return %c0_i32, %c0_i32_0 : i32, i32
  }
  func.func @transform_3(%arg0: i32) -> (i32, i32, i32) {
    %c0_i32 = arith.constant 0 : i32
    %c0_i32_0 = arith.constant 0 : i32
    %c0_i32_1 = arith.constant 0 : i32
    %c0_i32_2 = arith.constant 0 : i32
    return %c0_i32, %c0_i32_0, %c0_i32_1 : i32, i32, i32
  }
  func.func @transform_4(%arg0: i32) -> (i32, i32) {
    %c0_i32 = arith.constant 0 : i32
    %c0_i32_0 = arith.constant 0 : i32
    %c0_i32_1 = arith.constant 0 : i32
    return %c0_i32, %c0_i32_0 : i32, i32
  }
  func.func @transform_5(%arg0: i32) -> (i32, i32) {
    %c0_i32 = arith.constant 0 : i32
    %c0_i32_0 = arith.constant 0 : i32
    %c0_i32_1 = arith.constant 0 : i32
    return %c0_i32, %c0_i32_0 : i32, i32
  }
  func.func @transform_6(%arg0: i32) -> (i32, i32, i32, i32) {
    %c0_i32 = arith.constant 0 : i32
    %c0_i32_0 = arith.constant 0 : i32
    %c0_i32_1 = arith.constant 0 : i32
    %c0_i32_2 = arith.constant 0 : i32
    return %arg0, %c0_i32, %c0_i32_0, %c0_i32_1 : i32, i32, i32, i32
  }
}

</mosaic_0001>

<llo_original>
// kernel: resblock_forward.1
$region0: #{resblock_forward.1}
  #allocation0 [shape = 'u32[]', space=smem, size = 0x4, offset = 0x4, fixed_abs, tag = 'smem constant byte address 0x4 - core index']
  #allocation1 [shape = 'u32[144,128]{1,0:T(1,128)}', space=vmem, size = 0x12000, scoped, tag = 'internal scratch']
  #allocation2 [shape = 'bf16[10,10,8]{2,1,0:T(8,128)(2,1)}', space=vmem, size = 0xa000, scoped, tag = 'scratch operand']
  %s0 = inlined_call_operand.vmem [shape: bf16[2,4,9,9,4], index: 0, kind: input, shape index: {}]
  %s1 = inlined_call_operand.vmem [shape: bf16[9,4,8], index: 1, kind: input, shape index: {}]
  %s2 = inlined_call_operand.vmem [shape: f32[1,8], index: 2, kind: input, shape index: {}]
  %s3 = inlined_call_operand.vmem [shape: bf16[9,8,8], index: 3, kind: input, shape index: {}]
  %s4 = inlined_call_operand.vmem [shape: f32[1,8], index: 4, kind: input, shape index: {}]
  %s5 = inlined_call_operand.vmem [shape: bf16[4,8], index: 5, kind: input, shape index: {}]
  %s6 = inlined_call_operand.vmem [shape: f32[2,8,8,8], index: 6, kind: output, shape index: {}]
  %s7 = sld [smem:[#allocation0]]
  $region57: #{resblock_forward.1} parent=0
    _
  %s9 = ssub.s32 1, %s7
  %s10 = scalar_select 0, %s9, %s7
  loop: start=0, step=1, limit=4
  $region2: #{resblock_forward.1} parent=0 // loop_pre_header
    _
  $region3: #{resblock_forward.1} parent=0 // loop_header
    %s12 = sphi 0, %s16
    %p13 = scmp.ge.s32.totalorder %s12, 4
    %s22 = sphi 0, %s24
    %s25 = sphi 0, %s22
    %s26 = sphi 0, %s25
    %s42 = sphi 0, %s26
    %s46 = sphi 0, %s46
    %s48 = sphi 0, %s46
    %s49 = sphi 0, %s48
    %s63 = sphi 0, %s49
    %s67 = sphi 0, %s67
    %s69 = sphi 0, %s67
    %s70 = sphi 0, %s69
    %s84 = sphi 0, %s70
    %s88 = sphi 0, %s88
    %s90 = sphi 0, %s88
    %s91 = sphi 0, %s90
    %s105 = sphi 0, %s91
    %s109 = sphi 0, %s109
    %s111 = sphi 0, %s109
    %s112 = sphi 0, %s111
    %s126 = sphi 0, %s112
    %s130 = sphi 0, %s130
    %s132 = sphi 0, %s130
    %s133 = sphi 0, %s132
    %s147 = sphi 0, %s133
    %s153 = sphi 0, %s155
    %s156 = sphi 0, %s153
    %s157 = sphi 0, %s156
    %s173 = sphi 0, %s157
  $region4: #{resblock_forward.1} parent=0 // loop_header_branch
    %15 = sbr.rel (%p13) target = $region8
  $region5: #{resblock_forward.1} parent=0 // loop_body
    %s17 = ssub.s32 %s12, 1
    %s18 = ssub.s32 %s12, 2
    %s19 = sadd.s32 %s12, 1
    %s20 = ssub.s32 %s12, %s19
    %p21 = scmp.eq.s32.totalorder %s20, 0
    %s23 = sadd.s32 %s22, 1
    %s24 = scalar_select %p21, %s22, %s23
    %p27 = pneg %p21
    %p28 = scmp.eq.s32.totalorder %s12, 1
    %p29 = por %p27, %p28
    %p30 = scmp.ne.s32.totalorder %s22, %s25
    %p31 = scmp.eq.s32.totalorder %s12, 0
    %p32 = por %p30, %p31
    %p33 = scmp.ne.s32.totalorder %s22, %s25
    %p34 = scmp.eq.s32.totalorder %s17, 1
    %p35 = por %p33, %p34
    %p36 = scmp.ne.s32.totalorder %s25, %s26
    %p37 = scmp.eq.s32.totalorder %s17, 0
    %p38 = por %p36, %p37
    %p39 = scmp.ne.s32.totalorder %s25, %s26
    %p40 = scmp.eq.s32.totalorder %s18, 1
    %p41 = por %p39, %p40
    %p43 = scmp.ne.s32.totalorder %s26, %s42
    %p44 = scmp.eq.s32.totalorder %s18, 0
    %p45 = por %p43, %p44
    %s47 = sadd.s32 %s46, 1
    %p50 = scmp.eq.s32.totalorder %s12, 1
    %p51 = scmp.ne.s32.totalorder %s46, %s48
    %p52 = scmp.eq.s32.totalorder %s12, 0
    %p53 = por %p51, %p52
    %p54 = scmp.ne.s32.totalorder %s46, %s48
    %p55 = scmp.eq.s32.totalorder %s17, 1
    %p56 = por %p54, %p55
    %p57 = scmp.ne.s32.totalorder %s48, %s49
    %p58 = scmp.eq.s32.totalorder %s17, 0
    %p59 = por %p57, %p58
    %p60 = scmp.ne.s32.totalorder %s48, %s49
    %p61 = scmp.eq.s32.totalorder %s18, 1
    %p62 = por %p60, %p61
    %p64 = scmp.ne.s32.totalorder %s49, %s63
    %p65 = scmp.eq.s32.totalorder %s18, 0
    %p66 = por %p64, %p65
    %s68 = sadd.s32 %s67, 1
    %p71 = scmp.eq.s32.totalorder %s12, 1
    %p72 = scmp.ne.s32.totalorder %s67, %s69
    %p73 = scmp.eq.s32.totalorder %s12, 0
    %p74 = por %p72, %p73
    %p75 = scmp.ne.s32.totalorder %s67, %s69
    %p76 = scmp.eq.s32.totalorder %s17, 1
    %p77 = por %p75, %p76
    %p78 = scmp.ne.s32.totalorder %s69, %s70
    %p79 = scmp.eq.s32.totalorder %s17, 0
    %p80 = por %p78, %p79
    %p81 = scmp.ne.s32.totalorder %s69, %s70
    %p82 = scmp.eq.s32.totalorder %s18, 1
    %p83 = por %p81, %p82
    %p85 = scmp.ne.s32.totalorder %s70, %s84
    %p86 = scmp.eq.s32.totalorder %s18, 0
    %p87 = por %p85, %p86
    %s89 = sadd.s32 %s88, 1
    %p92 = scmp.eq.s32.totalorder %s12, 1
    %p93 = scmp.ne.s32.totalorder %s88, %s90
    %p94 = scmp.eq.s32.totalorder %s12, 0
    %p95 = por %p93, %p94
    %p96 = scmp.ne.s32.totalorder %s88, %s90
    %p97 = scmp.eq.s32.totalorder %s17, 1
    %p98 = por %p96, %p97
    %p99 = scmp.ne.s32.totalorder %s90, %s91
    %p100 = scmp.eq.s32.totalorder %s17, 0
    %p101 = por %p99, %p100
    %p102 = scmp.ne.s32.totalorder %s90, %s91
    %p103 = scmp.eq.s32.totalorder %s18, 1
    %p104 = por %p102, %p103
    %p106 = scmp.ne.s32.totalorder %s91, %s105
    %p107 = scmp.eq.s32.totalorder %s18, 0
    %p108 = por %p106, %p107
    %s110 = sadd.s32 %s109, 1
    %p113 = scmp.eq.s32.totalorder %s12, 1
    %p114 = scmp.ne.s32.totalorder %s109, %s111
    %p115 = scmp.eq.s32.totalorder %s12, 0
    %p116 = por %p114, %p115
    %p117 = scmp.ne.s32.totalorder %s109, %s111
    %p118 = scmp.eq.s32.totalorder %s17, 1
    %p119 = por %p117, %p118
    %p120 = scmp.ne.s32.totalorder %s111, %s112
    %p121 = scmp.eq.s32.totalorder %s17, 0
    %p122 = por %p120, %p121
    %p123 = scmp.ne.s32.totalorder %s111, %s112
    %p124 = scmp.eq.s32.totalorder %s18, 1
    %p125 = por %p123, %p124
    %p127 = scmp.ne.s32.totalorder %s112, %s126
    %p128 = scmp.eq.s32.totalorder %s18, 0
    %p129 = por %p127, %p128
    %s131 = sadd.s32 %s130, 1
    %p134 = scmp.eq.s32.totalorder %s12, 1
    %p135 = scmp.ne.s32.totalorder %s130, %s132
    %p136 = scmp.eq.s32.totalorder %s12, 0
    %p137 = por %p135, %p136
    %p138 = scmp.ne.s32.totalorder %s130, %s132
    %p139 = scmp.eq.s32.totalorder %s17, 1
    %p140 = por %p138, %p139
    %p141 = scmp.ne.s32.totalorder %s132, %s133
    %p142 = scmp.eq.s32.totalorder %s17, 0
    %p143 = por %p141, %p142
    %p144 = scmp.ne.s32.totalorder %s132, %s133
    %p145 = scmp.eq.s32.totalorder %s18, 1
    %p146 = por %p144, %p145
    %p148 = scmp.ne.s32.totalorder %s133, %s147
    %p149 = scmp.eq.s32.totalorder %s18, 0
    %p150 = por %p148, %p149
    %s151 = ssub.s32 %s12, %s19
    %p152 = scmp.eq.s32.totalorder %s151, 0
    %s154 = sadd.s32 %s153, 1
    %s155 = scalar_select %p152, %s153, %s154
    %p158 = pneg %p152
    %p159 = scmp.eq.s32.totalorder %s12, 1
    %p160 = por %p158, %p159
    %p161 = scmp.ne.s32.totalorder %s153, %s156
    %p162 = scmp.eq.s32.totalorder %s12, 0
    %p163 = por %p161, %p162
    %p164 = scmp.ne.s32.totalorder %s153, %s156
    %p165 = scmp.eq.s32.totalorder %s17, 1
    %p166 = por %p164, %p165
    %p167 = scmp.ne.s32.totalorder %s156, %s157
    %p168 = scmp.eq.s32.totalorder %s17, 0
    %p169 = por %p167, %p168
    %p170 = scmp.ne.s32.totalorder %s156, %s157
    %p171 = scmp.eq.s32.totalorder %s18, 1
    %p172 = por %p170, %p171
    %p174 = scmp.ne.s32.totalorder %s157, %s173
    %p175 = scmp.eq.s32.totalorder %s18, 0
    %p176 = por %p174, %p175
    %p177 = scmp.le.s32.totalorder 1, %s12
    %p178 = scmp.lt.s32.totalorder %s12, 3
    %p179 = pnand %p177, %p178
    %p180 = pneg %p179
    // Predicated region
    $region9: #{resblock_forward.1} parent=5 // pred_check
      _
    $region10: #{resblock_forward.1} parent=5 // pred_check_branch
      %182 = sbr.rel (%p179) target = $region12
    $region11: #{resblock_forward.1} parent=5 // pred_region
      %s183 = ssub.s32 %s12, 1
      // Predicated region
      $region13: #{resblock_forward.1} parent=11 // pred_check
        %p184 = pneg %p59
      $region14: #{resblock_forward.1} parent=11 // pred_check_branch
        %186 = sbr.rel (%p184) target = $region16
      $region15: #{resblock_forward.1} parent=11 // pred_region
        _
      $region16: #{resblock_forward.1} parent=11 // pred_fallthru
        _
      // Predicated region
      $region17: #{resblock_forward.1} parent=11 // pred_check
        %p187 = pneg %p80
      $region18: #{resblock_forward.1} parent=11 // pred_check_branch
        %189 = sbr.rel (%p187) target = $region20
      $region19: #{resblock_forward.1} parent=11 // pred_region
        _
      $region20: #{resblock_forward.1} parent=11 // pred_fallthru
        _
      // Predicated region
      $region21: #{resblock_forward.1} parent=11 // pred_check
        %p190 = pneg %p101
      $region22: #{resblock_forward.1} parent=11 // pred_check_branch
        %192 = sbr.rel (%p190) target = $region24
      $region23: #{resblock_forward.1} parent=11 // pred_region
        _
      $region24: #{resblock_forward.1} parent=11 // pred_fallthru
        _
      // Predicated region
      $region25: #{resblock_forward.1} parent=11 // pred_check
        %p193 = pneg %p122
      $region26: #{resblock_forward.1} parent=11 // pred_check_branch
        %195 = sbr.rel (%p193) target = $region28
      $region27: #{resblock_forward.1} parent=11 // pred_region
        _
      $region28: #{resblock_forward.1} parent=11 // pred_fallthru
        _
      // Predicated region
      $region29: #{resblock_forward.1} parent=11 // pred_check
        %p196 = pneg %p143
      $region30: #{resblock_forward.1} parent=11 // pred_check_branch
        %198 = sbr.rel (%p196) target = $region32
      $region31: #{resblock_forward.1} parent=11 // pred_region
        _
      $region32: #{resblock_forward.1} parent=11 // pred_fallthru
        _
    $region12: #{resblock_forward.1} parent=5 // pred_fallthru
      _
    %p199 = scmp.lt.s32.totalorder %s12, 2
    // Predicated region
    $region33: #{resblock_forward.1} parent=5 // pred_check
      %p200 = pneg %p199
    $region34: #{resblock_forward.1} parent=5 // pred_check_branch
      %202 = sbr.rel (%p200) target = $region36
    $region35: #{resblock_forward.1} parent=5 // pred_region
      // Predicated region
      $region37: #{resblock_forward.1} parent=35 // pred_check
        %p203 = pneg %p32
      $region38: #{resblock_forward.1} parent=35 // pred_check_branch
        %205 = sbr.rel (%p203) target = $region40
      $region39: #{resblock_forward.1} parent=35 // pred_region
        %p206 = scmp.lt.s32.totalorder %s12, 1
        %s207 = scalar_select %p206, %s12, 1
        %s208 = smul.addr %s207, 72
        %s209 = smul.addr %s208, 4
        %s210 = scalar_lea.vmem %s0, %s209
      $region40: #{resblock_forward.1} parent=35 // pred_fallthru
        _
    $region36: #{resblock_forward.1} parent=5 // pred_fallthru
      _
    %p211 = scmp.le.s32.totalorder 1, %s12
    %p212 = scmp.lt.s32.totalorder %s12, 3
    %p213 = pnand %p211, %p212
    %p214 = pneg %p213
    // Predicated region
    $region41: #{resblock_forward.1} parent=5 // pred_check
      _
    $region42: #{resblock_forward.1} parent=5 // pred_check_branch
      %216 = sbr.rel (%p213) target = $region44
    $region43: #{resblock_forward.1} parent=5 // pred_region
      %s217 = ssub.s32 %s12, 1
      %p218 = scmp.lt.s32.totalorder %s17, 1
      %s219 = scalar_select %p218, %s17, 1
      %s220 = smul.addr %s219, 72
      %s221 = smul.addr %s220, 4
      %s222 = scalar_lea.vmem %s0, %s221
      %p223 = pneg %p38
      %p224 = pneg %p35
      %p225 = pneg %p59
      %p226 = pneg %p56
      %p227 = pneg %p80
      %p228 = pneg %p77
      %p229 = pneg %p101
      %p230 = pneg %p98
      %p231 = pneg %p122
      %p232 = pneg %p119
      %p233 = pneg %p143
      %p234 = pneg %p140
      %p235 = pneg %p169
      %p236 = pneg %p166
      %p237 = scmp.lt.s32.totalorder %s17, 1
      %s238 = scalar_select %p237, %s17, 1
      %s239 = smul.addr %s238, 8
      %s240 = smul.addr %s239, 8
      %s241 = scalar_lea.vmem %s6, %s240
      %p242 = scmp.lt.s32.totalorder %s17, 1
      %s243 = scalar_select %p242, %s17, 1
      %s244 = smul.addr %s243, 72
      %s245 = smul.addr %s244, 4
      %s246 = scalar_lea.vmem %s0, %s245
      %p247 = scmp.lt.s32.totalorder %s17, 1
      %s248 = scalar_select %p247, %s17, 1
      %s249 = smul.addr %s248, 8
      %s250 = smul.addr %s249, 8
      %s251 = scalar_lea.vmem %s6, %s250
      %v253 = vld [vmem:[%s246] sm:$0xf]
      %v254 = vld [vmem:[%s246 + $0x8] sm:$0xf]
      %v255 = vld [vmem:[%s246 + $0x10] sm:$0xf]
      %v256 = vld [vmem:[%s246 + $0x18] sm:$0xf]
      %v257 = vld [vmem:[%s246 + $0x20] sm:$0xf]
      %v258 = vld [vmem:[%s246 + $0x28] sm:$0xf]
      %v259 = vld [vmem:[%s246 + $0x30] sm:$0xf]
      %v260 = vld [vmem:[%s246 + $0x38] sm:$0xf]
      %v261 = vld [vmem:[%s1] sm:$0x3]
      %s262 = scalar_lea.vmem %s246, 72
      %v263 = vld [vmem:[%s262] sm:$0xf]
      %v264 = vld [vmem:[%s262 + $0x8] sm:$0xf]
      %v265 = vld [vmem:[%s262 + $0x10] sm:$0xf]
      %v266 = vld [vmem:[%s262 + $0x18] sm:$0xf]
      %v267 = vld [vmem:[%s262 + $0x20] sm:$0xf]
      %v268 = vld [vmem:[%s262 + $0x28] sm:$0xf]
      %v269 = vld [vmem:[%s262 + $0x30] sm:$0xf]
      %v270 = vld [vmem:[%s262 + $0x38] sm:$0xf]
      %s271 = scalar_lea.vmem %s1, 2
      %v272 = vld [vmem:[%s271] sm:$0x3]
      %v281 = vunpack.c.l.b16 %v263
      %v282 = vunpack.c.l.b16 %v264
      %v283 = vunpack.c.l.b16 %v265
      %v284 = vunpack.c.l.b16 %v266
      %v285 = vunpack.c.l.b16 %v267
      %v286 = vunpack.c.l.b16 %v268
      %v287 = vunpack.c.l.b16 %v269
      %v288 = vunpack.c.l.b16 %v270
      %v289 = vpack.c.b16 %v282, %v281
      %v290 = vpack.c.b16 %v284, %v283
      %v291 = vpack.c.b16 %v286, %v285
      %v292 = vpack.c.b16 %v288, %v287
      %vm293 = vcmask 31744
      %v295 = vsel %vm293, %v289, 0
      %v298 = vsel %vm293, %v290, 0
      %v301 = vsel %vm293, %v291, 0
      %v304 = vsel %vm293, %v292, 0
      %vm306 = vcmask 1041408
      %v308 = vsel %vm306, %v272, 0
      %310 = vmatprep.subr.bf16.mxu0 0
      %311 = vmatpush1.bf16.msra.mxu0 %v308
      %312 = vmatprep.subr.bf16.mxu0 0
      %313 = vmatpush1.bf16.msra.mxu0 0
      %314 = vmatprep.subr.bf16.mxu0 0
      %315 = vmatpush1.bf16.msra.mxu0 0
      %316 = vmatprep.subr.bf16.mxu0 0
      %317 = vmatpush1.bf16.msra.mxu0 0
      %318 = vmatprep.subr.bf16.mxu0 0
      %319 = vmatpush1.bf16.msra.mxu0 0
      %320 = vmatprep.subr.bf16.mxu0 0
      %321 = vmatpush1.bf16.msra.mxu0 0
      %322 = vmatprep.subr.bf16.mxu0 0
      %323 = vmatpush1.bf16.msra.mxu0 0
      %324 = vmatprep.subr.bf16.mxu0 0
      %325 = vmatpush1.bf16.msra.mxu0 0
      %326 = vmatprep.subr.bf16.mxu0 0
      %327 = vmatpush1.bf16.msra.mxu0 0
      %328 = vmatprep.subr.bf16.mxu0 0
      %329 = vmatpush1.bf16.msra.mxu0 0
      %330 = vmatprep.subr.bf16.mxu0 0
      %331 = vmatpush1.bf16.msra.mxu0 0
      %332 = vmatprep.subr.bf16.mxu0 0
      %333 = vmatpush1.bf16.msra.mxu0 0
      %334 = vmatprep.subr.bf16.mxu0 0
      %335 = vmatpush1.bf16.msra.mxu0 0
      %336 = vmatprep.subr.bf16.mxu0 0
      %337 = vmatpush1.bf16.msra.mxu0 0
      %338 = vmatprep.subr.bf16.mxu0 0
      %339 = vmatpush1.bf16.msra.mxu0 0
      %340 = vmatprep.subr.bf16.mxu0 0
      %341 = vmatpush1.bf16.msra.mxu0 0
      %342 = vmatprep.mubr.bf16.mxu0 0
      %343 = vmatmul.mubr.bf16.gmra.mrb[0].mxu0 %v295
      %v344 = vpop.f32.mrb[0].mxu0
      %v345 = vadd.f32 0.0, %v344
      %v346 = vpop.f32.mrb[0].mxu0
      %v347 = vpop.f32.mrb[0].mxu0
      %v348 = vadd.f32 0.0, %v347
      %v349 = vpop.f32.mrb[0].mxu0
      %350 = vmatprep.mubr.bf16.mxu0 0
      %351 = vmatmul.mubr.bf16.gmra.mrb[0].mxu0 %v298
      %v352 = vpop.f32.mrb[0].mxu0
      %v353 = vadd.f32 0.0, %v352
      %v354 = vpop.f32.mrb[0].mxu0
      %v355 = vpop.f32.mrb[0].mxu0
      %v356 = vadd.f32 0.0, %v355
      %v357 = vpop.f32.mrb[0].mxu0
      %358 = vmatprep.mubr.bf16.mxu0 0
      %359 = vmatmul.mubr.bf16.gmra.mrb[0].mxu0 %v301
      %v360 = vpop.f32.mrb[0].mxu0
      %v361 = vadd.f32 0.0, %v360
      %v362 = vpop.f32.mrb[0].mxu0
      %v363 = vpop.f32.mrb[0].mxu0
      %v364 = vadd.f32 0.0, %v363
      %v365 = vpop.f32.mrb[0].mxu0
      %366 = vmatprep.mubr.bf16.mxu0 0
      %367 = vmatmul.mubr.bf16.gmra.mrb[0].mxu0 %v304
      %v368 = vpop.f32.mrb[0].mxu0
      %v369 = vadd.f32 0.0, %v368
      %v370 = vpop.f32.mrb[0].mxu0
      %v371 = vpop.f32.mrb[0].mxu0
      %v372 = vadd.f32 0.0, %v371
      %v373 = vpop.f32.mrb[0].mxu0
      %374 = vdwg.mxu0
      %v383 = vunpack.c.l.b16 %v253
      %v384 = vunpack.c.l.b16 %v254
      %v385 = vunpack.c.l.b16 %v255
      %v386 = vunpack.c.l.b16 %v256
      %v387 = vunpack.c.l.b16 %v257
      %v388 = vunpack.c.l.b16 %v258
      %v389 = vunpack.c.l.b16 %v259
      %v390 = vunpack.c.l.b16 %v260
      %v391 = vpack.c.b16 %v384, %v383
      %v392 = vpack.c.b16 %v386, %v385
      %v393 = vpack.c.b16 %v388, %v387
      %v394 = vpack.c.b16 %v390, %v389
      %v396 = vsel %vm293, %v391, 0
      %v399 = vsel %vm293, %v392, 0
      %v402 = vsel %vm293, %v393, 0
      %v405 = vsel %vm293, %v394, 0
      %v408 = vsel %vm306, %v261, 0
      %410 = vmatprep.subr.bf16.mxu0 0
      %411 = vmatpush1.bf16.msra.mxu0 %v408
      %412 = vmatprep.subr.bf16.mxu0 0
      %413 = vmatpush1.bf16.msra.mxu0 0
      %414 = vmatprep.subr.bf16.mxu0 0
      %415 = vmatpush1.bf16.msra.mxu0 0
      %416 = vmatprep.subr.bf16.mxu0 0
      %417 = vmatpush1.bf16.msra.mxu0 0
      %418 = vmatprep.subr.bf16.mxu0 0
      %419 = vmatpush1.bf16.msra.mxu0 0
      %420 = vmatprep.subr.bf16.mxu0 0
      %421 = vmatpush1.bf16.msra.mxu0 0
      %422 = vmatprep.subr.bf16.mxu0 0
      %423 = vmatpush1.bf16.msra.mxu0 0
      %424 = vmatprep.subr.bf16.mxu0 0
      %425 = vmatpush1.bf16.msra.mxu0 0
      %426 = vmatprep.subr.bf16.mxu0 0
      %427 = vmatpush1.bf16.msra.mxu0 0
      %428 = vmatprep.subr.bf16.mxu0 0
      %429 = vmatpush1.bf16.msra.mxu0 0
      %430 = vmatprep.subr.bf16.mxu0 0
      %431 = vmatpush1.bf16.msra.mxu0 0
      %432 = vmatprep.subr.bf16.mxu0 0
      %433 = vmatpush1.bf16.msra.mxu0 0
      %434 = vmatprep.subr.bf16.mxu0 0
      %435 = vmatpush1.bf16.msra.mxu0 0
      %436 = vmatprep.subr.bf16.mxu0 0
      %437 = vmatpush1.bf16.msra.mxu0 0
      %438 = vmatprep.subr.bf16.mxu0 0
      %439 = vmatpush1.bf16.msra.mxu0 0
      %440 = vmatprep.subr.bf16.mxu0 0
      %441 = vmatpush1.bf16.msra.mxu0 0
      %442 = vmatprep.mubr.bf16.mxu0 0
      %443 = vmatmul.mubr.bf16.gmra.mrb[0].mxu0 %v396
      %v444 = vpop.f32.mrb[0].mxu0
      %v445 = vadd.f32 %v345, %v444
      %v446 = vpop.f32.mrb[0].mxu0
      %v447 = vpop.f32.mrb[0].mxu0
      %v448 = vadd.f32 %v348, %v447
      %v449 = vpop.f32.mrb[0].mxu0
      %450 = vmatprep.mubr.bf16.mxu0 0
      %451 = vmatmul.mubr.bf16.gmra.mrb[0].mxu0 %v399
      %v452 = vpop.f32.mrb[0].mxu0
      %v453 = vadd.f32 %v353, %v452
      %v454 = vpop.f32.mrb[0].mxu0
      %v455 = vpop.f32.mrb[0].mxu0
      %v456 = vadd.f32 %v356, %v455
      %v457 = vpop.f32.mrb[0].mxu0
      %458 = vmatprep.mubr.bf16.mxu0 0
      %459 = vmatmul.mubr.bf16.gmra.mrb[0].mxu0 %v402
      %v460 = vpop.f32.mrb[0].mxu0
      %v461 = vadd.f32 %v361, %v460
      %v462 = vpop.f32.mrb[0].mxu0
      %v463 = vpop.f32.mrb[0].mxu0
      %v464 = vadd.f32 %v364, %v463
      %v465 = vpop.f32.mrb[0].mxu0
      %466 = vmatprep.mubr.bf16.mxu0 0
      %467 = vmatmul.mubr.bf16.gmra.mrb[0].mxu0 %v405
      %v468 = vpop.f32.mrb[0].mxu0
      %v469 = vadd.f32 %v369, %v468
      %v470 = vpop.f32.mrb[0].mxu0
      %v471 = vpop.f32.mrb[0].mxu0
      %v472 = vadd.f32 %v372, %v471
      %v473 = vpop.f32.mrb[0].mxu0
      %474 = vdwg.mxu0
      %v475 = vld [vmem:[%s246] sm:$0xf]
      %v476 = vld [vmem:[%s246 + $0x4] sm:$0x1]
      %v477 = vld [vmem:[%s246 + $0x8] sm:$0xf]
      %v478 = vld [vmem:[%s246 + $0xc] sm:$0x1]
      %v479 = vld [vmem:[%s246 + $0x10] sm:$0xf]
      %v480 = vld [vmem:[%s246 + $0x14] sm:$0x1]
      %v481 = vld [vmem:[%s246 + $0x18] sm:$0xf]
      %v482 = vld [vmem:[%s246 + $0x1c] sm:$0x1]
      %v483 = vld [vmem:[%s246 + $0x20] sm:$0xf]
      %v484 = vld [vmem:[%s246 + $0x24] sm:$0x1]
      %v485 = vld [vmem:[%s246 + $0x28] sm:$0xf]
      %v486 = vld [vmem:[%s246 + $0x2c] sm:$0x1]
      %v487 = vld [vmem:[%s246 + $0x30] sm:$0xf]
      %v488 = vld [vmem:[%s246 + $0x34] sm:$0x1]
      %v489 = vld [vmem:[%s246 + $0x38] sm:$0xf]
      %v490 = vld [vmem:[%s246 + $0x3c] sm:$0x1]
      %vm491 = vsmask.f32 3328
      %vm492 = vsmask.f32 7440
      %vm493 = vmor %vm491, %vm492
      %v495 = vshrl.u32 %v475, 16
      %v497 = vrot.slane %v495, 4
      %v498 = vshll.u32 %v475, 16
      %v500 = vrot.slane %v498, 5
      %v501 = vor.u32 %v497, %v500
      %v502 = vrot.slane %v501, 4
      %v504 = vshll.u32 %v476, 16
      %v506 = vrot.slane %v504, 5
      %v507 = vsel %vm493, %v502, %v506
      %v509 = vshrl.u32 %v477, 16
      %v511 = vrot.slane %v509, 4
      %v512 = vshll.u32 %v477, 16
      %v514 = vrot.slane %v512, 5
      %v515 = vor.u32 %v511, %v514
      %v516 = vrot.slane %v515, 4
      %v518 = vshll.u32 %v478, 16
      %v520 = vrot.slane %v518, 5
      %v521 = vsel %vm493, %v516, %v520
      %v523 = vshrl.u32 %v479, 16
      %v525 = vrot.slane %v523, 4
      %v526 = vshll.u32 %v479, 16
      %v528 = vrot.slane %v526, 5
      %v529 = vor.u32 %v525, %v528
      %v530 = vrot.slane %v529, 4
      %v532 = vshll.u32 %v480, 16
      %v534 = vrot.slane %v532, 5
      %v535 = vsel %vm493, %v530, %v534
      %v537 = vshrl.u32 %v481, 16
      %v539 = vrot.slane %v537, 4
      %v540 = vshll.u32 %v481, 16
      %v542 = vrot.slane %v540, 5
      %v543 = vor.u32 %v539, %v542
      %v544 = vrot.slane %v543, 4
      %v546 = vshll.u32 %v482, 16
      %v548 = vrot.slane %v546, 5
      %v549 = vsel %vm493, %v544, %v548
      %v551 = vshrl.u32 %v483, 16
      %v553 = vrot.slane %v551, 4
      %v554 = vshll.u32 %v483, 16
      %v556 = vrot.slane %v554, 5
      %v557 = vor.u32 %v553, %v556
      %v558 = vrot.slane %v557, 4
      %v560 = vshll.u32 %v484, 16
      %v562 = vrot.slane %v560, 5
      %v563 = vsel %vm493, %v558, %v562
      %v565 = vshrl.u32 %v485, 16
      %v567 = vrot.slane %v565, 4
      %v568 = vshll.u32 %v485, 16
      %v570 = vrot.slane %v568, 5
      %v571 = vor.u32 %v567, %v570
      %v572 = vrot.slane %v571, 4
      %v574 = vshll.u32 %v486, 16
      %v576 = vrot.slane %v574, 5
      %v577 = vsel %vm493, %v572, %v576
      %v579 = vshrl.u32 %v487, 16
      %v581 = vrot.slane %v579, 4
      %v582 = vshll.u32 %v487, 16
      %v584 = vrot.slane %v582, 5
      %v585 = vor.u32 %v581, %v584
      %v586 = vrot.slane %v585, 4
      %v588 = vshll.u32 %v488, 16
      %v590 = vrot.slane %v588, 5
      %v591 = vsel %vm493, %v586, %v590
      %v593 = vshrl.u32 %v489, 16
      %v595 = vrot.slane %v593, 4
      %v596 = vshll.u32 %v489, 16
      %v598 = vrot.slane %v596, 5
      %v599 = vor.u32 %v595, %v598
      %v600 = vrot.slane %v599, 4
      %v602 = vshll.u32 %v490, 16
      %v604 = vrot.slane %v602, 5
      %v605 = vsel %vm493, %v600, %v604
      %s606 = scalar_lea.vmem %s1, 4
      %v607 = vld [vmem:[%s606] sm:$0x3]
      %v608 = vunpack.c.l.b16 %v507
      %v609 = vunpack.c.l.b16 %v521
      %v610 = vunpack.c.l.b16 %v535
      %v611 = vunpack.c.l.b16 %v549
      %v612 = vunpack.c.l.b16 %v563
      %v613 = vunpack.c.l.b16 %v577
      %v614 = vunpack.c.l.b16 %v591
      %v615 = vunpack.c.l.b16 %v605
      %v616 = vpack.c.b16 %v609, %v608
      %v617 = vpack.c.b16 %v611, %v610
      %v618 = vpack.c.b16 %v613, %v612
      %v619 = vpack.c.b16 %v615, %v614
      %v621 = vsel %vm293, %v616, 0
      %v624 = vsel %vm293, %v617, 0
      %v627 = vsel %vm293, %v618, 0
      %v630 = vsel %vm293, %v619, 0
      %v633 = vsel %vm306, %v607, 0
      %635 = vmatprep.subr.bf16.mxu0 0
      %636 = vmatpush1.bf16.msra.mxu0 %v633
      %637 = vmatprep.subr.bf16.mxu0 0
      %638 = vmatpush1.bf16.msra.mxu0 0
      %639 = vmatprep.subr.bf16.mxu0 0
      %640 = vmatpush1.bf16.msra.mxu0 0
      %641 = vmatprep.subr.bf16.mxu0 0
      %642 = vmatpush1.bf16.msra.mxu0 0
      %643 = vmatprep.subr.bf16.mxu0 0
      %644 = vmatpush1.bf16.msra.mxu0 0
      %645 = vmatprep.subr.bf16.mxu0 0
      %646 = vmatpush1.bf16.msra.mxu0 0
      %647 = vmatprep.subr.bf16.mxu0 0
      %648 = vmatpush1.bf16.msra.mxu0 0
      %649 = vmatprep.subr.bf16.mxu0 0
      %650 = vmatpush1.bf16.msra.mxu0 0
      %651 = vmatprep.subr.bf16.mxu0 0
      %652 = vmatpush1.bf16.msra.mxu0 0
      %653 = vmatprep.subr.bf16.mxu0 0
      %654 = vmatpush1.bf16.msra.mxu0 0
      %655 = vmatprep.subr.bf16.mxu0 0
      %656 = vmatpush1.bf16.msra.mxu0 0
      %657 = vmatprep.subr.bf16.mxu0 0
      %658 = vmatpush1.bf16.msra.mxu0 0
      %659 = vmatprep.subr.bf16.mxu0 0
      %660 = vmatpush1.bf16.msra.mxu0 0
      %661 = vmatprep.subr.bf16.mxu0 0
      %662 = vmatpush1.bf16.msra.mxu0 0
      %663 = vmatprep.subr.bf16.mxu0 0
      %664 = vmatpush1.bf16.msra.mxu0 0
      %665 = vmatprep.subr.bf16.mxu0 0
      %666 = vmatpush1.bf16.msra.mxu0 0
      %667 = vmatprep.mubr.bf16.mxu0 0
      %668 = vmatmul.mubr.bf16.gmra.mrb[0].mxu0 %v621
      %v669 = vpop.f32.mrb[0].mxu0
      %v670 = vadd.f32 0.0, %v669
      %v671 = vpop.f32.mrb[0].mxu0
      %v672 = vpop.f32.mrb[0].mxu0
      %v673 = vadd.f32 0.0, %v672
      %v674 = vpop.f32.mrb[0].mxu0
      %675 = vmatprep.mubr.bf16.mxu0 0
      %676 = vmatmul.mubr.bf16.gmra.mrb[0].mxu0 %v624
      %v677 = vpop.f32.mrb[0].mxu0
      %v678 = vadd.f32 0.0, %v677
      %v679 = vpop.f32.mrb[0].mxu0
      %v680 = vpop.f32.mrb[0].mxu0
      %v681 = vadd.f32 0.0, %v680
      %v682 = vpop.f32.mrb[0].mxu0
      %683 = vmatprep.mubr.bf16.mxu0 0
      %684 = vmatmul.mubr.bf16.gmra.mrb[0].mxu0 %v627
      %v685 = vpop.f32.mrb[0].mxu0
      %v686 = vadd.f32 0.0, %v685
      %v687 = vpop.f32.mrb[0].mxu0
      %v688 = vpop.f32.mrb[0].mxu0
      %v689 = vadd.f32 0.0, %v688
      %v690 = vpop.f32.mrb[0].mxu0
      %691 = vmatprep.mubr.bf16.mxu0 0
      %692 = vmatmul.mubr.bf16.gmra.mrb[0].mxu0 %v630
      %v693 = vpop.f32.mrb[0].mxu0
      %v694 = vadd.f32 0.0, %v693
      %v695 = vpop.f32.mrb[0].mxu0
      %v696 = vpop.f32.mrb[0].mxu0
      %v697 = vadd.f32 0.0, %v696
      %v698 = vpop.f32.mrb[0].mxu0
      %699 = vdwg.mxu0
      %v700 = vadd.f32 %v445, %v670
      %v701 = vadd.f32 %v448, %v673
      %v702 = vadd.f32 %v453, %v678
      %v703 = vadd.f32 %v456, %v681
      %v704 = vadd.f32 %v461, %v686
      %v705 = vadd.f32 %v464, %v689
      %v706 = vadd.f32 %v469, %v694
      %v707 = vadd.f32 %v472, %v697
      %s708 = scalar_lea.vmem %s246, 144
      %v709 = vld [vmem:[%s708] sm:$0xf]
      %v710 = vld [vmem:[%s708 + $0x8] sm:$0xf]
      %v711 = vld [vmem:[%s708 + $0x10] sm:$0xf]
      %v712 = vld [vmem:[%s708 + $0x18] sm:$0xf]
      %v713 = vld [vmem:[%s708 + $0x20] sm:$0xf]
      %v714 = vld [vmem:[%s708 + $0x28] sm:$0xf]
      %v715 = vld [vmem:[%s708 + $0x30] sm:$0xf]
      %v716 = vld [vmem:[%s708 + $0x38] sm:$0xf]
      %s717 = scalar_lea.vmem %s1, 6
      %v718 = vld [vmem:[%s717] sm:$0x3]
      %v727 = vunpack.c.l.b16 %v709
      %v728 = vunpack.c.l.b16 %v710
      %v729 = vunpack.c.l.b16 %v711
      %v730 = vunpack.c.l.b16 %v712
      %v731 = vunpack.c.l.b16 %v713
      %v732 = vunpack.c.l.b16 %v714
      %v733 = vunpack.c.l.b16 %v715
      %v734 = vunpack.c.l.b16 %v716
      %v735 = vpack.c.b16 %v728, %v727
      %v736 = vpack.c.b16 %v730, %v729
      %v737 = vpack.c.b16 %v732, %v731
      %v738 = vpack.c.b16 %v734, %v733
      %v740 = vsel %vm293, %v735, 0
      %v743 = vsel %vm293, %v736, 0
      %v746 = vsel %vm293, %v737, 0
      %v749 = vsel %vm293, %v738, 0
      %v752 = vsel %vm306, %v718, 0
      %754 = vmatprep.subr.bf16.mxu0 0
      %755 = vmatpush1.bf16.msra.mxu0 %v752
      %756 = vmatprep.subr.bf16.mxu0 0
      %757 = vmatpush1.bf16.msra.mxu0 0
      %758 = vmatprep.subr.bf16.mxu0 0
      %759 = vmatpush1.bf16.msra.mxu0 0
      %760 = vmatprep.subr.bf16.mxu0 0
      %761 = vmatpush1.bf16.msra.mxu0 0
      %762 = vmatprep.subr.bf16.mxu0 0
      %763 = vmatpush1.bf16.msra.mxu0 0
      %764 = vmatprep.subr.bf16.mxu0 0
      %765 = vmatpush1.bf16.msra.mxu0 0
      %766 = vmatprep.subr.bf16.mxu0 0
      %767 = vmatpush1.bf16.msra.mxu0 0
      %768 = vmatprep.subr.bf16.mxu0 0
      %769 = vmatpush1.bf16.msra.mxu0 0
      %770 = vmatprep.subr.bf16.mxu0 0
      %771 = vmatpush1.bf16.msra.mxu0 0
      %772 = vmatprep.subr.bf16.mxu0 0
      %773 = vmatpush1.bf16.msra.mxu0 0
      %774 = vmatprep.subr.bf16.mxu0 0
      %775 = vmatpush1.bf16.msra.mxu0 0
      %776 = vmatprep.subr.bf16.mxu0 0
      %777 = vmatpush1.bf16.msra.mxu0 0
      %778 = vmatprep.subr.bf16.mxu0 0
      %779 = vmatpush1.bf16.msra.mxu0 0
      %780 = vmatprep.subr.bf16.mxu0 0
      %781 = vmatpush1.bf16.msra.mxu0 0
      %782 = vmatprep.subr.bf16.mxu0 0
      %783 = vmatpush1.bf16.msra.mxu0 0
      %784 = vmatprep.subr.bf16.mxu0 0
      %785 = vmatpush1.bf16.msra.mxu0 0
      %786 = vmatprep.mubr.bf16.mxu0 0
      %787 = vmatmul.mubr.bf16.gmra.mrb[0].mxu0 %v740
      %v788 = vpop.f32.mrb[0].mxu0
      %v789 = vadd.f32 0.0, %v788
      %v790 = vpop.f32.mrb[0].mxu0
      %v791 = vpop.f32.mrb[0].mxu0
      %v792 = vadd.f32 0.0, %v791
      %v793 = vpop.f32.mrb[0].mxu0
      %794 = vmatprep.mubr.bf16.mxu0 0
      %795 = vmatmul.mubr.bf16.gmra.mrb[0].mxu0 %v743
      %v796 = vpop.f32.mrb[0].mxu0
      %v797 = vadd.f32 0.0, %v796
      %v798 = vpop.f32.mrb[0].mxu0
      %v799 = vpop.f32.mrb[0].mxu0
      %v800 = vadd.f32 0.0, %v799
      %v801 = vpop.f32.mrb[0].mxu0
      %802 = vmatprep.mubr.bf16.mxu0 0
      %803 = vmatmul.mubr.bf16.gmra.mrb[0].mxu0 %v746
      %v804 = vpop.f32.mrb[0].mxu0
      %v805 = vadd.f32 0.0, %v804
      %v806 = vpop.f32.mrb[0].mxu0
      %v807 = vpop.f32.mrb[0].mxu0
      %v808 = vadd.f32 0.0, %v807
      %v809 = vpop.f32.mrb[0].mxu0
      %810 = vmatprep.mubr.bf16.mxu0 0
      %811 = vmatmul.mubr.bf16.gmra.mrb[0].mxu0 %v749
      %v812 = vpop.f32.mrb[0].mxu0
      %v813 = vadd.f32 0.0, %v812
      %v814 = vpop.f32.mrb[0].mxu0
      %v815 = vpop.f32.mrb[0].mxu0
      %v816 = vadd.f32 0.0, %v815
      %v817 = vpop.f32.mrb[0].mxu0
      %818 = vdwg.mxu0
      %v819 = vadd.f32 %v700, %v789
      %v820 = vadd.f32 %v701, %v792
      %v821 = vadd.f32 %v702, %v797
      %v822 = vadd.f32 %v703, %v800
      %v823 = vadd.f32 %v704, %v805
      %v824 = vadd.f32 %v705, %v808
      %v825 = vadd.f32 %v706, %v813
      %v826 = vadd.f32 %v707, %v816
      %s827 = scalar_lea.vmem %s246, 216
      %v828 = vld [vmem:[%s827] sm:$0xf]
      %v829 = vld [vmem:[%s827 + $0x8] sm:$0xf]
      %v830 = vld [vmem:[%s827 + $0x10] sm:$0xf]
      %v831 = vld [vmem:[%s827 + $0x18] sm:$0xf]
      %v832 = vld [vmem:[%s827 + $0x20] sm:$0xf]
      %v833 = vld [vmem:[%s827 + $0x28] sm:$0xf]
      %v834 = vld [vmem:[%s827 + $0x30] sm:$0xf]
      %v835 = vld [vmem:[%s827 + $0x38] sm:$0xf]
      %s836 = scalar_lea.vmem %s1, 8
      %v837 = vld [vmem:[%s836] sm:$0x3]
      %v846 = vunpack.c.l.b16 %v828
      %v847 = vunpack.c.l.b16 %v829
      %v848 = vunpack.c.l.b16 %v830
      %v849 = vunpack.c.l.b16 %v831
      %v850 = vunpack.c.l.b16 %v832
      %v851 = vunpack.c.l.b16 %v833
      %v852 = vunpack.c.l.b16 %v834
      %v853 = vunpack.c.l.b16 %v835
      %v854 = vpack.c.b16 %v847, %v846
      %v855 = vpack.c.b16 %v849, %v848
      %v856 = vpack.c.b16 %v851, %v850
      %v857 = vpack.c.b16 %v853, %v852
      %v859 = vsel %vm293, %v854, 0
      %v862 = vsel %vm293, %v855, 0
      %v865 = vsel %vm293, %v856, 0
      %v868 = vsel %vm293, %v857, 0
      %v871 = vsel %vm306, %v837, 0
      %873 = vmatprep.subr.bf16.mxu0 0
      %874 = vmatpush1.bf16.msra.mxu0 %v871
      %875 = vmatprep.subr.bf16.mxu0 0
      %876 = vmatpush1.bf16.msra.mxu0 0
      %877 = vmatprep.subr.bf16.mxu0 0
      %878 = vmatpush1.bf16.msra.mxu0 0
      %879 = vmatprep.subr.bf16.mxu0 0
      %880 = vmatpush1.bf16.msra.mxu0 0
      %881 = vmatprep.subr.bf16.mxu0 0
      %882 = vmatpush1.bf16.msra.mxu0 0
      %883 = vmatprep.subr.bf16.mxu0 0
      %884 = vmatpush1.bf16.msra.mxu0 0
      %885 = vmatprep.subr.bf16.mxu0 0
      %886 = vmatpush1.bf16.msra.mxu0 0
      %887 = vmatprep.subr.bf16.mxu0 0
      %888 = vmatpush1.bf16.msra.mxu0 0
      %889 = vmatprep.subr.bf16.mxu0 0
      %890 = vmatpush1.bf16.msra.mxu0 0
      %891 = vmatprep.subr.bf16.mxu0 0
      %892 = vmatpush1.bf16.msra.mxu0 0
      %893 = vmatprep.subr.bf16.mxu0 0
      %894 = vmatpush1.bf16.msra.mxu0 0
      %895 = vmatprep.subr.bf16.mxu0 0
      %896 = vmatpush1.bf16.msra.mxu0 0
      %897 = vmatprep.subr.bf16.mxu0 0
      %898 = vmatpush1.bf16.msra.mxu0 0
      %899 = vmatprep.subr.bf16.mxu0 0
      %900 = vmatpush1.bf16.msra.mxu0 0
      %901 = vmatprep.subr.bf16.mxu0 0
      %902 = vmatpush1.bf16.msra.mxu0 0
      %903 = vmatprep.subr.bf16.mxu0 0
      %904 = vmatpush1.bf16.msra.mxu0 0
      %905 = vmatprep.mubr.bf16.mxu0 0
      %906 = vmatmul.mubr.bf16.gmra.mrb[0].mxu0 %v859
      %v907 = vpop.f32.mrb[0].mxu0
      %v908 = vadd.f32 0.0, %v907
      %v909 = vpop.f32.mrb[0].mxu0
      %v910 = vpop.f32.mrb[0].mxu0
      %v911 = vadd.f32 0.0, %v910
      %v912 = vpop.f32.mrb[0].mxu0
      %913 = vmatprep.mubr.bf16.mxu0 0
      %914 = vmatmul.mubr.bf16.gmra.mrb[0].mxu0 %v862
      %v915 = vpop.f32.mrb[0].mxu0
      %v916 = vadd.f32 0.0, %v915
      %v917 = vpop.f32.mrb[0].mxu0
      %v918 = vpop.f32.mrb[0].mxu0
      %v919 = vadd.f32 0.0, %v918
      %v920 = vpop.f32.mrb[0].mxu0
      %921 = vmatprep.mubr.bf16.mxu0 0
      %922 = vmatmul.mubr.bf16.gmra.mrb[0].mxu0 %v865
      %v923 = vpop.f32.mrb[0].mxu0
      %v924 = vadd.f32 0.0, %v923
      %v925 = vpop.f32.mrb[0].mxu0
      %v926 = vpop.f32.mrb[0].mxu0
      %v927 = vadd.f32 0.0, %v926
      %v928 = vpop.f32.mrb[0].mxu0
      %929 = vmatprep.mubr.bf16.mxu0 0
      %930 = vmatmul.mubr.bf16.gmra.mrb[0].mxu0 %v868
      %v931 = vpop.f32.mrb[0].mxu0
      %v932 = vadd.f32 0.0, %v931
      %v933 = vpop.f32.mrb[0].mxu0
      %v934 = vpop.f32.mrb[0].mxu0
      %v935 = vadd.f32 0.0, %v934
      %v936 = vpop.f32.mrb[0].mxu0
      %937 = vdwg.mxu0
      %v938 = vadd.f32 %v819, %v908
      %v939 = vadd.f32 %v820, %v911
      %v940 = vadd.f32 %v821, %v916
      %v941 = vadd.f32 %v822, %v919
      %v942 = vadd.f32 %v823, %v924
      %v943 = vadd.f32 %v824, %v927
      %v944 = vadd.f32 %v825, %v932
      %v945 = vadd.f32 %v826, %v935
      %v946 = vld [vmem:[%s708] sm:$0xf]
      %v947 = vld [vmem:[%s708 + $0x4] sm:$0x1]
      %v948 = vld [vmem:[%s708 + $0x8] sm:$0xf]
      %v949 = vld [vmem:[%s708 + $0xc] sm:$0x1]
      %v950 = vld [vmem:[%s708 + $0x10] sm:$0xf]
      %v951 = vld [vmem:[%s708 + $0x14] sm:$0x1]
      %v952 = vld [vmem:[%s708 + $0x18] sm:$0xf]
      %v953 = vld [vmem:[%s708 + $0x1c] sm:$0x1]
      %v954 = vld [vmem:[%s708 + $0x20] sm:$0xf]
      %v955 = vld [vmem:[%s708 + $0x24] sm:$0x1]
      %v956 = vld [vmem:[%s708 + $0x28] sm:$0xf]
      %v957 = vld [vmem:[%s708 + $0x2c] sm:$0x1]
      %v958 = vld [vmem:[%s708 + $0x30] sm:$0xf]
      %v959 = vld [vmem:[%s708 + $0x34] sm:$0x1]
      %v960 = vld [vmem:[%s708 + $0x38] sm:$0xf]
      %v961 = vld [vmem:[%s708 + $0x3c] sm:$0x1]
      %v963 = vshrl.u32 %v946, 16
      %v965 = vrot.slane %v963, 4
      %v966 = vshll.u32 %v946, 16
      %v968 = vrot.slane %v966, 5
      %v969 = vor.u32 %v965, %v968
      %v970 = vrot.slane %v969, 4
      %v972 = vshll.u32 %v947, 16
      %v974 = vrot.slane %v972, 5
      %v975 = vsel %vm493, %v970, %v974
      %v977 = vshrl.u32 %v948, 16
      %v979 = vrot.slane %v977, 4
      %v980 = vshll.u32 %v948, 16
      %v982 = vrot.slane %v980, 5
      %v983 = vor.u32 %v979, %v982
      %v984 = vrot.slane %v983, 4
      %v986 = vshll.u32 %v949, 16
      %v988 = vrot.slane %v986, 5
      %v989 = vsel %vm493, %v984, %v988
      %v991 = vshrl.u32 %v950, 16
      %v993 = vrot.slane %v991, 4
      %v994 = vshll.u32 %v950, 16
      %v996 = vrot.slane %v994, 5
      %v997 = vor.u32 %v993, %v996
      %v998 = vrot.slane %v997, 4
      %v1000 = vshll.u32 %v951, 16
      %v1002 = vrot.slane %v1000, 5
      %v1003 = vsel %vm493, %v998, %v1002
      %v1005 = vshrl.u32 %v952, 16
      %v1007 = vrot.slane %v1005, 4
      %v1008 = vshll.u32 %v952, 16
      %v1010 = vrot.slane %v1008, 5
      %v1011 = vor.u32 %v1007, %v1010
      %v1012 = vrot.slane %v1011, 4
      %v1014 = vshll.u32 %v953, 16
      %v1016 = vrot.slane %v1014, 5
      %v1017 = vsel %vm493, %v1012, %v1016
      %v1019 = vshrl.u32 %v954, 16
      %v1021 = vrot.slane %v1019, 4
      %v1022 = vshll.u32 %v954, 16
      %v1024 = vrot.slane %v1022, 5
      %v1025 = vor.u32 %v1021, %v1024
      %v1026 = vrot.slane %v1025, 4
      %v1028 = vshll.u32 %v955, 16
      %v1030 = vrot.slane %v1028, 5
      %v1031 = vsel %vm493, %v1026, %v1030
      %v1033 = vshrl.u32 %v956, 16
      %v1035 = vrot.slane %v1033, 4
      %v1036 = vshll.u32 %v956, 16
      %v1038 = vrot.slane %v1036, 5
      %v1039 = vor.u32 %v1035, %v1038
      %v1040 = vrot.slane %v1039, 4
      %v1042 = vshll.u32 %v957, 16
      %v1044 = vrot.slane %v1042, 5
      %v1045 = vsel %vm493, %v1040, %v1044
      %v1047 = vshrl.u32 %v958, 16
      %v1049 = vrot.slane %v1047, 4
      %v1050 = vshll.u32 %v958, 16
      %v1052 = vrot.slane %v1050, 5
      %v1053 = vor.u32 %v1049, %v1052
      %v1054 = vrot.slane %v1053, 4
      %v1056 = vshll.u32 %v959, 16
      %v1058 = vrot.slane %v1056, 5
      %v1059 = vsel %vm493, %v1054, %v1058
      %v1061 = vshrl.u32 %v960, 16
      %v1063 = vrot.slane %v1061, 4
      %v1064 = vshll.u32 %v960, 16
      %v1066 = vrot.slane %v1064, 5
      %v1067 = vor.u32 %v1063, %v1066
      %v1068 = vrot.slane %v1067, 4
      %v1070 = vshll.u32 %v961, 16
      %v1072 = vrot.slane %v1070, 5
      %v1073 = vsel %vm493, %v1068, %v1072
      %s1074 = scalar_lea.vmem %s1, 10
      %v1075 = vld [vmem:[%s1074] sm:$0x3]
      %v1076 = vunpack.c.l.b16 %v975
      %v1077 = vunpack.c.l.b16 %v989
      %v1078 = vunpack.c.l.b16 %v1003
      %v1079 = vunpack.c.l.b16 %v1017
      %v1080 = vunpack.c.l.b16 %v1031
      %v1081 = vunpack.c.l.b16 %v1045
      %v1082 = vunpack.c.l.b16 %v1059
      %v1083 = vunpack.c.l.b16 %v1073
      %v1084 = vpack.c.b16 %v1077, %v1076
      %v1085 = vpack.c.b16 %v1079, %v1078
      %v1086 = vpack.c.b16 %v1081, %v1080
      %v1087 = vpack.c.b16 %v1083, %v1082
      %v1089 = vsel %vm293, %v1084, 0
      %v1092 = vsel %vm293, %v1085, 0
      %v1095 = vsel %vm293, %v1086, 0
      %v1098 = vsel %vm293, %v1087, 0
      %v1101 = vsel %vm306, %v1075, 0
      %1103 = vmatprep.subr.bf16.mxu0 0
      %1104 = vmatpush1.bf16.msra.mxu0 %v1101
      %1105 = vmatprep.subr.bf16.mxu0 0
      %1106 = vmatpush1.bf16.msra.mxu0 0
      %1107 = vmatprep.subr.bf16.mxu0 0
      %1108 = vmatpush1.bf16.msra.mxu0 0
      %1109 = vmatprep.subr.bf16.mxu0 0
      %1110 = vmatpush1.bf16.msra.mxu0 0
      %1111 = vmatprep.subr.bf16.mxu0 0
      %1112 = vmatpush1.bf16.msra.mxu0 0
      %1113 = vmatprep.subr.bf16.mxu0 0
      %1114 = vmatpush1.bf16.msra.mxu0 0
      %1115 = vmatprep.subr.bf16.mxu0 0
      %1116 = vmatpush1.bf16.msra.mxu0 0
      %1117 = vmatprep.subr.bf16.mxu0 0
      %1118 = vmatpush1.bf16.msra.mxu0 0
      %1119 = vmatprep.subr.bf16.mxu0 0
      %1120 = vmatpush1.bf16.msra.mxu0 0
      %1121 = vmatprep.subr.bf16.mxu0 0
      %1122 = vmatpush1.bf16.msra.mxu0 0
      %1123 = vmatprep.subr.bf16.mxu0 0
      %1124 = vmatpush1.bf16.msra.mxu0 0
      %1125 = vmatprep.subr.bf16.mxu0 0
      %1126 = vmatpush1.bf16.msra.mxu0 0
      %1127 = vmatprep.subr.bf16.mxu0 0
      %1128 = vmatpush1.bf16.msra.mxu0 0
      %1129 = vmatprep.subr.bf16.mxu0 0
      %1130 = vmatpush1.bf16.msra.mxu0 0
      %1131 = vmatprep.subr.bf16.mxu0 0
      %1132 = vmatpush1.bf16.msra.mxu0 0
      %1133 = vmatprep.subr.bf16.mxu0 0
      %1134 = vmatpush1.bf16.msra.mxu0 0
      %1135 = vmatprep.mubr.bf16.mxu0 0
      %1136 = vmatmul.mubr.bf16.gmra.mrb[0].mxu0 %v1089
      %v1137 = vpop.f32.mrb[0].mxu0
      %v1138 = vadd.f32 0.0, %v1137
      %v1139 = vpop.f32.mrb[0].mxu0
      %v1140 = vpop.f32.mrb[0].mxu0
      %v1141 = vadd.f32 0.0, %v1140
      %v1142 = vpop.f32.mrb[0].mxu0
      %1143 = vmatprep.mubr.bf16.mxu0 0
      %1144 = vmatmul.mubr.bf16.gmra.mrb[0].mxu0 %v1092
      %v1145 = vpop.f32.mrb[0].mxu0
      %v1146 = vadd.f32 0.0, %v1145
      %v1147 = vpop.f32.mrb[0].mxu0
      %v1148 = vpop.f32.mrb[0].mxu0
      %v1149 = vadd.f32 0.0, %v1148
      %v1150 = vpop.f32.mrb[0].mxu0
      %1151 = vmatprep.mubr.bf16.mxu0 0
      %1152 = vmatmul.mubr.bf16.gmra.mrb[0].mxu0 %v1095
      %v1153 = vpop.f32.mrb[0].mxu0
      %v1154 = vadd.f32 0.0, %v1153
      %v1155 = vpop.f32.mrb[0].mxu0
      %v1156 = vpop.f32.mrb[0].mxu0
      %v1157 = vadd.f32 0.0, %v1156
      %v1158 = vpop.f32.mrb[0].mxu0
      %1159 = vmatprep.mubr.bf16.mxu0 0
      %1160 = vmatmul.mubr.bf16.gmra.mrb[0].mxu0 %v1098
      %v1161 = vpop.f32.mrb[0].mxu0
      %v1162 = vadd.f32 0.0, %v1161
      %v1163 = vpop.f32.mrb[0].mxu0
      %v1164 = vpop.f32.mrb[0].mxu0
      %v1165 = vadd.f32 0.0, %v1164
      %v1166 = vpop.f32.mrb[0].mxu0
      %1167 = vdwg.mxu0
      %v1168 = vadd.f32 %v938, %v1138
      %v1169 = vadd.f32 %v939, %v1141
      %v1170 = vadd.f32 %v940, %v1146
      %v1171 = vadd.f32 %v941, %v1149
      %v1172 = vadd.f32 %v942, %v1154
      %v1173 = vadd.f32 %v943, %v1157
      %v1174 = vadd.f32 %v944, %v1162
      %v1175 = vadd.f32 %v945, %v1165
      %s1176 = scalar_lea.vmem %s246, 8
      %v1177 = vld [vmem:[%s1176] sm:$0xf]
      %v1178 = vld [vmem:[%s1176 + $0x8] sm:$0xf]
      %v1179 = vld [vmem:[%s1176 + $0x10] sm:$0xf]
      %v1180 = vld [vmem:[%s1176 + $0x18] sm:$0xf]
      %v1181 = vld [vmem:[%s1176 + $0x20] sm:$0xf]
      %v1182 = vld [vmem:[%s1176 + $0x28] sm:$0xf]
      %v1183 = vld [vmem:[%s1176 + $0x30] sm:$0xf]
      %v1184 = vld [vmem:[%s1176 + $0x38] sm:$0xf]
      %s1185 = scalar_lea.vmem %s1, 12
      %v1186 = vld [vmem:[%s1185] sm:$0x3]
      %v1195 = vunpack.c.l.b16 %v1177
      %v1196 = vunpack.c.l.b16 %v1178
      %v1197 = vunpack.c.l.b16 %v1179
      %v1198 = vunpack.c.l.b16 %v1180
      %v1199 = vunpack.c.l.b16 %v1181
      %v1200 = vunpack.c.l.b16 %v1182
      %v1201 = vunpack.c.l.b16 %v1183
      %v1202 = vunpack.c.l.b16 %v1184
      %v1203 = vpack.c.b16 %v1196, %v1195
      %v1204 = vpack.c.b16 %v1198, %v1197
      %v1205 = vpack.c.b16 %v1200, %v1199
      %v1206 = vpack.c.b16 %v1202, %v1201
      %v1208 = vsel %vm293, %v1203, 0
      %v1211 = vsel %vm293, %v1204, 0
      %v1214 = vsel %vm293, %v1205, 0
      %v1217 = vsel %vm293, %v1206, 0
      %v1220 = vsel %vm306, %v1186, 0
      %1222 = vmatprep.subr.bf16.mxu0 0
      %1223 = vmatpush1.bf16.msra.mxu0 %v1220
      %1224 = vmatprep.subr.bf16.mxu0 0
      %1225 = vmatpush1.bf16.msra.mxu0 0
      %1226 = vmatprep.subr.bf16.mxu0 0
      %1227 = vmatpush1.bf16.msra.mxu0 0
      %1228 = vmatprep.subr.bf16.mxu0 0
      %1229 = vmatpush1.bf16.msra.mxu0 0
      %1230 = vmatprep.subr.bf16.mxu0 0
      %1231 = vmatpush1.bf16.msra.mxu0 0
      %1232 = vmatprep.subr.bf16.mxu0 0
      %1233 = vmatpush1.bf16.msra.mxu0 0
      %1234 = vmatprep.subr.bf16.mxu0 0
      %1235 = vmatpush1.bf16.msra.mxu0 0
      %1236 = vmatprep.subr.bf16.mxu0 0
      %1237 = vmatpush1.bf16.msra.mxu0 0
      %1238 = vmatprep.subr.bf16.mxu0 0
      %1239 = vmatpush1.bf16.msra.mxu0 0
      %1240 = vmatprep.subr.bf16.mxu0 0
      %1241 = vmatpush1.bf16.msra.mxu0 0
      %1242 = vmatprep.subr.bf16.mxu0 0
      %1243 = vmatpush1.bf16.msra.mxu0 0
      %1244 = vmatprep.subr.bf16.mxu0 0
      %1245 = vmatpush1.bf16.msra.mxu0 0
      %1246 = vmatprep.subr.bf16.mxu0 0
      %1247 = vmatpush1.bf16.msra.mxu0 0
      %1248 = vmatprep.subr.bf16.mxu0 0
      %1249 = vmatpush1.bf16.msra.mxu0 0
      %1250 = vmatprep.subr.bf16.mxu0 0
      %1251 = vmatpush1.bf16.msra.mxu0 0
      %1252 = vmatprep.subr.bf16.mxu0 0
      %1253 = vmatpush1.bf16.msra.mxu0 0
      %1254 = vmatprep.mubr.bf16.mxu0 0
      %1255 = vmatmul.mubr.bf16.gmra.mrb[0].mxu0 %v1208
      %v1256 = vpop.f32.mrb[0].mxu0
      %v1257 = vadd.f32 0.0, %v1256
      %v1258 = vpop.f32.mrb[0].mxu0
      %v1259 = vpop.f32.mrb[0].mxu0
      %v1260 = vadd.f32 0.0, %v1259
      %v1261 = vpop.f32.mrb[0].mxu0
      %1262 = vmatprep.mubr.bf16.mxu0 0
      %1263 = vmatmul.mubr.bf16.gmra.mrb[0].mxu0 %v1211
      %v1264 = vpop.f32.mrb[0].mxu0
      %v1265 = vadd.f32 0.0, %v1264
      %v1266 = vpop.f32.mrb[0].mxu0
      %v1267 = vpop.f32.mrb[0].mxu0
      %v1268 = vadd.f32 0.0, %v1267
      %v1269 = vpop.f32.mrb[0].mxu0
      %1270 = vmatprep.mubr.bf16.mxu0 0
      %1271 = vmatmul.mubr.bf16.gmra.mrb[0].mxu0 %v1214
      %v1272 = vpop.f32.mrb[0].mxu0
      %v1273 = vadd.f32 0.0, %v1272
      %v1274 = vpop.f32.mrb[0].mxu0
      %v1275 = vpop.f32.mrb[0].mxu0
      %v1276 = vadd.f32 0.0, %v1275
      %v1277 = vpop.f32.mrb[0].mxu0
      %1278 = vmatprep.mubr.bf16.mxu0 0
      %1279 = vmatmul.mubr.bf16.gmra.mrb[0].mxu0 %v1217
      %v1280 = vpop.f32.mrb[0].mxu0
      %v1281 = vadd.f32 0.0, %v1280
      %v1282 = vpop.f32.mrb[0].mxu0
      %v1283 = vpop.f32.mrb[0].mxu0
      %v1284 = vadd.f32 0.0, %v1283
      %v1285 = vpop.f32.mrb[0].mxu0
      %1286 = vdwg.mxu0
      %v1287 = vadd.f32 %v1168, %v1257
      %v1288 = vadd.f32 %v1169, %v1260
      %v1289 = vadd.f32 %v1170, %v1265
      %v1290 = vadd.f32 %v1171, %v1268
      %v1291 = vadd.f32 %v1172, %v1273
      %v1292 = vadd.f32 %v1173, %v1276
      %v1293 = vadd.f32 %v1174, %v1281
      %v1294 = vadd.f32 %v1175, %v1284
      %s1295 = scalar_lea.vmem %s246, 80
      %v1296 = vld [vmem:[%s1295] sm:$0xf]
      %v1297 = vld [vmem:[%s1295 + $0x8] sm:$0xf]
      %v1298 = vld [vmem:[%s1295 + $0x10] sm:$0xf]
      %v1299 = vld [vmem:[%s1295 + $0x18] sm:$0xf]
      %v1300 = vld [vmem:[%s1295 + $0x20] sm:$0xf]
      %v1301 = vld [vmem:[%s1295 + $0x28] sm:$0xf]
      %v1302 = vld [vmem:[%s1295 + $0x30] sm:$0xf]
      %v1303 = vld [vmem:[%s1295 + $0x38] sm:$0xf]
      %s1304 = scalar_lea.vmem %s1, 14
      %v1305 = vld [vmem:[%s1304] sm:$0x3]
      %v1314 = vunpack.c.l.b16 %v1296
      %v1315 = vunpack.c.l.b16 %v1297
      %v1316 = vunpack.c.l.b16 %v1298
      %v1317 = vunpack.c.l.b16 %v1299
      %v1318 = vunpack.c.l.b16 %v1300
      %v1319 = vunpack.c.l.b16 %v1301
      %v1320 = vunpack.c.l.b16 %v1302
      %v1321 = vunpack.c.l.b16 %v1303
      %v1322 = vpack.c.b16 %v1315, %v1314
      %v1323 = vpack.c.b16 %v1317, %v1316
      %v1324 = vpack.c.b16 %v1319, %v1318
      %v1325 = vpack.c.b16 %v1321, %v1320
      %v1327 = vsel %vm293, %v1322, 0
      %v1330 = vsel %vm293, %v1323, 0
      %v1333 = vsel %vm293, %v1324, 0
      %v1336 = vsel %vm293, %v1325, 0
      %v1339 = vsel %vm306, %v1305, 0
      %1341 = vmatprep.subr.bf16.mxu0 0
      %1342 = vmatpush1.bf16.msra.mxu0 %v1339
      %1343 = vmatprep.subr.bf16.mxu0 0
      %1344 = vmatpush1.bf16.msra.mxu0 0
      %1345 = vmatprep.subr.bf16.mxu0 0
      %1346 = vmatpush1.bf16.msra.mxu0 0
      %1347 = vmatprep.subr.bf16.mxu0 0
      %1348 = vmatpush1.bf16.msra.mxu0 0
      %1349 = vmatprep.subr.bf16.mxu0 0
      %1350 = vmatpush1.bf16.msra.mxu0 0
      %1351 = vmatprep.subr.bf16.mxu0 0
      %1352 = vmatpush1.bf16.msra.mxu0 0
      %1353 = vmatprep.subr.bf16.mxu0 0
      %1354 = vmatpush1.bf16.msra.mxu0 0
      %1355 = vmatprep.subr.bf16.mxu0 0
      %1356 = vmatpush1.bf16.msra.mxu0 0
      %1357 = vmatprep.subr.bf16.mxu0 0
      %1358 = vmatpush1.bf16.msra.mxu0 0
      %1359 = vmatprep.subr.bf16.mxu0 0
      %1360 = vmatpush1.bf16.msra.mxu0 0
      %1361 = vmatprep.subr.bf16.mxu0 0
      %1362 = vmatpush1.bf16.msra.mxu0 0
      %1363 = vmatprep.subr.bf16.mxu0 0
      %1364 = vmatpush1.bf16.msra.mxu0 0
      %1365 = vmatprep.subr.bf16.mxu0 0
      %1366 = vmatpush1.bf16.msra.mxu0 0
      %1367 = vmatprep.subr.bf16.mxu0 0
      %1368 = vmatpush1.bf16.msra.mxu0 0
      %1369 = vmatprep.subr.bf16.mxu0 0
      %1370 = vmatpush1.bf16.msra.mxu0 0
      %1371 = vmatprep.subr.bf16.mxu0 0
      %1372 = vmatpush1.bf16.msra.mxu0 0
      %1373 = vmatprep.mubr.bf16.mxu0 0
      %1374 = vmatmul.mubr.bf16.gmra.mrb[0].mxu0 %v1327
      %v1375 = vpop.f32.mrb[0].mxu0
      %v1376 = vadd.f32 0.0, %v1375
      %v1377 = vpop.f32.mrb[0].mxu0
      %v1378 = vpop.f32.mrb[0].mxu0
      %v1379 = vadd.f32 0.0, %v1378
      %v1380 = vpop.f32.mrb[0].mxu0
      %1381 = vmatprep.mubr.bf16.mxu0 0
      %1382 = vmatmul.mubr.bf16.gmra.mrb[0].mxu0 %v1330
      %v1383 = vpop.f32.mrb[0].mxu0
      %v1384 = vadd.f32 0.0, %v1383
      %v1385 = vpop.f32.mrb[0].mxu0
      %v1386 = vpop.f32.mrb[0].mxu0
      %v1387 = vadd.f32 0.0, %v1386
      %v1388 = vpop.f32.mrb[0].mxu0
      %1389 = vmatprep.mubr.bf16.mxu0 0
      %1390 = vmatmul.mubr.bf16.gmra.mrb[0].mxu0 %v1333
      %v1391 = vpop.f32.mrb[0].mxu0
      %v1392 = vadd.f32 0.0, %v1391
      %v1393 = vpop.f32.mrb[0].mxu0
      %v1394 = vpop.f32.mrb[0].mxu0
      %v1395 = vadd.f32 0.0, %v1394
      %v1396 = vpop.f32.mrb[0].mxu0
      %1397 = vmatprep.mubr.bf16.mxu0 0
      %1398 = vmatmul.mubr.bf16.gmra.mrb[0].mxu0 %v1336
      %v1399 = vpop.f32.mrb[0].mxu0
      %v1400 = vadd.f32 0.0, %v1399
      %v1401 = vpop.f32.mrb[0].mxu0
      %v1402 = vpop.f32.mrb[0].mxu0
      %v1403 = vadd.f32 0.0, %v1402
      %v1404 = vpop.f32.mrb[0].mxu0
      %1405 = vdwg.mxu0
      %v1406 = vadd.f32 %v1287, %v1376
      %v1407 = vadd.f32 %v1288, %v1379
      %v1408 = vadd.f32 %v1289, %v1384
      %v1409 = vadd.f32 %v1290, %v1387
      %v1410 = vadd.f32 %v1291, %v1392
      %v1411 = vadd.f32 %v1292, %v1395
      %v1412 = vadd.f32 %v1293, %v1400
      %v1413 = vadd.f32 %v1294, %v1403
      %v1414 = vld [vmem:[%s1176] sm:$0xf]
      %v1415 = vld [vmem:[%s1176 + $0x4] sm:$0x1]
      %v1416 = vld [vmem:[%s1176 + $0x8] sm:$0xf]
      %v1417 = vld [vmem:[%s1176 + $0xc] sm:$0x1]
      %v1418 = vld [vmem:[%s1176 + $0x10] sm:$0xf]
      %v1419 = vld [vmem:[%s1176 + $0x14] sm:$0x1]
      %v1420 = vld [vmem:[%s1176 + $0x18] sm:$0xf]
      %v1421 = vld [vmem:[%s1176 + $0x1c] sm:$0x1]
      %v1422 = vld [vmem:[%s1176 + $0x20] sm:$0xf]
      %v1423 = vld [vmem:[%s1176 + $0x24] sm:$0x1]
      %v1424 = vld [vmem:[%s1176 + $0x28] sm:$0xf]
      %v1425 = vld [vmem:[%s1176 + $0x2c] sm:$0x1]
      %v1426 = vld [vmem:[%s1176 + $0x30] sm:$0xf]
      %v1427 = vld [vmem:[%s1176 + $0x34] sm:$0x1]
      %v1428 = vld [vmem:[%s1176 + $0x38] sm:$0xf]
      %v1429 = vld [vmem:[%s1176 + $0x3c] sm:$0x1]
      %v1431 = vshrl.u32 %v1414, 16
      %v1433 = vrot.slane %v1431, 4
      %v1434 = vshll.u32 %v1414, 16
      %v1436 = vrot.slane %v1434, 5
      %v1437 = vor.u32 %v1433, %v1436
      %v1438 = vrot.slane %v1437, 4
      %v1440 = vshll.u32 %v1415, 16
      %v1442 = vrot.slane %v1440, 5
      %v1443 = vsel %vm493, %v1438, %v1442
      %v1445 = vshrl.u32 %v1416, 16
      %v1447 = vrot.slane %v1445, 4
      %v1448 = vshll.u32 %v1416, 16
      %v1450 = vrot.slane %v1448, 5
      %v1451 = vor.u32 %v1447, %v1450
      %v1452 = vrot.slane %v1451, 4
      %v1454 = vshll.u32 %v1417, 16
      %v1456 = vrot.slane %v1454, 5
      %v1457 = vsel %vm493, %v1452, %v1456
      %v1459 = vshrl.u32 %v1418, 16
      %v1461 = vrot.slane %v1459, 4
      %v1462 = vshll.u32 %v1418, 16
      %v1464 = vrot.slane %v1462, 5
      %v1465 = vor.u32 %v1461, %v1464
      %v1466 = vrot.slane %v1465, 4
      %v1468 = vshll.u32 %v1419, 16
      %v1470 = vrot.slane %v1468, 5
      %v1471 = vsel %vm493, %v1466, %v1470
      %v1473 = vshrl.u32 %v1420, 16
      %v1475 = vrot.slane %v1473, 4
      %v1476 = vshll.u32 %v1420, 16
      %v1478 = vrot.slane %v1476, 5
      %v1479 = vor.u32 %v1475, %v1478
      %v1480 = vrot.slane %v1479, 4
      %v1482 = vshll.u32 %v1421, 16
      %v1484 = vrot.slane %v1482, 5
      %v1485 = vsel %vm493, %v1480, %v1484
      %v1487 = vshrl.u32 %v1422, 16
      %v1489 = vrot.slane %v1487, 4
      %v1490 = vshll.u32 %v1422, 16
      %v1492 = vrot.slane %v1490, 5
      %v1493 = vor.u32 %v1489, %v1492
      %v1494 = vrot.slane %v1493, 4
      %v1496 = vshll.u32 %v1423, 16
      %v1498 = vrot.slane %v1496, 5
      %v1499 = vsel %vm493, %v1494, %v1498
      %v1501 = vshrl.u32 %v1424, 16
      %v1503 = vrot.slane %v1501, 4
      %v1504 = vshll.u32 %v1424, 16
      %v1506 = vrot.slane %v1504, 5
      %v1507 = vor.u32 %v1503, %v1506
      %v1508 = vrot.slane %v1507, 4
      %v1510 = vshll.u32 %v1425, 16
      %v1512 = vrot.slane %v1510, 5
      %v1513 = vsel %vm493, %v1508, %v1512
      %v1515 = vshrl.u32 %v1426, 16
      %v1517 = vrot.slane %v1515, 4
      %v1518 = vshll.u32 %v1426, 16
      %v1520 = vrot.slane %v1518, 5
      %v1521 = vor.u32 %v1517, %v1520
      %v1522 = vrot.slane %v1521, 4
      %v1524 = vshll.u32 %v1427, 16
      %v1526 = vrot.slane %v1524, 5
      %v1527 = vsel %vm493, %v1522, %v1526
      %v1529 = vshrl.u32 %v1428, 16
      %v1531 = vrot.slane %v1529, 4
      %v1532 = vshll.u32 %v1428, 16
      %v1534 = vrot.slane %v1532, 5
      %v1535 = vor.u32 %v1531, %v1534
      %v1536 = vrot.slane %v1535, 4
      %v1538 = vshll.u32 %v1429, 16
      %v1540 = vrot.slane %v1538, 5
      %v1541 = vsel %vm493, %v1536, %v1540
      %s1542 = scalar_lea.vmem %s1, 16
      %v1543 = vld [vmem:[%s1542] sm:$0x3]
      %v1544 = vunpack.c.l.b16 %v1443
      %v1545 = vunpack.c.l.b16 %v1457
      %v1546 = vunpack.c.l.b16 %v1471
      %v1547 = vunpack.c.l.b16 %v1485
      %v1548 = vunpack.c.l.b16 %v1499
      %v1549 = vunpack.c.l.b16 %v1513
      %v1550 = vunpack.c.l.b16 %v1527
      %v1551 = vunpack.c.l.b16 %v1541
      %v1552 = vpack.c.b16 %v1545, %v1544
      %v1553 = vpack.c.b16 %v1547, %v1546
      %v1554 = vpack.c.b16 %v1549, %v1548
      %v1555 = vpack.c.b16 %v1551, %v1550
      %v1557 = vsel %vm293, %v1552, 0
      %v1560 = vsel %vm293, %v1553, 0
      %v1563 = vsel %vm293, %v1554, 0
      %v1566 = vsel %vm293, %v1555, 0
      %v1569 = vsel %vm306, %v1543, 0
      %1571 = vmatprep.subr.bf16.mxu0 0
      %1572 = vmatpush1.bf16.msra.mxu0 %v1569
      %1573 = vmatprep.subr.bf16.mxu0 0
      %1574 = vmatpush1.bf16.msra.mxu0 0
      %1575 = vmatprep.subr.bf16.mxu0 0
      %1576 = vmatpush1.bf16.msra.mxu0 0
      %1577 = vmatprep.subr.bf16.mxu0 0
      %1578 = vmatpush1.bf16.msra.mxu0 0
      %1579 = vmatprep.subr.bf16.mxu0 0
      %1580 = vmatpush1.bf16.msra.mxu0 0
      %1581 = vmatprep.subr.bf16.mxu0 0
      %1582 = vmatpush1.bf16.msra.mxu0 0
      %1583 = vmatprep.subr.bf16.mxu0 0
      %1584 = vmatpush1.bf16.msra.mxu0 0
      %1585 = vmatprep.subr.bf16.mxu0 0
      %1586 = vmatpush1.bf16.msra.mxu0 0
      %1587 = vmatprep.subr.bf16.mxu0 0
      %1588 = vmatpush1.bf16.msra.mxu0 0
      %1589 = vmatprep.subr.bf16.mxu0 0
      %1590 = vmatpush1.bf16.msra.mxu0 0
      %1591 = vmatprep.subr.bf16.mxu0 0
      %1592 = vmatpush1.bf16.msra.mxu0 0
      %1593 = vmatprep.subr.bf16.mxu0 0
      %1594 = vmatpush1.bf16.msra.mxu0 0
      %1595 = vmatprep.subr.bf16.mxu0 0
      %1596 = vmatpush1.bf16.msra.mxu0 0
      %1597 = vmatprep.subr.bf16.mxu0 0
      %1598 = vmatpush1.bf16.msra.mxu0 0
      %1599 = vmatprep.subr.bf16.mxu0 0
      %1600 = vmatpush1.bf16.msra.mxu0 0
      %1601 = vmatprep.subr.bf16.mxu0 0
      %1602 = vmatpush1.bf16.msra.mxu0 0
      %1603 = vmatprep.mubr.bf16.mxu0 0
      %1604 = vmatmul.mubr.bf16.gmra.mrb[0].mxu0 %v1557
      %v1605 = vpop.f32.mrb[0].mxu0
      %v1606 = vadd.f32 0.0, %v1605
      %v1607 = vpop.f32.mrb[0].mxu0
      %v1608 = vpop.f32.mrb[0].mxu0
      %v1609 = vadd.f32 0.0, %v1608
      %v1610 = vpop.f32.mrb[0].mxu0
      %1611 = vmatprep.mubr.bf16.mxu0 0
      %1612 = vmatmul.mubr.bf16.gmra.mrb[0].mxu0 %v1560
      %v1613 = vpop.f32.mrb[0].mxu0
      %v1614 = vadd.f32 0.0, %v1613
      %v1615 = vpop.f32.mrb[0].mxu0
      %v1616 = vpop.f32.mrb[0].mxu0
      %v1617 = vadd.f32 0.0, %v1616
      %v1618 = vpop.f32.mrb[0].mxu0
      %1619 = vmatprep.mubr.bf16.mxu0 0
      %1620 = vmatmul.mubr.bf16.gmra.mrb[0].mxu0 %v1563
      %v1621 = vpop.f32.mrb[0].mxu0
      %v1622 = vadd.f32 0.0, %v1621
      %v1623 = vpop.f32.mrb[0].mxu0
      %v1624 = vpop.f32.mrb[0].mxu0
      %v1625 = vadd.f32 0.0, %v1624
      %v1626 = vpop.f32.mrb[0].mxu0
      %1627 = vmatprep.mubr.bf16.mxu0 0
      %1628 = vmatmul.mubr.bf16.gmra.mrb[0].mxu0 %v1566
      %v1629 = vpop.f32.mrb[0].mxu0
      %v1630 = vadd.f32 0.0, %v1629
      %v1631 = vpop.f32.mrb[0].mxu0
      %v1632 = vpop.f32.mrb[0].mxu0
      %v1633 = vadd.f32 0.0, %v1632
      %v1634 = vpop.f32.mrb[0].mxu0
      %1635 = vdwg.mxu0
      %v1636 = vadd.f32 %v1406, %v1606
      %v1637 = vadd.f32 %v1407, %v1609
      %v1638 = vadd.f32 %v1408, %v1614
      %v1639 = vadd.f32 %v1409, %v1617
      %v1640 = vadd.f32 %v1410, %v1622
      %v1641 = vadd.f32 %v1411, %v1625
      %v1642 = vadd.f32 %v1412, %v1630
      %v1643 = vadd.f32 %v1413, %v1633
      %v1644 = vld [vmem:[%s2] sm:$0x1]
      %v1646 = vlaneseq
      %v1647 = vshrl.u32 %v1646, 7
      %v1648 = vsub.s32 0, %v1647
      %v1649 = vrot.slane %v1644, %v1648
      %v1651 = vadd.f32 %v1636, %v1649
      %v1652 = vadd.f32 %v1637, %v1649
      %v1653 = vadd.f32 %v1638, %v1649
      %v1654 = vadd.f32 %v1639, %v1649
      %v1655 = vadd.f32 %v1640, %v1649
      %v1656 = vadd.f32 %v1641, %v1649
      %v1657 = vadd.f32 %v1642, %v1649
      %v1658 = vadd.f32 %v1643, %v1649
      %v1659 = vmax.f32 %v1651, 0.0
      %v1660 = vmax.f32 %v1652, 0.0
      %v1661 = vmax.f32 %v1653, 0.0
      %v1662 = vmax.f32 %v1654, 0.0
      %v1663 = vmax.f32 %v1655, 0.0
      %v1664 = vmax.f32 %v1656, 0.0
      %v1665 = vmax.f32 %v1657, 0.0
      %v1666 = vmax.f32 %v1658, 0.0
      %vm1667 = vcmask 60416
      %1668 = vst.msk [vmem:[#allocation2] sm:$0xf] %vm1667, 0
      %vm1669 = vcmask 57344
      %1670 = vst.msk [vmem:[#allocation2 + $0x4] sm:$0x1] %vm1669, 0
      %1671 = vst.msk [vmem:[#allocation2 + $0x8] sm:$0xf] %vm1667, 0
      %1672 = vst.msk [vmem:[#allocation2 + $0xc] sm:$0x1] %vm1669, 0
      %1673 = vst.msk [vmem:[#allocation2 + $0x10] sm:$0xf] %vm1667, 0
      %1674 = vst.msk [vmem:[#allocation2 + $0x14] sm:$0x1] %vm1669, 0
      %1675 = vst.msk [vmem:[#allocation2 + $0x18] sm:$0xf] %vm1667, 0
      %1676 = vst.msk [vmem:[#allocation2 + $0x1c] sm:$0x1] %vm1669, 0
      %1677 = vst.msk [vmem:[#allocation2 + $0x20] sm:$0xf] %vm1667, 0
      %1678 = vst.msk [vmem:[#allocation2 + $0x24] sm:$0x1] %vm1669, 0
      %1679 = vst.msk [vmem:[#allocation2 + $0x28] sm:$0xf] %vm1667, 0
      %1680 = vst.msk [vmem:[#allocation2 + $0x2c] sm:$0x1] %vm1669, 0
      %1681 = vst.msk [vmem:[#allocation2 + $0x30] sm:$0xf] %vm1667, 0
      %1682 = vst.msk [vmem:[#allocation2 + $0x34] sm:$0x1] %vm1669, 0
      %1683 = vst.msk [vmem:[#allocation2 + $0x38] sm:$0xf] %vm1667, 0
      %1684 = vst.msk [vmem:[#allocation2 + $0x3c] sm:$0x1] %vm1669, 0
      %1685 = vst.msk [vmem:[#allocation2 + $0x40] sm:$0xf] %vm1667, 0
      %1686 = vst.msk [vmem:[#allocation2 + $0x44] sm:$0x1] %vm1669, 0
      %1687 = vst.msk [vmem:[#allocation2 + $0x48] sm:$0xf] %vm1667, 0
      %1688 = vst.msk [vmem:[#allocation2 + $0x4c] sm:$0x1] %vm1669, 0
      %v1689 = vpack.c.bf16 %v1659, %v1659
      %v1690 = vpack.c.bf16 %v1660, %v1660
      %v1691 = vpack.c.bf16 %v1661, %v1661
      %v1692 = vpack.c.bf16 %v1662, %v1662
      %v1693 = vpack.c.bf16 %v1663, %v1663
      %v1694 = vpack.c.bf16 %v1664, %v1664
      %v1695 = vpack.c.bf16 %v1665, %v1665
      %v1696 = vpack.c.bf16 %v1666, %v1666
      %v1705 = vunpack.c.l.b16 %v1689
      %v1706 = vunpack.c.l.b16 %v1690
      %v1707 = vunpack.c.l.b16 %v1691
      %v1708 = vunpack.c.l.b16 %v1692
      %v1709 = vunpack.c.l.b16 %v1693
      %v1710 = vunpack.c.l.b16 %v1694
      %v1711 = vunpack.c.l.b16 %v1695
      %v1712 = vunpack.c.l.b16 %v1696
      %v1713 = vpack.c.b16 %v1705, %v1705
      %v1714 = vpack.c.b16 %v1706, %v1706
      %v1715 = vpack.c.b16 %v1707, %v1707
      %v1716 = vpack.c.b16 %v1708, %v1708
      %v1717 = vpack.c.b16 %v1709, %v1709
      %v1718 = vpack.c.b16 %v1710, %v1710
      %v1719 = vpack.c.b16 %v1711, %v1711
      %v1720 = vpack.c.b16 %v1712, %v1712
      %v1722 = vshrl.u32 %v1713, 16
      %v1724 = vrot.slane %v1722, 7
      %v1725 = vshll.u32 %v1713, 16
      %v1727 = vor.u32 %v1724, %v1725
      %v1728 = vrot.slane %v1724, 4
      %v1730 = vshrl.u32 %v1714, 16
      %v1732 = vrot.slane %v1730, 7
      %v1733 = vshll.u32 %v1714, 16
      %v1735 = vor.u32 %v1732, %v1733
      %v1736 = vrot.slane %v1732, 4
      %v1738 = vshrl.u32 %v1715, 16
      %v1740 = vrot.slane %v1738, 7
      %v1741 = vshll.u32 %v1715, 16
      %v1743 = vor.u32 %v1740, %v1741
      %v1744 = vrot.slane %v1740, 4
      %v1746 = vshrl.u32 %v1716, 16
      %v1748 = vrot.slane %v1746, 7
      %v1749 = vshll.u32 %v1716, 16
      %v1751 = vor.u32 %v1748, %v1749
      %v1752 = vrot.slane %v1748, 4
      %v1754 = vshrl.u32 %v1717, 16
      %v1756 = vrot.slane %v1754, 7
      %v1757 = vshll.u32 %v1717, 16
      %v1759 = vor.u32 %v1756, %v1757
      %v1760 = vrot.slane %v1756, 4
      %v1762 = vshrl.u32 %v1718, 16
      %v1764 = vrot.slane %v1762, 7
      %v1765 = vshll.u32 %v1718, 16
      %v1767 = vor.u32 %v1764, %v1765
      %v1768 = vrot.slane %v1764, 4
      %v1770 = vshrl.u32 %v1719, 16
      %v1772 = vrot.slane %v1770, 7
      %v1773 = vshll.u32 %v1719, 16
      %v1775 = vor.u32 %v1772, %v1773
      %v1776 = vrot.slane %v1772, 4
      %v1778 = vshrl.u32 %v1720, 16
      %v1780 = vrot.slane %v1778, 7
      %v1781 = vshll.u32 %v1720, 16
      %v1783 = vor.u32 %v1780, %v1781
      %v1784 = vrot.slane %v1780, 4
      %s1801 = scalar_lea.vmem [#allocation2], 8
      %vm1802 = vcmask 60416
      %vm1803 = vsmask.f32 7938
      %vm1804 = vmand %vm1802, %vm1803
      %v1805 = vld [vmem:[%s1801] sm:$0xf]
      %v1806 = vsel %vm1804, %v1727, %v1805
      %1807 = vst [vmem:[%s1801] sm:$0xf] %v1806
      %vm1808 = vcmask 57344
      %vm1809 = vsmask.f32 256
      %vm1810 = vmand %vm1808, %vm1809
      %v1811 = vld [vmem:[%s1801 + $0x4] sm:$0x1]
      %v1812 = vsel %vm1810, %v1728, %v1811
      %1813 = vst [vmem:[%s1801 + $0x4] sm:$0x1] %v1812
      %v1814 = vld [vmem:[%s1801 + $0x8] sm:$0xf]
      %v1815 = vsel %vm1804, %v1735, %v1814
      %1816 = vst [vmem:[%s1801 + $0x8] sm:$0xf] %v1815
      %v1817 = vld [vmem:[%s1801 + $0xc] sm:$0x1]
      %v1818 = vsel %vm1810, %v1736, %v1817
      %1819 = vst [vmem:[%s1801 + $0xc] sm:$0x1] %v1818
      %v1820 = vld [vmem:[%s1801 + $0x10] sm:$0xf]
      %v1821 = vsel %vm1804, %v1743, %v1820
      %1822 = vst [vmem:[%s1801 + $0x10] sm:$0xf] %v1821
      %v1823 = vld [vmem:[%s1801 + $0x14] sm:$0x1]
      %v1824 = vsel %vm1810, %v1744, %v1823
      %1825 = vst [vmem:[%s1801 + $0x14] sm:$0x1] %v1824
      %v1826 = vld [vmem:[%s1801 + $0x18] sm:$0xf]
      %v1827 = vsel %vm1804, %v1751, %v1826
      %1828 = vst [vmem:[%s1801 + $0x18] sm:$0xf] %v1827
      %v1829 = vld [vmem:[%s1801 + $0x1c] sm:$0x1]
      %v1830 = vsel %vm1810, %v1752, %v1829
      %1831 = vst [vmem:[%s1801 + $0x1c] sm:$0x1] %v1830
      %v1832 = vld [vmem:[%s1801 + $0x20] sm:$0xf]
      %v1833 = vsel %vm1804, %v1759, %v1832
      %1834 = vst [vmem:[%s1801 + $0x20] sm:$0xf] %v1833
      %v1835 = vld [vmem:[%s1801 + $0x24] sm:$0x1]
      %v1836 = vsel %vm1810, %v1760, %v1835
      %1837 = vst [vmem:[%s1801 + $0x24] sm:$0x1] %v1836
      %v1838 = vld [vmem:[%s1801 + $0x28] sm:$0xf]
      %v1839 = vsel %vm1804, %v1767, %v1838
      %1840 = vst [vmem:[%s1801 + $0x28] sm:$0xf] %v1839
      %v1841 = vld [vmem:[%s1801 + $0x2c] sm:$0x1]
      %v1842 = vsel %vm1810, %v1768, %v1841
      %1843 = vst [vmem:[%s1801 + $0x2c] sm:$0x1] %v1842
      %v1844 = vld [vmem:[%s1801 + $0x30] sm:$0xf]
      %v1845 = vsel %vm1804, %v1775, %v1844
      %1846 = vst [vmem:[%s1801 + $0x30] sm:$0xf] %v1845
      %v1847 = vld [vmem:[%s1801 + $0x34] sm:$0x1]
      %v1848 = vsel %vm1810, %v1776, %v1847
      %1849 = vst [vmem:[%s1801 + $0x34] sm:$0x1] %v1848
      %v1850 = vld [vmem:[%s1801 + $0x38] sm:$0xf]
      %v1851 = vsel %vm1804, %v1783, %v1850
      %1852 = vst [vmem:[%s1801 + $0x38] sm:$0xf] %v1851
      %v1853 = vld [vmem:[%s1801 + $0x3c] sm:$0x1]
      %v1854 = vsel %vm1810, %v1784, %v1853
      %1855 = vst [vmem:[%s1801 + $0x3c] sm:$0x1] %v1854
      %v1856 = vld [vmem:[#allocation2] sm:$0xf]
      %v1857 = vld [vmem:[#allocation2 + $0x8] sm:$0xf]
      %v1858 = vld [vmem:[#allocation2 + $0x10] sm:$0xf]
      %v1859 = vld [vmem:[#allocation2 + $0x18] sm:$0xf]
      %v1860 = vld [vmem:[#allocation2 + $0x20] sm:$0xf]
      %v1861 = vld [vmem:[#allocation2 + $0x28] sm:$0xf]
      %v1862 = vld [vmem:[#allocation2 + $0x30] sm:$0xf]
      %v1863 = vld [vmem:[#allocation2 + $0x38] sm:$0xf]
      %v1864 = vld [vmem:[%s3] sm:$0xf]
      %v1865 = vld [vmem:[#allocation2 + $0x4] sm:$0x1]
      %v1866 = vld [vmem:[#allocation2 + $0xc] sm:$0x1]
      %v1867 = vld [vmem:[#allocation2 + $0x14] sm:$0x1]
      %v1868 = vld [vmem:[#allocation2 + $0x1c] sm:$0x1]
      %v1869 = vld [vmem:[#allocation2 + $0x24] sm:$0x1]
      %v1870 = vld [vmem:[#allocation2 + $0x2c] sm:$0x1]
      %v1871 = vld [vmem:[#allocation2 + $0x34] sm:$0x1]
      %v1872 = vld [vmem:[#allocation2 + $0x3c] sm:$0x1]
      %v1874 = vshrl.u32 %v1856, 16
      %v1876 = vrot.slane %v1874, 4
      %v1877 = vshll.u32 %v1856, 16
      %v1879 = vrot.slane %v1877, 5
      %v1880 = vor.u32 %v1876, %v1879
      %v1881 = vrot.slane %v1880, 4
      %v1883 = vshll.u32 %v1865, 16
      %v1885 = vrot.slane %v1883, 5
      %v1886 = vsel %vm493, %v1881, %v1885
      %v1888 = vshrl.u32 %v1857, 16
      %v1890 = vrot.slane %v1888, 4
      %v1891 = vshll.u32 %v1857, 16
      %v1893 = vrot.slane %v1891, 5
      %v1894 = vor.u32 %v1890, %v1893
      %v1895 = vrot.slane %v1894, 4
      %v1897 = vshll.u32 %v1866, 16
      %v1899 = vrot.slane %v1897, 5
      %v1900 = vsel %vm493, %v1895, %v1899
      %v1902 = vshrl.u32 %v1858, 16
      %v1904 = vrot.slane %v1902, 4
      %v1905 = vshll.u32 %v1858, 16
      %v1907 = vrot.slane %v1905, 5
      %v1908 = vor.u32 %v1904, %v1907
      %v1909 = vrot.slane %v1908, 4
      %v1911 = vshll.u32 %v1867, 16
      %v1913 = vrot.slane %v1911, 5
      %v1914 = vsel %vm493, %v1909, %v1913
      %v1916 = vshrl.u32 %v1859, 16
      %v1918 = vrot.slane %v1916, 4
      %v1919 = vshll.u32 %v1859, 16
      %v1921 = vrot.slane %v1919, 5
      %v1922 = vor.u32 %v1918, %v1921
      %v1923 = vrot.slane %v1922, 4
      %v1925 = vshll.u32 %v1868, 16
      %v1927 = vrot.slane %v1925, 5
      %v1928 = vsel %vm493, %v1923, %v1927
      %v1930 = vshrl.u32 %v1860, 16
      %v1932 = vrot.slane %v1930, 4
      %v1933 = vshll.u32 %v1860, 16
      %v1935 = vrot.slane %v1933, 5
      %v1936 = vor.u32 %v1932, %v1935
      %v1937 = vrot.slane %v1936, 4
      %v1939 = vshll.u32 %v1869, 16
      %v1941 = vrot.slane %v1939, 5
      %v1942 = vsel %vm493, %v1937, %v1941
      %v1944 = vshrl.u32 %v1861, 16
      %v1946 = vrot.slane %v1944, 4
      %v1947 = vshll.u32 %v1861, 16
      %v1949 = vrot.slane %v1947, 5
      %v1950 = vor.u32 %v1946, %v1949
      %v1951 = vrot.slane %v1950, 4
      %v1953 = vshll.u32 %v1870, 16
      %v1955 = vrot.slane %v1953, 5
      %v1956 = vsel %vm493, %v1951, %v1955
      %v1958 = vshrl.u32 %v1862, 16
      %v1960 = vrot.slane %v1958, 4
      %v1961 = vshll.u32 %v1862, 16
      %v1963 = vrot.slane %v1961, 5
      %v1964 = vor.u32 %v1960, %v1963
      %v1965 = vrot.slane %v1964, 4
      %v1967 = vshll.u32 %v1871, 16
      %v1969 = vrot.slane %v1967, 5
      %v1970 = vsel %vm493, %v1965, %v1969
      %v1972 = vshrl.u32 %v1863, 16
      %v1974 = vrot.slane %v1972, 4
      %v1975 = vshll.u32 %v1863, 16
      %v1977 = vrot.slane %v1975, 5
      %v1978 = vor.u32 %v1974, %v1977
      %v1979 = vrot.slane %v1978, 4
      %v1981 = vshll.u32 %v1872, 16
      %v1983 = vrot.slane %v1981, 5
      %v1984 = vsel %vm493, %v1979, %v1983
      %s1985 = scalar_lea.vmem %s3, 4
      %v1986 = vld [vmem:[%s1985] sm:$0xf]
      %v1987 = vunpack.c.l.b16 %v1886
      %v1988 = vunpack.c.l.b16 %v1900
      %v1989 = vunpack.c.l.b16 %v1914
      %v1990 = vunpack.c.l.b16 %v1928
      %v1991 = vunpack.c.l.b16 %v1942
      %v1992 = vunpack.c.l.b16 %v1956
      %v1993 = vunpack.c.l.b16 %v1970
      %v1994 = vunpack.c.l.b16 %v1984
      %v1995 = vpack.c.b16 %v1988, %v1987
      %v1996 = vpack.c.b16 %v1990, %v1989
      %v1997 = vpack.c.b16 %v1992, %v1991
      %v1998 = vpack.c.b16 %v1994, %v1993
      %vm1999 = vcmask 64512
      %v2001 = vsel %vm1999, %v1995, 0
      %v2004 = vsel %vm1999, %v1996, 0
      %v2007 = vsel %vm1999, %v1997, 0
      %v2010 = vsel %vm1999, %v1998, 0
      %vm2012 = vcmask 1043456
      %v2014 = vsel %vm2012, %v1986, 0
      %2016 = vmatprep.subr.bf16.mxu0 0
      %2017 = vmatpush1.bf16.msra.mxu0 %v2014
      %2018 = vmatprep.subr.bf16.mxu0 0
      %2019 = vmatpush1.bf16.msra.mxu0 0
      %2020 = vmatprep.subr.bf16.mxu0 0
      %2021 = vmatpush1.bf16.msra.mxu0 0
      %2022 = vmatprep.subr.bf16.mxu0 0
      %2023 = vmatpush1.bf16.msra.mxu0 0
      %2024 = vmatprep.subr.bf16.mxu0 0
      %2025 = vmatpush1.bf16.msra.mxu0 0
      %2026 = vmatprep.subr.bf16.mxu0 0
      %2027 = vmatpush1.bf16.msra.mxu0 0
      %2028 = vmatprep.subr.bf16.mxu0 0
      %2029 = vmatpush1.bf16.msra.mxu0 0
      %2030 = vmatprep.subr.bf16.mxu0 0
      %2031 = vmatpush1.bf16.msra.mxu0 0
      %2032 = vmatprep.subr.bf16.mxu0 0
      %2033 = vmatpush1.bf16.msra.mxu0 0
      %2034 = vmatprep.subr.bf16.mxu0 0
      %2035 = vmatpush1.bf16.msra.mxu0 0
      %2036 = vmatprep.subr.bf16.mxu0 0
      %2037 = vmatpush1.bf16.msra.mxu0 0
      %2038 = vmatprep.subr.bf16.mxu0 0
      %2039 = vmatpush1.bf16.msra.mxu0 0
      %2040 = vmatprep.subr.bf16.mxu0 0
      %2041 = vmatpush1.bf16.msra.mxu0 0
      %2042 = vmatprep.subr.bf16.mxu0 0
      %2043 = vmatpush1.bf16.msra.mxu0 0
      %2044 = vmatprep.subr.bf16.mxu0 0
      %2045 = vmatpush1.bf16.msra.mxu0 0
      %2046 = vmatprep.subr.bf16.mxu0 0
      %2047 = vmatpush1.bf16.msra.mxu0 0
      %2048 = vmatprep.mubr.bf16.mxu0 0
      %2049 = vmatmul.mubr.bf16.gmra.mrb[0].mxu0 %v2001
      %v2050 = vpop.f32.mrb[0].mxu0
      %v2051 = vadd.f32 0.0, %v2050
      %v2052 = vpop.f32.mrb[0].mxu0
      %v2053 = vpop.f32.mrb[0].mxu0
      %v2054 = vadd.f32 0.0, %v2053
      %v2055 = vpop.f32.mrb[0].mxu0
      %2056 = vmatprep.mubr.bf16.mxu0 0
      %2057 = vmatmul.mubr.bf16.gmra.mrb[0].mxu0 %v2004
      %v2058 = vpop.f32.mrb[0].mxu0
      %v2059 = vadd.f32 0.0, %v2058
      %v2060 = vpop.f32.mrb[0].mxu0
      %v2061 = vpop.f32.mrb[0].mxu0
      %v2062 = vadd.f32 0.0, %v2061
      %v2063 = vpop.f32.mrb[0].mxu0
      %2064 = vmatprep.mubr.bf16.mxu0 0
      %2065 = vmatmul.mubr.bf16.gmra.mrb[0].mxu0 %v2007
      %v2066 = vpop.f32.mrb[0].mxu0
      %v2067 = vadd.f32 0.0, %v2066
      %v2068 = vpop.f32.mrb[0].mxu0
      %v2069 = vpop.f32.mrb[0].mxu0
      %v2070 = vadd.f32 0.0, %v2069
      %v2071 = vpop.f32.mrb[0].mxu0
      %2072 = vmatprep.mubr.bf16.mxu0 0
      %2073 = vmatmul.mubr.bf16.gmra.mrb[0].mxu0 %v2010
      %v2074 = vpop.f32.mrb[0].mxu0
      %v2075 = vadd.f32 0.0, %v2074
      %v2076 = vpop.f32.mrb[0].mxu0
      %v2077 = vpop.f32.mrb[0].mxu0
      %v2078 = vadd.f32 0.0, %v2077
      %v2079 = vpop.f32.mrb[0].mxu0
      %2080 = vdwg.mxu0
      %v2089 = vunpack.c.l.b16 %v1856
      %v2090 = vunpack.c.l.b16 %v1857
      %v2091 = vunpack.c.l.b16 %v1858
      %v2092 = vunpack.c.l.b16 %v1859
      %v2093 = vunpack.c.l.b16 %v1860
      %v2094 = vunpack.c.l.b16 %v1861
      %v2095 = vunpack.c.l.b16 %v1862
      %v2096 = vunpack.c.l.b16 %v1863
      %v2097 = vpack.c.b16 %v2090, %v2089
      %v2098 = vpack.c.b16 %v2092, %v2091
      %v2099 = vpack.c.b16 %v2094, %v2093
      %v2100 = vpack.c.b16 %v2096, %v2095
      %v2102 = vsel %vm1999, %v2097, 0
      %v2105 = vsel %vm1999, %v2098, 0
      %v2108 = vsel %vm1999, %v2099, 0
      %v2111 = vsel %vm1999, %v2100, 0
      %v2114 = vsel %vm2012, %v1864, 0
      %2116 = vmatprep.subr.bf16.mxu0 0
      %2117 = vmatpush1.bf16.msra.mxu0 %v2114
      %2118 = vmatprep.subr.bf16.mxu0 0
      %2119 = vmatpush1.bf16.msra.mxu0 0
      %2120 = vmatprep.subr.bf16.mxu0 0
      %2121 = vmatpush1.bf16.msra.mxu0 0
      %2122 = vmatprep.subr.bf16.mxu0 0
      %2123 = vmatpush1.bf16.msra.mxu0 0
      %2124 = vmatprep.subr.bf16.mxu0 0
      %2125 = vmatpush1.bf16.msra.mxu0 0
      %2126 = vmatprep.subr.bf16.mxu0 0
      %2127 = vmatpush1.bf16.msra.mxu0 0
      %2128 = vmatprep.subr.bf16.mxu0 0
      %2129 = vmatpush1.bf16.msra.mxu0 0
      %2130 = vmatprep.subr.bf16.mxu0 0
      %2131 = vmatpush1.bf16.msra.mxu0 0
      %2132 = vmatprep.subr.bf16.mxu0 0
      %2133 = vmatpush1.bf16.msra.mxu0 0
      %2134 = vmatprep.subr.bf16.mxu0 0
      %2135 = vmatpush1.bf16.msra.mxu0 0
      %2136 = vmatprep.subr.bf16.mxu0 0
      %2137 = vmatpush1.bf16.msra.mxu0 0
      %2138 = vmatprep.subr.bf16.mxu0 0
      %2139 = vmatpush1.bf16.msra.mxu0 0
      %2140 = vmatprep.subr.bf16.mxu0 0
      %2141 = vmatpush1.bf16.msra.mxu0 0
      %2142 = vmatprep.subr.bf16.mxu0 0
      %2143 = vmatpush1.bf16.msra.mxu0 0
      %2144 = vmatprep.subr.bf16.mxu0 0
      %2145 = vmatpush1.bf16.msra.mxu0 0
      %2146 = vmatprep.subr.bf16.mxu0 0
      %2147 = vmatpush1.bf16.msra.mxu0 0
      %2148 = vmatprep.mubr.bf16.mxu0 0
      %2149 = vmatmul.mubr.bf16.gmra.mrb[0].mxu0 %v2102
      %v2150 = vpop.f32.mrb[0].mxu0
      %v2151 = vadd.f32 %v2051, %v2150
      %v2152 = vpop.f32.mrb[0].mxu0
      %v2153 = vpop.f32.mrb[0].mxu0
      %v2154 = vadd.f32 %v2054, %v2153
      %v2155 = vpop.f32.mrb[0].mxu0
      %2156 = vmatprep.mubr.bf16.mxu0 0
      %2157 = vmatmul.mubr.bf16.gmra.mrb[0].mxu0 %v2105
      %v2158 = vpop.f32.mrb[0].mxu0
      %v2159 = vadd.f32 %v2059, %v2158
      %v2160 = vpop.f32.mrb[0].mxu0
      %v2161 = vpop.f32.mrb[0].mxu0
      %v2162 = vadd.f32 %v2062, %v2161
      %v2163 = vpop.f32.mrb[0].mxu0
      %2164 = vmatprep.mubr.bf16.mxu0 0
      %2165 = vmatmul.mubr.bf16.gmra.mrb[0].mxu0 %v2108
      %v2166 = vpop.f32.mrb[0].mxu0
      %v2167 = vadd.f32 %v2067, %v2166
      %v2168 = vpop.f32.mrb[0].mxu0
      %v2169 = vpop.f32.mrb[0].mxu0
      %v2170 = vadd.f32 %v2070, %v2169
      %v2171 = vpop.f32.mrb[0].mxu0
      %2172 = vmatprep.mubr.bf16.mxu0 0
      %2173 = vmatmul.mubr.bf16.gmra.mrb[0].mxu0 %v2111
      %v2174 = vpop.f32.mrb[0].mxu0
      %v2175 = vadd.f32 %v2075, %v2174
      %v2176 = vpop.f32.mrb[0].mxu0
      %v2177 = vpop.f32.mrb[0].mxu0
      %v2178 = vadd.f32 %v2078, %v2177
      %v2179 = vpop.f32.mrb[0].mxu0
      %2180 = vdwg.mxu0
      %v2181 = vld [vmem:[#allocation2] sm:$0xe]
      %v2182 = vld [vmem:[#allocation2 + $0x8] sm:$0xe]
      %v2183 = vld [vmem:[#allocation2 + $0x10] sm:$0xe]
      %v2184 = vld [vmem:[#allocation2 + $0x18] sm:$0xe]
      %v2185 = vld [vmem:[#allocation2 + $0x20] sm:$0xe]
      %v2186 = vld [vmem:[#allocation2 + $0x28] sm:$0xe]
      %v2187 = vld [vmem:[#allocation2 + $0x30] sm:$0xe]
      %v2188 = vld [vmem:[#allocation2 + $0x38] sm:$0xe]
      %vm2205 = vcmask 1042432
      %vm2206 = vcmask 1046532
      %vm2207 = vmor %vm2205, %vm2206
      %v2208 = vrot.slane %v2181, 5
      %v2209 = vrot.slane %v2208, 4
      %v2210 = vrot.slane %v1865, 5
      %v2211 = vsel %vm2207, %v2209, %v2210
      %v2212 = vrot.slane %v2182, 5
      %v2213 = vrot.slane %v2212, 4
      %v2214 = vrot.slane %v1866, 5
      %v2215 = vsel %vm2207, %v2213, %v2214
      %v2216 = vrot.slane %v2183, 5
      %v2217 = vrot.slane %v2216, 4
      %v2218 = vrot.slane %v1867, 5
      %v2219 = vsel %vm2207, %v2217, %v2218
      %v2220 = vrot.slane %v2184, 5
      %v2221 = vrot.slane %v2220, 4
      %v2222 = vrot.slane %v1868, 5
      %v2223 = vsel %vm2207, %v2221, %v2222
      %v2224 = vrot.slane %v2185, 5
      %v2225 = vrot.slane %v2224, 4
      %v2226 = vrot.slane %v1869, 5
      %v2227 = vsel %vm2207, %v2225, %v2226
      %v2228 = vrot.slane %v2186, 5
      %v2229 = vrot.slane %v2228, 4
      %v2230 = vrot.slane %v1870, 5
      %v2231 = vsel %vm2207, %v2229, %v2230
      %v2232 = vrot.slane %v2187, 5
      %v2233 = vrot.slane %v2232, 4
      %v2234 = vrot.slane %v1871, 5
      %v2235 = vsel %vm2207, %v2233, %v2234
      %v2236 = vrot.slane %v2188, 5
      %v2237 = vrot.slane %v2236, 4
      %v2238 = vrot.slane %v1872, 5
      %v2239 = vsel %vm2207, %v2237, %v2238
      %s2240 = scalar_lea.vmem %s3, 8
      %v2241 = vld [vmem:[%s2240] sm:$0xf]
      %v2242 = vunpack.c.l.b16 %v2211
      %v2243 = vunpack.c.l.b16 %v2215
      %v2244 = vunpack.c.l.b16 %v2219
      %v2245 = vunpack.c.l.b16 %v2223
      %v2246 = vunpack.c.l.b16 %v2227
      %v2247 = vunpack.c.l.b16 %v2231
      %v2248 = vunpack.c.l.b16 %v2235
      %v2249 = vunpack.c.l.b16 %v2239
      %v2250 = vpack.c.b16 %v2243, %v2242
      %v2251 = vpack.c.b16 %v2245, %v2244
      %v2252 = vpack.c.b16 %v2247, %v2246
      %v2253 = vpack.c.b16 %v2249, %v2248
      %v2255 = vsel %vm1999, %v2250, 0
      %v2258 = vsel %vm1999, %v2251, 0
      %v2261 = vsel %vm1999, %v2252, 0
      %v2264 = vsel %vm1999, %v2253, 0
      %v2267 = vsel %vm2012, %v2241, 0
      %2269 = vmatprep.subr.bf16.mxu0 0
      %2270 = vmatpush1.bf16.msra.mxu0 %v2267
      %2271 = vmatprep.subr.bf16.mxu0 0
      %2272 = vmatpush1.bf16.msra.mxu0 0
      %2273 = vmatprep.subr.bf16.mxu0 0
      %2274 = vmatpush1.bf16.msra.mxu0 0
      %2275 = vmatprep.subr.bf16.mxu0 0
      %2276 = vmatpush1.bf16.msra.mxu0 0
      %2277 = vmatprep.subr.bf16.mxu0 0
      %2278 = vmatpush1.bf16.msra.mxu0 0
      %2279 = vmatprep.subr.bf16.mxu0 0
      %2280 = vmatpush1.bf16.msra.mxu0 0
      %2281 = vmatprep.subr.bf16.mxu0 0
      %2282 = vmatpush1.bf16.msra.mxu0 0
      %2283 = vmatprep.subr.bf16.mxu0 0
      %2284 = vmatpush1.bf16.msra.mxu0 0
      %2285 = vmatprep.subr.bf16.mxu0 0
      %2286 = vmatpush1.bf16.msra.mxu0 0
      %2287 = vmatprep.subr.bf16.mxu0 0
      %2288 = vmatpush1.bf16.msra.mxu0 0
      %2289 = vmatprep.subr.bf16.mxu0 0
      %2290 = vmatpush1.bf16.msra.mxu0 0
      %2291 = vmatprep.subr.bf16.mxu0 0
      %2292 = vmatpush1.bf16.msra.mxu0 0
      %2293 = vmatprep.subr.bf16.mxu0 0
      %2294 = vmatpush1.bf16.msra.mxu0 0
      %2295 = vmatprep.subr.bf16.mxu0 0
      %2296 = vmatpush1.bf16.msra.mxu0 0
      %2297 = vmatprep.subr.bf16.mxu0 0
      %2298 = vmatpush1.bf16.msra.mxu0 0
      %2299 = vmatprep.subr.bf16.mxu0 0
      %2300 = vmatpush1.bf16.msra.mxu0 0
      %2301 = vmatprep.mubr.bf16.mxu0 0
      %2302 = vmatmul.mubr.bf16.gmra.mrb[0].mxu0 %v2255
      %v2303 = vpop.f32.mrb[0].mxu0
      %v2304 = vadd.f32 0.0, %v2303
      %v2305 = vpop.f32.mrb[0].mxu0
      %v2306 = vpop.f32.mrb[0].mxu0
      %v2307 = vadd.f32 0.0, %v2306
      %v2308 = vpop.f32.mrb[0].mxu0
      %2309 = vmatprep.mubr.bf16.mxu0 0
      %2310 = vmatmul.mubr.bf16.gmra.mrb[0].mxu0 %v2258
      %v2311 = vpop.f32.mrb[0].mxu0
      %v2312 = vadd.f32 0.0, %v2311
      %v2313 = vpop.f32.mrb[0].mxu0
      %v2314 = vpop.f32.mrb[0].mxu0
      %v2315 = vadd.f32 0.0, %v2314
      %v2316 = vpop.f32.mrb[0].mxu0
      %2317 = vmatprep.mubr.bf16.mxu0 0
      %2318 = vmatmul.mubr.bf16.gmra.mrb[0].mxu0 %v2261
      %v2319 = vpop.f32.mrb[0].mxu0
      %v2320 = vadd.f32 0.0, %v2319
      %v2321 = vpop.f32.mrb[0].mxu0
      %v2322 = vpop.f32.mrb[0].mxu0
      %v2323 = vadd.f32 0.0, %v2322
      %v2324 = vpop.f32.mrb[0].mxu0
      %2325 = vmatprep.mubr.bf16.mxu0 0
      %2326 = vmatmul.mubr.bf16.gmra.mrb[0].mxu0 %v2264
      %v2327 = vpop.f32.mrb[0].mxu0
      %v2328 = vadd.f32 0.0, %v2327
      %v2329 = vpop.f32.mrb[0].mxu0
      %v2330 = vpop.f32.mrb[0].mxu0
      %v2331 = vadd.f32 0.0, %v2330
      %v2332 = vpop.f32.mrb[0].mxu0
      %2333 = vdwg.mxu0
      %v2334 = vadd.f32 %v2151, %v2304
      %v2335 = vadd.f32 %v2154, %v2307
      %v2336 = vadd.f32 %v2159, %v2312
      %v2337 = vadd.f32 %v2162, %v2315
      %v2338 = vadd.f32 %v2167, %v2320
      %v2339 = vadd.f32 %v2170, %v2323
      %v2340 = vadd.f32 %v2175, %v2328
      %v2341 = vadd.f32 %v2178, %v2331
      %v2342 = vld [vmem:[%s1801] sm:$0xf]
      %v2343 = vld [vmem:[%s1801 + $0x8] sm:$0xf]
      %v2344 = vld [vmem:[%s1801 + $0x10] sm:$0xf]
      %v2345 = vld [vmem:[%s1801 + $0x18] sm:$0xf]
      %v2346 = vld [vmem:[%s1801 + $0x20] sm:$0xf]
      %v2347 = vld [vmem:[%s1801 + $0x28] sm:$0xf]
      %v2348 = vld [vmem:[%s1801 + $0x30] sm:$0xf]
      %v2349 = vld [vmem:[%s1801 + $0x38] sm:$0xf]
      %s2350 = scalar_lea.vmem %s3, 12
      %v2351 = vld [vmem:[%s2350] sm:$0xf]
      %v2360 = vunpack.c.l.b16 %v2342
      %v2361 = vunpack.c.l.b16 %v2343
      %v2362 = vunpack.c.l.b16 %v2344
      %v2363 = vunpack.c.l.b16 %v2345
      %v2364 = vunpack.c.l.b16 %v2346
      %v2365 = vunpack.c.l.b16 %v2347
      %v2366 = vunpack.c.l.b16 %v2348
      %v2367 = vunpack.c.l.b16 %v2349
      %v2368 = vpack.c.b16 %v2361, %v2360
      %v2369 = vpack.c.b16 %v2363, %v2362
      %v2370 = vpack.c.b16 %v2365, %v2364
      %v2371 = vpack.c.b16 %v2367, %v2366
      %v2373 = vsel %vm1999, %v2368, 0
      %v2376 = vsel %vm1999, %v2369, 0
      %v2379 = vsel %vm1999, %v2370, 0
      %v2382 = vsel %vm1999, %v2371, 0
      %v2385 = vsel %vm2012, %v2351, 0
      %2387 = vmatprep.subr.bf16.mxu0 0
      %2388 = vmatpush1.bf16.msra.mxu0 %v2385
      %2389 = vmatprep.subr.bf16.mxu0 0
      %2390 = vmatpush1.bf16.msra.mxu0 0
      %2391 = vmatprep.subr.bf16.mxu0 0
      %2392 = vmatpush1.bf16.msra.mxu0 0
      %2393 = vmatprep.subr.bf16.mxu0 0
      %2394 = vmatpush1.bf16.msra.mxu0 0
      %2395 = vmatprep.subr.bf16.mxu0 0
      %2396 = vmatpush1.bf16.msra.mxu0 0
      %2397 = vmatprep.subr.bf16.mxu0 0
      %2398 = vmatpush1.bf16.msra.mxu0 0
      %2399 = vmatprep.subr.bf16.mxu0 0
      %2400 = vmatpush1.bf16.msra.mxu0 0
      %2401 = vmatprep.subr.bf16.mxu0 0
      %2402 = vmatpush1.bf16.msra.mxu0 0
      %2403 = vmatprep.subr.bf16.mxu0 0
      %2404 = vmatpush1.bf16.msra.mxu0 0
      %2405 = vmatprep.subr.bf16.mxu0 0
      %2406 = vmatpush1.bf16.msra.mxu0 0
      %2407 = vmatprep.subr.bf16.mxu0 0
      %2408 = vmatpush1.bf16.msra.mxu0 0
      %2409 = vmatprep.subr.bf16.mxu0 0
      %2410 = vmatpush1.bf16.msra.mxu0 0
      %2411 = vmatprep.subr.bf16.mxu0 0
      %2412 = vmatpush1.bf16.msra.mxu0 0
      %2413 = vmatprep.subr.bf16.mxu0 0
      %2414 = vmatpush1.bf16.msra.mxu0 0
      %2415 = vmatprep.subr.bf16.mxu0 0
      %2416 = vmatpush1.bf16.msra.mxu0 0
      %2417 = vmatprep.subr.bf16.mxu0 0
      %2418 = vmatpush1.bf16.msra.mxu0 0
      %2419 = vmatprep.mubr.bf16.mxu0 0
      %2420 = vmatmul.mubr.bf16.gmra.mrb[0].mxu0 %v2373
      %v2421 = vpop.f32.mrb[0].mxu0
      %v2422 = vadd.f32 0.0, %v2421
      %v2423 = vpop.f32.mrb[0].mxu0
      %v2424 = vpop.f32.mrb[0].mxu0
      %v2425 = vadd.f32 0.0, %v2424
      %v2426 = vpop.f32.mrb[0].mxu0
      %2427 = vmatprep.mubr.bf16.mxu0 0
      %2428 = vmatmul.mubr.bf16.gmra.mrb[0].mxu0 %v2376
      %v2429 = vpop.f32.mrb[0].mxu0
      %v2430 = vadd.f32 0.0, %v2429
      %v2431 = vpop.f32.mrb[0].mxu0
      %v2432 = vpop.f32.mrb[0].mxu0
      %v2433 = vadd.f32 0.0, %v2432
      %v2434 = vpop.f32.mrb[0].mxu0
      %2435 = vmatprep.mubr.bf16.mxu0 0
      %2436 = vmatmul.mubr.bf16.gmra.mrb[0].mxu0 %v2379
      %v2437 = vpop.f32.mrb[0].mxu0
      %v2438 = vadd.f32 0.0, %v2437
      %v2439 = vpop.f32.mrb[0].mxu0
      %v2440 = vpop.f32.mrb[0].mxu0
      %v2441 = vadd.f32 0.0, %v2440
      %v2442 = vpop.f32.mrb[0].mxu0
      %2443 = vmatprep.mubr.bf16.mxu0 0
      %2444 = vmatmul.mubr.bf16.gmra.mrb[0].mxu0 %v2382
      %v2445 = vpop.f32.mrb[0].mxu0
      %v2446 = vadd.f32 0.0, %v2445
      %v2447 = vpop.f32.mrb[0].mxu0
      %v2448 = vpop.f32.mrb[0].mxu0
      %v2449 = vadd.f32 0.0, %v2448
      %v2450 = vpop.f32.mrb[0].mxu0
      %2451 = vdwg.mxu0
      %v2452 = vadd.f32 %v2334, %v2422
      %v2453 = vadd.f32 %v2335, %v2425
      %v2454 = vadd.f32 %v2336, %v2430
      %v2455 = vadd.f32 %v2337, %v2433
      %v2456 = vadd.f32 %v2338, %v2438
      %v2457 = vadd.f32 %v2339, %v2441
      %v2458 = vadd.f32 %v2340, %v2446
      %v2459 = vadd.f32 %v2341, %v2449
      %v2460 = vld [vmem:[%s1801] sm:$0xf]
      %v2461 = vld [vmem:[%s1801 + $0x4] sm:$0x1]
      %v2462 = vld [vmem:[%s1801 + $0x8] sm:$0xf]
      %v2463 = vld [vmem:[%s1801 + $0xc] sm:$0x1]
      %v2464 = vld [vmem:[%s1801 + $0x10] sm:$0xf]
      %v2465 = vld [vmem:[%s1801 + $0x14] sm:$0x1]
      %v2466 = vld [vmem:[%s1801 + $0x18] sm:$0xf]
      %v2467 = vld [vmem:[%s1801 + $0x1c] sm:$0x1]
      %v2468 = vld [vmem:[%s1801 + $0x20] sm:$0xf]
      %v2469 = vld [vmem:[%s1801 + $0x24] sm:$0x1]
      %v2470 = vld [vmem:[%s1801 + $0x28] sm:$0xf]
      %v2471 = vld [vmem:[%s1801 + $0x2c] sm:$0x1]
      %v2472 = vld [vmem:[%s1801 + $0x30] sm:$0xf]
      %v2473 = vld [vmem:[%s1801 + $0x34] sm:$0x1]
      %v2474 = vld [vmem:[%s1801 + $0x38] sm:$0xf]
      %v2475 = vld [vmem:[%s1801 + $0x3c] sm:$0x1]
      %v2477 = vshrl.u32 %v2460, 16
      %v2479 = vrot.slane %v2477, 4
      %v2480 = vshll.u32 %v2460, 16
      %v2482 = vrot.slane %v2480, 5
      %v2483 = vor.u32 %v2479, %v2482
      %v2484 = vrot.slane %v2483, 4
      %v2486 = vshll.u32 %v2461, 16
      %v2488 = vrot.slane %v2486, 5
      %v2489 = vsel %vm493, %v2484, %v2488
      %v2491 = vshrl.u32 %v2462, 16
      %v2493 = vrot.slane %v2491, 4
      %v2494 = vshll.u32 %v2462, 16
      %v2496 = vrot.slane %v2494, 5
      %v2497 = vor.u32 %v2493, %v2496
      %v2498 = vrot.slane %v2497, 4
      %v2500 = vshll.u32 %v2463, 16
      %v2502 = vrot.slane %v2500, 5
      %v2503 = vsel %vm493, %v2498, %v2502
      %v2505 = vshrl.u32 %v2464, 16
      %v2507 = vrot.slane %v2505, 4
      %v2508 = vshll.u32 %v2464, 16
      %v2510 = vrot.slane %v2508, 5
      %v2511 = vor.u32 %v2507, %v2510
      %v2512 = vrot.slane %v2511, 4
      %v2514 = vshll.u32 %v2465, 16
      %v2516 = vrot.slane %v2514, 5
      %v2517 = vsel %vm493, %v2512, %v2516
      %v2519 = vshrl.u32 %v2466, 16
      %v2521 = vrot.slane %v2519, 4
      %v2522 = vshll.u32 %v2466, 16
      %v2524 = vrot.slane %v2522, 5
      %v2525 = vor.u32 %v2521, %v2524
      %v2526 = vrot.slane %v2525, 4
      %v2528 = vshll.u32 %v2467, 16
      %v2530 = vrot.slane %v2528, 5
      %v2531 = vsel %vm493, %v2526, %v2530
      %v2533 = vshrl.u32 %v2468, 16
      %v2535 = vrot.slane %v2533, 4
      %v2536 = vshll.u32 %v2468, 16
      %v2538 = vrot.slane %v2536, 5
      %v2539 = vor.u32 %v2535, %v2538
      %v2540 = vrot.slane %v2539, 4
      %v2542 = vshll.u32 %v2469, 16
      %v2544 = vrot.slane %v2542, 5
      %v2545 = vsel %vm493, %v2540, %v2544
      %v2547 = vshrl.u32 %v2470, 16
      %v2549 = vrot.slane %v2547, 4
      %v2550 = vshll.u32 %v2470, 16
      %v2552 = vrot.slane %v2550, 5
      %v2553 = vor.u32 %v2549, %v2552
      %v2554 = vrot.slane %v2553, 4
      %v2556 = vshll.u32 %v2471, 16
      %v2558 = vrot.slane %v2556, 5
      %v2559 = vsel %vm493, %v2554, %v2558
      %v2561 = vshrl.u32 %v2472, 16
      %v2563 = vrot.slane %v2561, 4
      %v2564 = vshll.u32 %v2472, 16
      %v2566 = vrot.slane %v2564, 5
      %v2567 = vor.u32 %v2563, %v2566
      %v2568 = vrot.slane %v2567, 4
      %v2570 = vshll.u32 %v2473, 16
      %v2572 = vrot.slane %v2570, 5
      %v2573 = vsel %vm493, %v2568, %v2572
      %v2575 = vshrl.u32 %v2474, 16
      %v2577 = vrot.slane %v2575, 4
      %v2578 = vshll.u32 %v2474, 16
      %v2580 = vrot.slane %v2578, 5
      %v2581 = vor.u32 %v2577, %v2580
      %v2582 = vrot.slane %v2581, 4
      %v2584 = vshll.u32 %v2475, 16
      %v2586 = vrot.slane %v2584, 5
      %v2587 = vsel %vm493, %v2582, %v2586
      %s2588 = scalar_lea.vmem %s3, 16
      %v2589 = vld [vmem:[%s2588] sm:$0xf]
      %v2590 = vunpack.c.l.b16 %v2489
      %v2591 = vunpack.c.l.b16 %v2503
      %v2592 = vunpack.c.l.b16 %v2517
      %v2593 = vunpack.c.l.b16 %v2531
      %v2594 = vunpack.c.l.b16 %v2545
      %v2595 = vunpack.c.l.b16 %v2559
      %v2596 = vunpack.c.l.b16 %v2573
      %v2597 = vunpack.c.l.b16 %v2587
      %v2598 = vpack.c.b16 %v2591, %v2590
      %v2599 = vpack.c.b16 %v2593, %v2592
      %v2600 = vpack.c.b16 %v2595, %v2594
      %v2601 = vpack.c.b16 %v2597, %v2596
      %v2603 = vsel %vm1999, %v2598, 0
      %v2606 = vsel %vm1999, %v2599, 0
      %v2609 = vsel %vm1999, %v2600, 0
      %v2612 = vsel %vm1999, %v2601, 0
      %v2615 = vsel %vm2012, %v2589, 0
      %2617 = vmatprep.subr.bf16.mxu0 0
      %2618 = vmatpush1.bf16.msra.mxu0 %v2615
      %2619 = vmatprep.subr.bf16.mxu0 0
      %2620 = vmatpush1.bf16.msra.mxu0 0
      %2621 = vmatprep.subr.bf16.mxu0 0
      %2622 = vmatpush1.bf16.msra.mxu0 0
      %2623 = vmatprep.subr.bf16.mxu0 0
      %2624 = vmatpush1.bf16.msra.mxu0 0
      %2625 = vmatprep.subr.bf16.mxu0 0
      %2626 = vmatpush1.bf16.msra.mxu0 0
      %2627 = vmatprep.subr.bf16.mxu0 0
      %2628 = vmatpush1.bf16.msra.mxu0 0
      %2629 = vmatprep.subr.bf16.mxu0 0
      %2630 = vmatpush1.bf16.msra.mxu0 0
      %2631 = vmatprep.subr.bf16.mxu0 0
      %2632 = vmatpush1.bf16.msra.mxu0 0
      %2633 = vmatprep.subr.bf16.mxu0 0
      %2634 = vmatpush1.bf16.msra.mxu0 0
      %2635 = vmatprep.subr.bf16.mxu0 0
      %2636 = vmatpush1.bf16.msra.mxu0 0
      %2637 = vmatprep.subr.bf16.mxu0 0
      %2638 = vmatpush1.bf16.msra.mxu0 0
      %2639 = vmatprep.subr.bf16.mxu0 0
      %2640 = vmatpush1.bf16.msra.mxu0 0
      %2641 = vmatprep.subr.bf16.mxu0 0
      %2642 = vmatpush1.bf16.msra.mxu0 0
      %2643 = vmatprep.subr.bf16.mxu0 0
      %2644 = vmatpush1.bf16.msra.mxu0 0
      %2645 = vmatprep.subr.bf16.mxu0 0
      %2646 = vmatpush1.bf16.msra.mxu0 0
      %2647 = vmatprep.subr.bf16.mxu0 0
      %2648 = vmatpush1.bf16.msra.mxu0 0
      %2649 = vmatprep.mubr.bf16.mxu0 0
      %2650 = vmatmul.mubr.bf16.gmra.mrb[0].mxu0 %v2603
      %v2651 = vpop.f32.mrb[0].mxu0
      %v2652 = vadd.f32 0.0, %v2651
      %v2653 = vpop.f32.mrb[0].mxu0
      %v2654 = vpop.f32.mrb[0].mxu0
      %v2655 = vadd.f32 0.0, %v2654
      %v2656 = vpop.f32.mrb[0].mxu0
      %2657 = vmatprep.mubr.bf16.mxu0 0
      %2658 = vmatmul.mubr.bf16.gmra.mrb[0].mxu0 %v2606
      %v2659 = vpop.f32.mrb[0].mxu0
      %v2660 = vadd.f32 0.0, %v2659
      %v2661 = vpop.f32.mrb[0].mxu0
      %v2662 = vpop.f32.mrb[0].mxu0
      %v2663 = vadd.f32 0.0, %v2662
      %v2664 = vpop.f32.mrb[0].mxu0
      %2665 = vmatprep.mubr.bf16.mxu0 0
      %2666 = vmatmul.mubr.bf16.gmra.mrb[0].mxu0 %v2609
      %v2667 = vpop.f32.mrb[0].mxu0
      %v2668 = vadd.f32 0.0, %v2667
      %v2669 = vpop.f32.mrb[0].mxu0
      %v2670 = vpop.f32.mrb[0].mxu0
      %v2671 = vadd.f32 0.0, %v2670
      %v2672 = vpop.f32.mrb[0].mxu0
      %2673 = vmatprep.mubr.bf16.mxu0 0
      %2674 = vmatmul.mubr.bf16.gmra.mrb[0].mxu0 %v2612
      %v2675 = vpop.f32.mrb[0].mxu0
      %v2676 = vadd.f32 0.0, %v2675
      %v2677 = vpop.f32.mrb[0].mxu0
      %v2678 = vpop.f32.mrb[0].mxu0
      %v2679 = vadd.f32 0.0, %v2678
      %v2680 = vpop.f32.mrb[0].mxu0
      %2681 = vdwg.mxu0
      %v2682 = vadd.f32 %v2452, %v2652
      %v2683 = vadd.f32 %v2453, %v2655
      %v2684 = vadd.f32 %v2454, %v2660
      %v2685 = vadd.f32 %v2455, %v2663
      %v2686 = vadd.f32 %v2456, %v2668
      %v2687 = vadd.f32 %v2457, %v2671
      %v2688 = vadd.f32 %v2458, %v2676
      %v2689 = vadd.f32 %v2459, %v2679
      %v2690 = vld [vmem:[%s1801] sm:$0xe]
      %v2691 = vld [vmem:[%s1801 + $0x8] sm:$0xe]
      %v2692 = vld [vmem:[%s1801 + $0x10] sm:$0xe]
      %v2693 = vld [vmem:[%s1801 + $0x18] sm:$0xe]
      %v2694 = vld [vmem:[%s1801 + $0x20] sm:$0xe]
      %v2695 = vld [vmem:[%s1801 + $0x28] sm:$0xe]
      %v2696 = vld [vmem:[%s1801 + $0x30] sm:$0xe]
      %v2697 = vld [vmem:[%s1801 + $0x38] sm:$0xe]
      %v2714 = vrot.slane %v2690, 5
      %v2715 = vrot.slane %v2714, 4
      %v2716 = vrot.slane %v2461, 5
      %v2717 = vsel %vm2207, %v2715, %v2716
      %v2718 = vrot.slane %v2691, 5
      %v2719 = vrot.slane %v2718, 4
      %v2720 = vrot.slane %v2463, 5
      %v2721 = vsel %vm2207, %v2719, %v2720
      %v2722 = vrot.slane %v2692, 5
      %v2723 = vrot.slane %v2722, 4
      %v2724 = vrot.slane %v2465, 5
      %v2725 = vsel %vm2207, %v2723, %v2724
      %v2726 = vrot.slane %v2693, 5
      %v2727 = vrot.slane %v2726, 4
      %v2728 = vrot.slane %v2467, 5
      %v2729 = vsel %vm2207, %v2727, %v2728
      %v2730 = vrot.slane %v2694, 5
      %v2731 = vrot.slane %v2730, 4
      %v2732 = vrot.slane %v2469, 5
      %v2733 = vsel %vm2207, %v2731, %v2732
      %v2734 = vrot.slane %v2695, 5
      %v2735 = vrot.slane %v2734, 4
      %v2736 = vrot.slane %v2471, 5
      %v2737 = vsel %vm2207, %v2735, %v2736
      %v2738 = vrot.slane %v2696, 5
      %v2739 = vrot.slane %v2738, 4
      %v2740 = vrot.slane %v2473, 5
      %v2741 = vsel %vm2207, %v2739, %v2740
      %v2742 = vrot.slane %v2697, 5
      %v2743 = vrot.slane %v2742, 4
      %v2744 = vrot.slane %v2475, 5
      %v2745 = vsel %vm2207, %v2743, %v2744
      %s2746 = scalar_lea.vmem %s3, 20
      %v2747 = vld [vmem:[%s2746] sm:$0xf]
      %v2748 = vunpack.c.l.b16 %v2717
      %v2749 = vunpack.c.l.b16 %v2721
      %v2750 = vunpack.c.l.b16 %v2725
      %v2751 = vunpack.c.l.b16 %v2729
      %v2752 = vunpack.c.l.b16 %v2733
      %v2753 = vunpack.c.l.b16 %v2737
      %v2754 = vunpack.c.l.b16 %v2741
      %v2755 = vunpack.c.l.b16 %v2745
      %v2756 = vpack.c.b16 %v2749, %v2748
      %v2757 = vpack.c.b16 %v2751, %v2750
      %v2758 = vpack.c.b16 %v2753, %v2752
      %v2759 = vpack.c.b16 %v2755, %v2754
      %v2761 = vsel %vm1999, %v2756, 0
      %v2764 = vsel %vm1999, %v2757, 0
      %v2767 = vsel %vm1999, %v2758, 0
      %v2770 = vsel %vm1999, %v2759, 0
      %v2773 = vsel %vm2012, %v2747, 0
      %2775 = vmatprep.subr.bf16.mxu0 0
      %2776 = vmatpush1.bf16.msra.mxu0 %v2773
      %2777 = vmatprep.subr.bf16.mxu0 0
      %2778 = vmatpush1.bf16.msra.mxu0 0
      %2779 = vmatprep.subr.bf16.mxu0 0
      %2780 = vmatpush1.bf16.msra.mxu0 0
      %2781 = vmatprep.subr.bf16.mxu0 0
      %2782 = vmatpush1.bf16.msra.mxu0 0
      %2783 = vmatprep.subr.bf16.mxu0 0
      %2784 = vmatpush1.bf16.msra.mxu0 0
      %2785 = vmatprep.subr.bf16.mxu0 0
      %2786 = vmatpush1.bf16.msra.mxu0 0
      %2787 = vmatprep.subr.bf16.mxu0 0
      %2788 = vmatpush1.bf16.msra.mxu0 0
      %2789 = vmatprep.subr.bf16.mxu0 0
      %2790 = vmatpush1.bf16.msra.mxu0 0
      %2791 = vmatprep.subr.bf16.mxu0 0
      %2792 = vmatpush1.bf16.msra.mxu0 0
      %2793 = vmatprep.subr.bf16.mxu0 0
      %2794 = vmatpush1.bf16.msra.mxu0 0
      %2795 = vmatprep.subr.bf16.mxu0 0
      %2796 = vmatpush1.bf16.msra.mxu0 0
      %2797 = vmatprep.subr.bf16.mxu0 0
      %2798 = vmatpush1.bf16.msra.mxu0 0
      %2799 = vmatprep.subr.bf16.mxu0 0
      %2800 = vmatpush1.bf16.msra.mxu0 0
      %2801 = vmatprep.subr.bf16.mxu0 0
      %2802 = vmatpush1.bf16.msra.mxu0 0
      %2803 = vmatprep.subr.bf16.mxu0 0
      %2804 = vmatpush1.bf16.msra.mxu0 0
      %2805 = vmatprep.subr.bf16.mxu0 0
      %2806 = vmatpush1.bf16.msra.mxu0 0
      %2807 = vmatprep.mubr.bf16.mxu0 0
      %2808 = vmatmul.mubr.bf16.gmra.mrb[0].mxu0 %v2761
      %v2809 = vpop.f32.mrb[0].mxu0
      %v2810 = vadd.f32 0.0, %v2809
      %v2811 = vpop.f32.mrb[0].mxu0
      %v2812 = vpop.f32.mrb[0].mxu0
      %v2813 = vadd.f32 0.0, %v2812
      %v2814 = vpop.f32.mrb[0].mxu0
      %2815 = vmatprep.mubr.bf16.mxu0 0
      %2816 = vmatmul.mubr.bf16.gmra.mrb[0].mxu0 %v2764
      %v2817 = vpop.f32.mrb[0].mxu0
      %v2818 = vadd.f32 0.0, %v2817
      %v2819 = vpop.f32.mrb[0].mxu0
      %v2820 = vpop.f32.mrb[0].mxu0
      %v2821 = vadd.f32 0.0, %v2820
      %v2822 = vpop.f32.mrb[0].mxu0
      %2823 = vmatprep.mubr.bf16.mxu0 0
      %2824 = vmatmul.mubr.bf16.gmra.mrb[0].mxu0 %v2767
      %v2825 = vpop.f32.mrb[0].mxu0
      %v2826 = vadd.f32 0.0, %v2825
      %v2827 = vpop.f32.mrb[0].mxu0
      %v2828 = vpop.f32.mrb[0].mxu0
      %v2829 = vadd.f32 0.0, %v2828
      %v2830 = vpop.f32.mrb[0].mxu0
      %2831 = vmatprep.mubr.bf16.mxu0 0
      %2832 = vmatmul.mubr.bf16.gmra.mrb[0].mxu0 %v2770
      %v2833 = vpop.f32.mrb[0].mxu0
      %v2834 = vadd.f32 0.0, %v2833
      %v2835 = vpop.f32.mrb[0].mxu0
      %v2836 = vpop.f32.mrb[0].mxu0
      %v2837 = vadd.f32 0.0, %v2836
      %v2838 = vpop.f32.mrb[0].mxu0
      %2839 = vdwg.mxu0
      %v2840 = vadd.f32 %v2682, %v2810
      %v2841 = vadd.f32 %v2683, %v2813
      %v2842 = vadd.f32 %v2684, %v2818
      %v2843 = vadd.f32 %v2685, %v2821
      %v2844 = vadd.f32 %v2686, %v2826
      %v2845 = vadd.f32 %v2687, %v2829
      %v2846 = vadd.f32 %v2688, %v2834
      %v2847 = vadd.f32 %v2689, %v2837
      %s2848 = scalar_lea.vmem [#allocation2], 16
      %v2849 = vld [vmem:[%s2848] sm:$0xf]
      %v2850 = vld [vmem:[%s2848 + $0x8] sm:$0xf]
      %v2851 = vld [vmem:[%s2848 + $0x10] sm:$0xf]
      %v2852 = vld [vmem:[%s2848 + $0x18] sm:$0xf]
      %v2853 = vld [vmem:[%s2848 + $0x20] sm:$0xf]
      %v2854 = vld [vmem:[%s2848 + $0x28] sm:$0xf]
      %v2855 = vld [vmem:[%s2848 + $0x30] sm:$0xf]
      %v2856 = vld [vmem:[%s2848 + $0x38] sm:$0xf]
      %s2857 = scalar_lea.vmem %s3, 24
      %v2858 = vld [vmem:[%s2857] sm:$0xf]
      %v2867 = vunpack.c.l.b16 %v2849
      %v2868 = vunpack.c.l.b16 %v2850
      %v2869 = vunpack.c.l.b16 %v2851
      %v2870 = vunpack.c.l.b16 %v2852
      %v2871 = vunpack.c.l.b16 %v2853
      %v2872 = vunpack.c.l.b16 %v2854
      %v2873 = vunpack.c.l.b16 %v2855
      %v2874 = vunpack.c.l.b16 %v2856
      %v2875 = vpack.c.b16 %v2868, %v2867
      %v2876 = vpack.c.b16 %v2870, %v2869
      %v2877 = vpack.c.b16 %v2872, %v2871
      %v2878 = vpack.c.b16 %v2874, %v2873
      %v2880 = vsel %vm1999, %v2875, 0
      %v2883 = vsel %vm1999, %v2876, 0
      %v2886 = vsel %vm1999, %v2877, 0
      %v2889 = vsel %vm1999, %v2878, 0
      %v2892 = vsel %vm2012, %v2858, 0
      %2894 = vmatprep.subr.bf16.mxu0 0
      %2895 = vmatpush1.bf16.msra.mxu0 %v2892
      %2896 = vmatprep.subr.bf16.mxu0 0
      %2897 = vmatpush1.bf16.msra.mxu0 0
      %2898 = vmatprep.subr.bf16.mxu0 0
      %2899 = vmatpush1.bf16.msra.mxu0 0
      %2900 = vmatprep.subr.bf16.mxu0 0
      %2901 = vmatpush1.bf16.msra.mxu0 0
      %2902 = vmatprep.subr.bf16.mxu0 0
      %2903 = vmatpush1.bf16.msra.mxu0 0
      %2904 = vmatprep.subr.bf16.mxu0 0
      %2905 = vmatpush1.bf16.msra.mxu0 0
      %2906 = vmatprep.subr.bf16.mxu0 0
      %2907 = vmatpush1.bf16.msra.mxu0 0
      %2908 = vmatprep.subr.bf16.mxu0 0
      %2909 = vmatpush1.bf16.msra.mxu0 0
      %2910 = vmatprep.subr.bf16.mxu0 0
      %2911 = vmatpush1.bf16.msra.mxu0 0
      %2912 = vmatprep.subr.bf16.mxu0 0
      %2913 = vmatpush1.bf16.msra.mxu0 0
      %2914 = vmatprep.subr.bf16.mxu0 0
      %2915 = vmatpush1.bf16.msra.mxu0 0
      %2916 = vmatprep.subr.bf16.mxu0 0
      %2917 = vmatpush1.bf16.msra.mxu0 0
      %2918 = vmatprep.subr.bf16.mxu0 0
      %2919 = vmatpush1.bf16.msra.mxu0 0
      %2920 = vmatprep.subr.bf16.mxu0 0
      %2921 = vmatpush1.bf16.msra.mxu0 0
      %2922 = vmatprep.subr.bf16.mxu0 0
      %2923 = vmatpush1.bf16.msra.mxu0 0
      %2924 = vmatprep.subr.bf16.mxu0 0
      %2925 = vmatpush1.bf16.msra.mxu0 0
      %2926 = vmatprep.mubr.bf16.mxu0 0
      %2927 = vmatmul.mubr.bf16.gmra.mrb[0].mxu0 %v2880
      %v2928 = vpop.f32.mrb[0].mxu0
      %v2929 = vadd.f32 0.0, %v2928
      %v2930 = vpop.f32.mrb[0].mxu0
      %v2931 = vpop.f32.mrb[0].mxu0
      %v2932 = vadd.f32 0.0, %v2931
      %v2933 = vpop.f32.mrb[0].mxu0
      %2934 = vmatprep.mubr.bf16.mxu0 0
      %2935 = vmatmul.mubr.bf16.gmra.mrb[0].mxu0 %v2883
      %v2936 = vpop.f32.mrb[0].mxu0
      %v2937 = vadd.f32 0.0, %v2936
      %v2938 = vpop.f32.mrb[0].mxu0
      %v2939 = vpop.f32.mrb[0].mxu0
      %v2940 = vadd.f32 0.0, %v2939
      %v2941 = vpop.f32.mrb[0].mxu0
      %2942 = vmatprep.mubr.bf16.mxu0 0
      %2943 = vmatmul.mubr.bf16.gmra.mrb[0].mxu0 %v2886
      %v2944 = vpop.f32.mrb[0].mxu0
      %v2945 = vadd.f32 0.0, %v2944
      %v2946 = vpop.f32.mrb[0].mxu0
      %v2947 = vpop.f32.mrb[0].mxu0
      %v2948 = vadd.f32 0.0, %v2947
      %v2949 = vpop.f32.mrb[0].mxu0
      %2950 = vmatprep.mubr.bf16.mxu0 0
      %2951 = vmatmul.mubr.bf16.gmra.mrb[0].mxu0 %v2889
      %v2952 = vpop.f32.mrb[0].mxu0
      %v2953 = vadd.f32 0.0, %v2952
      %v2954 = vpop.f32.mrb[0].mxu0
      %v2955 = vpop.f32.mrb[0].mxu0
      %v2956 = vadd.f32 0.0, %v2955
      %v2957 = vpop.f32.mrb[0].mxu0
      %2958 = vdwg.mxu0
      %v2959 = vadd.f32 %v2840, %v2929
      %v2960 = vadd.f32 %v2841, %v2932
      %v2961 = vadd.f32 %v2842, %v2937
      %v2962 = vadd.f32 %v2843, %v2940
      %v2963 = vadd.f32 %v2844, %v2945
      %v2964 = vadd.f32 %v2845, %v2948
      %v2965 = vadd.f32 %v2846, %v2953
      %v2966 = vadd.f32 %v2847, %v2956
      %v2967 = vld [vmem:[%s2848] sm:$0xf]
      %v2968 = vld [vmem:[%s2848 + $0x4] sm:$0x1]
      %v2969 = vld [vmem:[%s2848 + $0x8] sm:$0xf]
      %v2970 = vld [vmem:[%s2848 + $0xc] sm:$0x1]
      %v2971 = vld [vmem:[%s2848 + $0x10] sm:$0xf]
      %v2972 = vld [vmem:[%s2848 + $0x14] sm:$0x1]
      %v2973 = vld [vmem:[%s2848 + $0x18] sm:$0xf]
      %v2974 = vld [vmem:[%s2848 + $0x1c] sm:$0x1]
      %v2975 = vld [vmem:[%s2848 + $0x20] sm:$0xf]
      %v2976 = vld [vmem:[%s2848 + $0x24] sm:$0x1]
      %v2977 = vld [vmem:[%s2848 + $0x28] sm:$0xf]
      %v2978 = vld [vmem:[%s2848 + $0x2c] sm:$0x1]
      %v2979 = vld [vmem:[%s2848 + $0x30] sm:$0xf]
      %v2980 = vld [vmem:[%s2848 + $0x34] sm:$0x1]
      %v2981 = vld [vmem:[%s2848 + $0x38] sm:$0xf]
      %v2982 = vld [vmem:[%s2848 + $0x3c] sm:$0x1]
      %v2984 = vshrl.u32 %v2967, 16
      %v2986 = vrot.slane %v2984, 4
      %v2987 = vshll.u32 %v2967, 16
      %v2989 = vrot.slane %v2987, 5
      %v2990 = vor.u32 %v2986, %v2989
      %v2991 = vrot.slane %v2990, 4
      %v2993 = vshll.u32 %v2968, 16
      %v2995 = vrot.slane %v2993, 5
      %v2996 = vsel %vm493, %v2991, %v2995
      %v2998 = vshrl.u32 %v2969, 16
      %v3000 = vrot.slane %v2998, 4
      %v3001 = vshll.u32 %v2969, 16
      %v3003 = vrot.slane %v3001, 5
      %v3004 = vor.u32 %v3000, %v3003
      %v3005 = vrot.slane %v3004, 4
      %v3007 = vshll.u32 %v2970, 16
      %v3009 = vrot.slane %v3007, 5
      %v3010 = vsel %vm493, %v3005, %v3009
      %v3012 = vshrl.u32 %v2971, 16
      %v3014 = vrot.slane %v3012, 4
      %v3015 = vshll.u32 %v2971, 16
      %v3017 = vrot.slane %v3015, 5
      %v3018 = vor.u32 %v3014, %v3017
      %v3019 = vrot.slane %v3018, 4
      %v3021 = vshll.u32 %v2972, 16
      %v3023 = vrot.slane %v3021, 5
      %v3024 = vsel %vm493, %v3019, %v3023
      %v3026 = vshrl.u32 %v2973, 16
      %v3028 = vrot.slane %v3026, 4
      %v3029 = vshll.u32 %v2973, 16
      %v3031 = vrot.slane %v3029, 5
      %v3032 = vor.u32 %v3028, %v3031
      %v3033 = vrot.slane %v3032, 4
      %v3035 = vshll.u32 %v2974, 16
      %v3037 = vrot.slane %v3035, 5
      %v3038 = vsel %vm493, %v3033, %v3037
      %v3040 = vshrl.u32 %v2975, 16
      %v3042 = vrot.slane %v3040, 4
      %v3043 = vshll.u32 %v2975, 16
      %v3045 = vrot.slane %v3043, 5
      %v3046 = vor.u32 %v3042, %v3045
      %v3047 = vrot.slane %v3046, 4
      %v3049 = vshll.u32 %v2976, 16
      %v3051 = vrot.slane %v3049, 5
      %v3052 = vsel %vm493, %v3047, %v3051
      %v3054 = vshrl.u32 %v2977, 16
      %v3056 = vrot.slane %v3054, 4
      %v3057 = vshll.u32 %v2977, 16
      %v3059 = vrot.slane %v3057, 5
      %v3060 = vor.u32 %v3056, %v3059
      %v3061 = vrot.slane %v3060, 4
      %v3063 = vshll.u32 %v2978, 16
      %v3065 = vrot.slane %v3063, 5
      %v3066 = vsel %vm493, %v3061, %v3065
      %v3068 = vshrl.u32 %v2979, 16
      %v3070 = vrot.slane %v3068, 4
      %v3071 = vshll.u32 %v2979, 16
      %v3073 = vrot.slane %v3071, 5
      %v3074 = vor.u32 %v3070, %v3073
      %v3075 = vrot.slane %v3074, 4
      %v3077 = vshll.u32 %v2980, 16
      %v3079 = vrot.slane %v3077, 5
      %v3080 = vsel %vm493, %v3075, %v3079
      %v3082 = vshrl.u32 %v2981, 16
      %v3084 = vrot.slane %v3082, 4
      %v3085 = vshll.u32 %v2981, 16
      %v3087 = vrot.slane %v3085, 5
      %v3088 = vor.u32 %v3084, %v3087
      %v3089 = vrot.slane %v3088, 4
      %v3091 = vshll.u32 %v2982, 16
      %v3093 = vrot.slane %v3091, 5
      %v3094 = vsel %vm493, %v3089, %v3093
      %s3095 = scalar_lea.vmem %s3, 28
      %v3096 = vld [vmem:[%s3095] sm:$0xf]
      %v3097 = vunpack.c.l.b16 %v2996
      %v3098 = vunpack.c.l.b16 %v3010
      %v3099 = vunpack.c.l.b16 %v3024
      %v3100 = vunpack.c.l.b16 %v3038
      %v3101 = vunpack.c.l.b16 %v3052
      %v3102 = vunpack.c.l.b16 %v3066
      %v3103 = vunpack.c.l.b16 %v3080
      %v3104 = vunpack.c.l.b16 %v3094
      %v3105 = vpack.c.b16 %v3098, %v3097
      %v3106 = vpack.c.b16 %v3100, %v3099
      %v3107 = vpack.c.b16 %v3102, %v3101
      %v3108 = vpack.c.b16 %v3104, %v3103
      %v3110 = vsel %vm1999, %v3105, 0
      %v3113 = vsel %vm1999, %v3106, 0
      %v3116 = vsel %vm1999, %v3107, 0
      %v3119 = vsel %vm1999, %v3108, 0
      %v3122 = vsel %vm2012, %v3096, 0
      %3124 = vmatprep.subr.bf16.mxu0 0
      %3125 = vmatpush1.bf16.msra.mxu0 %v3122
      %3126 = vmatprep.subr.bf16.mxu0 0
      %3127 = vmatpush1.bf16.msra.mxu0 0
      %3128 = vmatprep.subr.bf16.mxu0 0
      %3129 = vmatpush1.bf16.msra.mxu0 0
      %3130 = vmatprep.subr.bf16.mxu0 0
      %3131 = vmatpush1.bf16.msra.mxu0 0
      %3132 = vmatprep.subr.bf16.mxu0 0
      %3133 = vmatpush1.bf16.msra.mxu0 0
      %3134 = vmatprep.subr.bf16.mxu0 0
      %3135 = vmatpush1.bf16.msra.mxu0 0
      %3136 = vmatprep.subr.bf16.mxu0 0
      %3137 = vmatpush1.bf16.msra.mxu0 0
      %3138 = vmatprep.subr.bf16.mxu0 0
      %3139 = vmatpush1.bf16.msra.mxu0 0
      %3140 = vmatprep.subr.bf16.mxu0 0
      %3141 = vmatpush1.bf16.msra.mxu0 0
      %3142 = vmatprep.subr.bf16.mxu0 0
      %3143 = vmatpush1.bf16.msra.mxu0 0
      %3144 = vmatprep.subr.bf16.mxu0 0
      %3145 = vmatpush1.bf16.msra.mxu0 0
      %3146 = vmatprep.subr.bf16.mxu0 0
      %3147 = vmatpush1.bf16.msra.mxu0 0
      %3148 = vmatprep.subr.bf16.mxu0 0
      %3149 = vmatpush1.bf16.msra.mxu0 0
      %3150 = vmatprep.subr.bf16.mxu0 0
      %3151 = vmatpush1.bf16.msra.mxu0 0
      %3152 = vmatprep.subr.bf16.mxu0 0
      %3153 = vmatpush1.bf16.msra.mxu0 0
      %3154 = vmatprep.subr.bf16.mxu0 0
      %3155 = vmatpush1.bf16.msra.mxu0 0
      %3156 = vmatprep.mubr.bf16.mxu0 0
      %3157 = vmatmul.mubr.bf16.gmra.mrb[0].mxu0 %v3110
      %v3158 = vpop.f32.mrb[0].mxu0
      %v3159 = vadd.f32 0.0, %v3158
      %v3160 = vpop.f32.mrb[0].mxu0
      %v3161 = vpop.f32.mrb[0].mxu0
      %v3162 = vadd.f32 0.0, %v3161
      %v3163 = vpop.f32.mrb[0].mxu0
      %3164 = vmatprep.mubr.bf16.mxu0 0
      %3165 = vmatmul.mubr.bf16.gmra.mrb[0].mxu0 %v3113
      %v3166 = vpop.f32.mrb[0].mxu0
      %v3167 = vadd.f32 0.0, %v3166
      %v3168 = vpop.f32.mrb[0].mxu0
      %v3169 = vpop.f32.mrb[0].mxu0
      %v3170 = vadd.f32 0.0, %v3169
      %v3171 = vpop.f32.mrb[0].mxu0
      %3172 = vmatprep.mubr.bf16.mxu0 0
      %3173 = vmatmul.mubr.bf16.gmra.mrb[0].mxu0 %v3116
      %v3174 = vpop.f32.mrb[0].mxu0
      %v3175 = vadd.f32 0.0, %v3174
      %v3176 = vpop.f32.mrb[0].mxu0
      %v3177 = vpop.f32.mrb[0].mxu0
      %v3178 = vadd.f32 0.0, %v3177
      %v3179 = vpop.f32.mrb[0].mxu0
      %3180 = vmatprep.mubr.bf16.mxu0 0
      %3181 = vmatmul.mubr.bf16.gmra.mrb[0].mxu0 %v3119
      %v3182 = vpop.f32.mrb[0].mxu0
      %v3183 = vadd.f32 0.0, %v3182
      %v3184 = vpop.f32.mrb[0].mxu0
      %v3185 = vpop.f32.mrb[0].mxu0
      %v3186 = vadd.f32 0.0, %v3185
      %v3187 = vpop.f32.mrb[0].mxu0
      %3188 = vdwg.mxu0
      %v3189 = vadd.f32 %v2959, %v3159
      %v3190 = vadd.f32 %v2960, %v3162
      %v3191 = vadd.f32 %v2961, %v3167
      %v3192 = vadd.f32 %v2962, %v3170
      %v3193 = vadd.f32 %v2963, %v3175
      %v3194 = vadd.f32 %v2964, %v3178
      %v3195 = vadd.f32 %v2965, %v3183
      %v3196 = vadd.f32 %v2966, %v3186
      %v3197 = vld [vmem:[%s2848] sm:$0xe]
      %v3198 = vld [vmem:[%s2848 + $0x8] sm:$0xe]
      %v3199 = vld [vmem:[%s2848 + $0x10] sm:$0xe]
      %v3200 = vld [vmem:[%s2848 + $0x18] sm:$0xe]
      %v3201 = vld [vmem:[%s2848 + $0x20] sm:$0xe]
      %v3202 = vld [vmem:[%s2848 + $0x28] sm:$0xe]
      %v3203 = vld [vmem:[%s2848 + $0x30] sm:$0xe]
      %v3204 = vld [vmem:[%s2848 + $0x38] sm:$0xe]
      %v3221 = vrot.slane %v3197, 5
      %v3222 = vrot.slane %v3221, 4
      %v3223 = vrot.slane %v2968, 5
      %v3224 = vsel %vm2207, %v3222, %v3223
      %v3225 = vrot.slane %v3198, 5
      %v3226 = vrot.slane %v3225, 4
      %v3227 = vrot.slane %v2970, 5
      %v3228 = vsel %vm2207, %v3226, %v3227
      %v3229 = vrot.slane %v3199, 5
      %v3230 = vrot.slane %v3229, 4
      %v3231 = vrot.slane %v2972, 5
      %v3232 = vsel %vm2207, %v3230, %v3231
      %v3233 = vrot.slane %v3200, 5
      %v3234 = vrot.slane %v3233, 4
      %v3235 = vrot.slane %v2974, 5
      %v3236 = vsel %vm2207, %v3234, %v3235
      %v3237 = vrot.slane %v3201, 5
      %v3238 = vrot.slane %v3237, 4
      %v3239 = vrot.slane %v2976, 5
      %v3240 = vsel %vm2207, %v3238, %v3239
      %v3241 = vrot.slane %v3202, 5
      %v3242 = vrot.slane %v3241, 4
      %v3243 = vrot.slane %v2978, 5
      %v3244 = vsel %vm2207, %v3242, %v3243
      %v3245 = vrot.slane %v3203, 5
      %v3246 = vrot.slane %v3245, 4
      %v3247 = vrot.slane %v2980, 5
      %v3248 = vsel %vm2207, %v3246, %v3247
      %v3249 = vrot.slane %v3204, 5
      %v3250 = vrot.slane %v3249, 4
      %v3251 = vrot.slane %v2982, 5
      %v3252 = vsel %vm2207, %v3250, %v3251
      %s3253 = scalar_lea.vmem %s3, 32
      %v3254 = vld [vmem:[%s3253] sm:$0xf]
      %v3255 = vunpack.c.l.b16 %v3224
      %v3256 = vunpack.c.l.b16 %v3228
      %v3257 = vunpack.c.l.b16 %v3232
      %v3258 = vunpack.c.l.b16 %v3236
      %v3259 = vunpack.c.l.b16 %v3240
      %v3260 = vunpack.c.l.b16 %v3244
      %v3261 = vunpack.c.l.b16 %v3248
      %v3262 = vunpack.c.l.b16 %v3252
      %v3263 = vpack.c.b16 %v3256, %v3255
      %v3264 = vpack.c.b16 %v3258, %v3257
      %v3265 = vpack.c.b16 %v3260, %v3259
      %v3266 = vpack.c.b16 %v3262, %v3261
      %v3268 = vsel %vm1999, %v3263, 0
      %v3271 = vsel %vm1999, %v3264, 0
      %v3274 = vsel %vm1999, %v3265, 0
      %v3277 = vsel %vm1999, %v3266, 0
      %v3280 = vsel %vm2012, %v3254, 0
      %3282 = vmatprep.subr.bf16.mxu0 0
      %3283 = vmatpush1.bf16.msra.mxu0 %v3280
      %3284 = vmatprep.subr.bf16.mxu0 0
      %3285 = vmatpush1.bf16.msra.mxu0 0
      %3286 = vmatprep.subr.bf16.mxu0 0
      %3287 = vmatpush1.bf16.msra.mxu0 0
      %3288 = vmatprep.subr.bf16.mxu0 0
      %3289 = vmatpush1.bf16.msra.mxu0 0
      %3290 = vmatprep.subr.bf16.mxu0 0
      %3291 = vmatpush1.bf16.msra.mxu0 0
      %3292 = vmatprep.subr.bf16.mxu0 0
      %3293 = vmatpush1.bf16.msra.mxu0 0
      %3294 = vmatprep.subr.bf16.mxu0 0
      %3295 = vmatpush1.bf16.msra.mxu0 0
      %3296 = vmatprep.subr.bf16.mxu0 0
      %3297 = vmatpush1.bf16.msra.mxu0 0
      %3298 = vmatprep.subr.bf16.mxu0 0
      %3299 = vmatpush1.bf16.msra.mxu0 0
      %3300 = vmatprep.subr.bf16.mxu0 0
      %3301 = vmatpush1.bf16.msra.mxu0 0
      %3302 = vmatprep.subr.bf16.mxu0 0
      %3303 = vmatpush1.bf16.msra.mxu0 0
      %3304 = vmatprep.subr.bf16.mxu0 0
      %3305 = vmatpush1.bf16.msra.mxu0 0
      %3306 = vmatprep.subr.bf16.mxu0 0
      %3307 = vmatpush1.bf16.msra.mxu0 0
      %3308 = vmatprep.subr.bf16.mxu0 0
      %3309 = vmatpush1.bf16.msra.mxu0 0
      %3310 = vmatprep.subr.bf16.mxu0 0
      %3311 = vmatpush1.bf16.msra.mxu0 0
      %3312 = vmatprep.subr.bf16.mxu0 0
      %3313 = vmatpush1.bf16.msra.mxu0 0
      %3314 = vmatprep.mubr.bf16.mxu0 0
      %3315 = vmatmul.mubr.bf16.gmra.mrb[0].mxu0 %v3268
      %v3316 = vpop.f32.mrb[0].mxu0
      %v3317 = vadd.f32 0.0, %v3316
      %v3318 = vpop.f32.mrb[0].mxu0
      %v3319 = vpop.f32.mrb[0].mxu0
      %v3320 = vadd.f32 0.0, %v3319
      %v3321 = vpop.f32.mrb[0].mxu0
      %3322 = vmatprep.mubr.bf16.mxu0 0
      %3323 = vmatmul.mubr.bf16.gmra.mrb[0].mxu0 %v3271
      %v3324 = vpop.f32.mrb[0].mxu0
      %v3325 = vadd.f32 0.0, %v3324
      %v3326 = vpop.f32.mrb[0].mxu0
      %v3327 = vpop.f32.mrb[0].mxu0
      %v3328 = vadd.f32 0.0, %v3327
      %v3329 = vpop.f32.mrb[0].mxu0
      %3330 = vmatprep.mubr.bf16.mxu0 0
      %3331 = vmatmul.mubr.bf16.gmra.mrb[0].mxu0 %v3274
      %v3332 = vpop.f32.mrb[0].mxu0
      %v3333 = vadd.f32 0.0, %v3332
      %v3334 = vpop.f32.mrb[0].mxu0
      %v3335 = vpop.f32.mrb[0].mxu0
      %v3336 = vadd.f32 0.0, %v3335
      %v3337 = vpop.f32.mrb[0].mxu0
      %3338 = vmatprep.mubr.bf16.mxu0 0
      %3339 = vmatmul.mubr.bf16.gmra.mrb[0].mxu0 %v3277
      %v3340 = vpop.f32.mrb[0].mxu0
      %v3341 = vadd.f32 0.0, %v3340
      %v3342 = vpop.f32.mrb[0].mxu0
      %v3343 = vpop.f32.mrb[0].mxu0
      %v3344 = vadd.f32 0.0, %v3343
      %v3345 = vpop.f32.mrb[0].mxu0
      %3346 = vdwg.mxu0
      %v3347 = vadd.f32 %v3189, %v3317
      %v3348 = vadd.f32 %v3190, %v3320
      %v3349 = vadd.f32 %v3191, %v3325
      %v3350 = vadd.f32 %v3192, %v3328
      %v3351 = vadd.f32 %v3193, %v3333
      %v3352 = vadd.f32 %v3194, %v3336
      %v3353 = vadd.f32 %v3195, %v3341
      %v3354 = vadd.f32 %v3196, %v3344
      %v3355 = vld [vmem:[%s4] sm:$0x1]
      %v3357 = vlaneseq
      %v3358 = vshrl.u32 %v3357, 7
      %v3359 = vsub.s32 0, %v3358
      %v3360 = vrot.slane %v3355, %v3359
      %v3362 = vadd.f32 %v3347, %v3360
      %v3363 = vadd.f32 %v3348, %v3360
      %v3364 = vadd.f32 %v3349, %v3360
      %v3365 = vadd.f32 %v3350, %v3360
      %v3366 = vadd.f32 %v3351, %v3360
      %v3367 = vadd.f32 %v3352, %v3360
      %v3368 = vadd.f32 %v3353, %v3360
      %v3369 = vadd.f32 %v3354, %v3360
      %v3370 = vld [vmem:[%s827] sm:$0xf]
      %v3371 = vld [vmem:[%s827 + $0x8] sm:$0xf]
      %v3372 = vld [vmem:[%s827 + $0x10] sm:$0xf]
      %v3373 = vld [vmem:[%s827 + $0x18] sm:$0xf]
      %v3374 = vld [vmem:[%s827 + $0x20] sm:$0xf]
      %v3375 = vld [vmem:[%s827 + $0x28] sm:$0xf]
      %v3376 = vld [vmem:[%s827 + $0x30] sm:$0xf]
      %v3377 = vld [vmem:[%s827 + $0x38] sm:$0xf]
      %v3378 = vld [vmem:[%s5] sm:$0x3]
      %v3387 = vunpack.c.l.b16 %v3370
      %v3388 = vunpack.c.l.b16 %v3371
      %v3389 = vunpack.c.l.b16 %v3372
      %v3390 = vunpack.c.l.b16 %v3373
      %v3391 = vunpack.c.l.b16 %v3374
      %v3392 = vunpack.c.l.b16 %v3375
      %v3393 = vunpack.c.l.b16 %v3376
      %v3394 = vunpack.c.l.b16 %v3377
      %v3395 = vpack.c.b16 %v3388, %v3387
      %v3396 = vpack.c.b16 %v3390, %v3389
      %v3397 = vpack.c.b16 %v3392, %v3391
      %v3398 = vpack.c.b16 %v3394, %v3393
      %v3400 = vsel %vm293, %v3395, 0
      %v3403 = vsel %vm293, %v3396, 0
      %v3406 = vsel %vm293, %v3397, 0
      %v3409 = vsel %vm293, %v3398, 0
      %v3412 = vsel %vm306, %v3378, 0
      %3414 = vmatprep.subr.bf16.mxu0 0
      %3415 = vmatpush1.bf16.msra.mxu0 %v3412
      %3416 = vmatprep.subr.bf16.mxu0 0
      %3417 = vmatpush1.bf16.msra.mxu0 0
      %3418 = vmatprep.subr.bf16.mxu0 0
      %3419 = vmatpush1.bf16.msra.mxu0 0
      %3420 = vmatprep.subr.bf16.mxu0 0
      %3421 = vmatpush1.bf16.msra.mxu0 0
      %3422 = vmatprep.subr.bf16.mxu0 0
      %3423 = vmatpush1.bf16.msra.mxu0 0
      %3424 = vmatprep.subr.bf16.mxu0 0
      %3425 = vmatpush1.bf16.msra.mxu0 0
      %3426 = vmatprep.subr.bf16.mxu0 0
      %3427 = vmatpush1.bf16.msra.mxu0 0
      %3428 = vmatprep.subr.bf16.mxu0 0
      %3429 = vmatpush1.bf16.msra.mxu0 0
      %3430 = vmatprep.subr.bf16.mxu0 0
      %3431 = vmatpush1.bf16.msra.mxu0 0
      %3432 = vmatprep.subr.bf16.mxu0 0
      %3433 = vmatpush1.bf16.msra.mxu0 0
      %3434 = vmatprep.subr.bf16.mxu0 0
      %3435 = vmatpush1.bf16.msra.mxu0 0
      %3436 = vmatprep.subr.bf16.mxu0 0
      %3437 = vmatpush1.bf16.msra.mxu0 0
      %3438 = vmatprep.subr.bf16.mxu0 0
      %3439 = vmatpush1.bf16.msra.mxu0 0
      %3440 = vmatprep.subr.bf16.mxu0 0
      %3441 = vmatpush1.bf16.msra.mxu0 0
      %3442 = vmatprep.subr.bf16.mxu0 0
      %3443 = vmatpush1.bf16.msra.mxu0 0
      %3444 = vmatprep.subr.bf16.mxu0 0
      %3445 = vmatpush1.bf16.msra.mxu0 0
      %3446 = vmatprep.mubr.bf16.mxu0 0
      %3447 = vmatmul.mubr.bf16.gmra.mrb[0].mxu0 %v3400
      %v3448 = vpop.f32.mrb[0].mxu0
      %v3449 = vadd.f32 0.0, %v3448
      %v3450 = vpop.f32.mrb[0].mxu0
      %v3451 = vpop.f32.mrb[0].mxu0
      %v3452 = vadd.f32 0.0, %v3451
      %v3453 = vpop.f32.mrb[0].mxu0
      %3454 = vmatprep.mubr.bf16.mxu0 0
      %3455 = vmatmul.mubr.bf16.gmra.mrb[0].mxu0 %v3403
      %v3456 = vpop.f32.mrb[0].mxu0
      %v3457 = vadd.f32 0.0, %v3456
      %v3458 = vpop.f32.mrb[0].mxu0
      %v3459 = vpop.f32.mrb[0].mxu0
      %v3460 = vadd.f32 0.0, %v3459
      %v3461 = vpop.f32.mrb[0].mxu0
      %3462 = vmatprep.mubr.bf16.mxu0 0
      %3463 = vmatmul.mubr.bf16.gmra.mrb[0].mxu0 %v3406
      %v3464 = vpop.f32.mrb[0].mxu0
      %v3465 = vadd.f32 0.0, %v3464
      %v3466 = vpop.f32.mrb[0].mxu0
      %v3467 = vpop.f32.mrb[0].mxu0
      %v3468 = vadd.f32 0.0, %v3467
      %v3469 = vpop.f32.mrb[0].mxu0
      %3470 = vmatprep.mubr.bf16.mxu0 0
      %3471 = vmatmul.mubr.bf16.gmra.mrb[0].mxu0 %v3409
      %v3472 = vpop.f32.mrb[0].mxu0
      %v3473 = vadd.f32 0.0, %v3472
      %v3474 = vpop.f32.mrb[0].mxu0
      %v3475 = vpop.f32.mrb[0].mxu0
      %v3476 = vadd.f32 0.0, %v3475
      %v3477 = vpop.f32.mrb[0].mxu0
      %3478 = vdwg.mxu0
      %v3479 = vadd.f32 %v3362, %v3449
      %v3480 = vadd.f32 %v3363, %v3452
      %v3481 = vadd.f32 %v3364, %v3457
      %v3482 = vadd.f32 %v3365, %v3460
      %v3483 = vadd.f32 %v3366, %v3465
      %v3484 = vadd.f32 %v3367, %v3468
      %v3485 = vadd.f32 %v3368, %v3473
      %v3486 = vadd.f32 %v3369, %v3476
      %v3487 = vmax.f32 %v3479, 0.0
      %v3488 = vmax.f32 %v3480, 0.0
      %v3489 = vmax.f32 %v3481, 0.0
      %v3490 = vmax.f32 %v3482, 0.0
      %v3491 = vmax.f32 %v3483, 0.0
      %v3492 = vmax.f32 %v3484, 0.0
      %v3493 = vmax.f32 %v3485, 0.0
      %v3494 = vmax.f32 %v3486, 0.0
      %3495 = vst.msk [vmem:[%s251] sm:$0xff] %vm1999, %v3487
      %3496 = vst.msk [vmem:[%s251 + $0x8] sm:$0xff] %vm1999, %v3488
      %3497 = vst.msk [vmem:[%s251 + $0x10] sm:$0xff] %vm1999, %v3489
      %3498 = vst.msk [vmem:[%s251 + $0x18] sm:$0xff] %vm1999, %v3490
      %3499 = vst.msk [vmem:[%s251 + $0x20] sm:$0xff] %vm1999, %v3491
      %3500 = vst.msk [vmem:[%s251 + $0x28] sm:$0xff] %vm1999, %v3492
      %3501 = vst.msk [vmem:[%s251 + $0x30] sm:$0xff] %vm1999, %v3493
      %3502 = vst.msk [vmem:[%s251 + $0x38] sm:$0xff] %vm1999, %v3494
      %p3503 = scmp.lt.s32.totalorder %s17, 1
      %s3504 = scalar_select %p3503, %s17, 1
      %s3505 = smul.addr %s3504, 8
      %s3506 = smul.addr %s3505, 8
      %s3507 = scalar_lea.vmem %s6, %s3506
      // Predicated region
      $region45: #{resblock_forward.1} parent=43 // pred_check
        %p3508 = pneg %p166
      $region46: #{resblock_forward.1} parent=43 // pred_check_branch
        %3510 = sbr.rel (%p3508) target = $region48
      $region47: #{resblock_forward.1} parent=43 // pred_region
        _
      $region48: #{resblock_forward.1} parent=43 // pred_fallthru
        _
    $region44: #{resblock_forward.1} parent=5 // pred_fallthru
      _
    %p3511 = scmp.le.s32.totalorder 2, %s12
    // Predicated region
    $region49: #{resblock_forward.1} parent=5 // pred_check
      %p3512 = pneg %p3511
    $region50: #{resblock_forward.1} parent=5 // pred_check_branch
      %3514 = sbr.rel (%p3512) target = $region52
    $region51: #{resblock_forward.1} parent=5 // pred_region
      %s3515 = ssub.s32 %s12, 2
      // Predicated region
      $region53: #{resblock_forward.1} parent=51 // pred_check
        %p3516 = pneg %p172
      $region54: #{resblock_forward.1} parent=51 // pred_check_branch
        %3518 = sbr.rel (%p3516) target = $region56
      $region55: #{resblock_forward.1} parent=51 // pred_region
        %p3519 = scmp.lt.s32.totalorder %s18, 1
        %s3520 = scalar_select %p3519, %s18, 1
        %s3521 = smul.addr %s3520, 8
        %s3522 = smul.addr %s3521, 8
        %s3523 = scalar_lea.vmem %s6, %s3522
      $region56: #{resblock_forward.1} parent=51 // pred_fallthru
        _
    $region52: #{resblock_forward.1} parent=5 // pred_fallthru
      _
  $region6: #{resblock_forward.1} parent=0 // loop_footer
    %s16 = sadd.s32 1, %s12
  $region7: #{resblock_forward.1} parent=0 // loop_footer_branch
    %11 = sbr.rel target = $region3
  $region8: #{resblock_forward.1} parent=0 // loop_exit
    _

</llo_original>
